<compile_context>
chip_gen: v5e
topology: v5e:2x2
jax: 0.10.0
libtpu: 0.0.40
codegen_flags: <defaults>
</compile_context>

<pallas_src>
import functools
import math

import jax
import jax.numpy as jnp
import numpy as np
from jax import lax
from jax.experimental import pallas as pl
from jax.experimental.pallas import tpu as pltpu


# --------------------------------------------------------------------------
# Host-side constants: 3x3 tap offsets + boundary masks for the folded layout
# --------------------------------------------------------------------------
def build_tap_masks(H, W, widthp, L):
    """Static 3x3-tap lane offsets + boundary masks for the (C, L) layout.

    L is an integer multiple of H*W (batch folded onto the lane axis); each
    mask zeroes every output position whose tap would cross an image boundary,
    which also kills the wrap-around between adjacent images (and the global
    roll wrap-around) introduced by the lane rotation.
    """
    HW = H * W
    assert L % HW == 0
    pix = np.arange(L) % HW
    hh, ww = pix // W, pix % W
    offs = []
    masks = np.ones((9, widthp, L), np.float32)
    for kh in range(3):
        for kw in range(3):
            dh, dw = kh - 1, kw - 1
            valid = np.ones((L,), np.bool_)
            if dh == -1:
                valid &= hh >= 1
            elif dh == 1:
                valid &= hh <= H - 2
            if dw == -1:
                valid &= ww >= 1
            elif dw == 1:
                valid &= ww <= W - 2
            masks[kh * 3 + kw] = np.broadcast_to(valid.astype(np.float32),
                                                 (widthp, L))
            offs.append(dh * W + dw)
    return tuple(offs), masks


# --------------------------------------------------------------------------
# Pallas kernel: one grid step == a lane-chunk of (Cin, L) with L = imgs*HW
# --------------------------------------------------------------------------
def bottle2neck_kernel(x_ref, m_ref, w1_ref, b1_ref, wc_ref, bc_ref,
                       w3_ref, b3_ref, o_ref, *, taps, widthp, scale, nums):
    L = x_ref.shape[1]
    xb = x_ref[...]                                        # (Cin, L) bf16

    # ---- conv1 (1x1, BN-scale folded into weights) + bias + relu ----------
    out1 = jnp.dot(w1_ref[...], xb, preferred_element_type=jnp.float32)
    out1 = jnp.maximum(out1 + b1_ref[...], 0.0)            # (scale*widthp, L) f32

    # ---- hierarchical 3x3 branches; conv3 accumulated per split -----------
    out3 = None
    sp = None
    for i in range(nums):
        split_i = out1[i * widthp:(i + 1) * widthp, :]
        sp = split_i if i == 0 else sp + split_i           # hierarchical residual

        # im2col patch slab: 9 XLU lane rotations + precomputed boundary masks
        cols = []
        for t, off in enumerate(taps):
            if off == 0:
                r = sp
            else:
                r = pltpu.roll(sp, (-off) % L, axis=1)     # y[:,p] = sp[:,(p+off)%L]
                r = r * m_ref[t]
            cols.append(r)
        patches = jnp.concatenate(cols, axis=0).astype(jnp.bfloat16)  # (9*widthp, L)

        acc = jnp.dot(wc_ref[i], patches, preferred_element_type=jnp.float32)
        sp = jnp.maximum(acc + bc_ref[i], 0.0)             # (widthp, L) f32

        # conv3 partial: w3 slice for this split, no explicit cat materialized
        part = jnp.dot(w3_ref[i], sp.astype(jnp.bfloat16),
                       preferred_element_type=jnp.float32)  # (Cout, L)
        out3 = part if out3 is None else out3 + part

    if scale != 1:
        # stype == 'normal': last split passes through untouched
        passthru = out1[nums * widthp:scale * widthp, :].astype(jnp.bfloat16)
        out3 = out3 + jnp.dot(w3_ref[nums], passthru,
                              preferred_element_type=jnp.float32)

    # ---- bn3 bias + residual + relu ----------------------------------------
    out3 = out3 + b3_ref[...] + xb.astype(jnp.float32)      # downsample=None residual
    o_ref[...] = jnp.maximum(out3, 0.0).astype(o_ref.dtype)


# --------------------------------------------------------------------------
# Wrapper
# --------------------------------------------------------------------------
def bottle2neck_pallas(x_nchw, p, *, width, scale, nums):
    del width  # already folded into the 8-padded weights
    N, Cin, H, W = x_nchw.shape
    HW = H * W
    widthp = p["widthp"]
    Cout = p["w3t"].shape[1]
    assert Cin == Cout, "stype='normal' block requires inplanes == planes*expansion"
    assert HW % 128 == 0 and Cin % 8 == 0 and nums >= 1

    # Keep 2 "parallel" grid steps when possible so both v7x TensorCores get
    # work; each step still folds several images onto the lane axis.
    G = 2 if (N % 2 == 0 and N >= 2) else 1
    L = (N // G) * HW

    # NCHW -> channel-major (Cin, N*HW): batch folded onto the lane axis so each
    # dot sees L lanes; the bf16 cast fuses into this single relayout op.
    x_cm = (jnp.transpose(x_nchw.reshape(N, Cin, HW), (1, 0, 2))
            .reshape(Cin, N * HW).astype(jnp.bfloat16))

    taps, masks_np = build_tap_masks(H, W, widthp, L)
    masks = jnp.asarray(masks_np)                           # (9, widthp, L) f32 resident

    kern = functools.partial(bottle2neck_kernel, taps=taps,
                             widthp=widthp, scale=scale, nums=nums)

    def full_spec(arr):
        nd = arr.ndim
        return pl.BlockSpec(arr.shape, lambda g, _nd=nd: (0,) * _nd)

    weight_keys = ("w1t", "b1", "wct", "bc", "w3t", "b3")
    in_specs = [pl.BlockSpec((Cin, L), lambda g: (0, g)), full_spec(masks)]
    in_specs += [full_spec(p[k]) for k in weight_keys]

    WSp = scale * widthp
    flops = int(2 * N * HW * (Cin * WSp + nums * 9 * widthp * widthp + Cout * WSp))
    weight_bytes = sum(int(p[k].size) * p[k].dtype.itemsize for k in weight_keys)
    bytes_acc = int(x_cm.size) * 2 + N * Cout * HW * 2 + weight_bytes \
        + int(masks.size) * 4 * G

    out_cm = pl.pallas_call(
        kern,
        out_shape=jax.ShapeDtypeStruct((Cout, N * HW), jnp.bfloat16),
        grid=(G,),
        in_specs=in_specs,
        out_specs=pl.BlockSpec((Cout, L), lambda g: (0, g)),
        compiler_params=pltpu.CompilerParams(
            dimension_semantics=("parallel",)),
        cost_estimate=pl.CostEstimate(flops=flops, transcendentals=0,
                                      bytes_accessed=bytes_acc),
    )(x_cm, masks, *[p[k] for k in weight_keys])

    # channel-major back to NCHW
    out = jnp.transpose(out_cm.reshape(Cout, N, HW), (1, 0, 2))
    return out.reshape(N, Cout, H, W)


# --------------------------------------------------------------------------
# Parameter preparation: fold BN scale into bf16 weights, channel-major,
# pad per-split channel count width -> widthp (8)
# --------------------------------------------------------------------------
def fold_bn(g, b, m, v, eps=1e-5):
    s = g / jnp.sqrt(v + eps)
    return s, b - m * s


def prepare_params(w1, wc, w3, bn1, bns, bn3, *, width, scale, nums):
    widthp = ((width + 7) // 8) * 8
    padc = widthp - width
    Cin = w1.shape[0]
    Cout = w3.shape[1]

    s1, b1 = fold_bn(*bn1)                                   # (width*scale,)
    s3, b3 = fold_bn(*bn3)                                   # (Cout,)
    folded = [fold_bn(*bns[i]) for i in range(nums)]
    sc = jnp.stack([s for s, _ in folded])                   # (nums, width)
    bc = jnp.stack([b for _, b in folded])

    # conv1 (1x1): scale-fold per out channel, transpose to (scale*widthp, Cin)
    w1f = (w1 * s1[None, :]).T                               # (WS, Cin)
    w1t = w1f.reshape(scale, width, Cin)
    w1t = jnp.pad(w1t, ((0, 0), (0, padc), (0, 0))).reshape(scale * widthp, Cin)
    b1p = jnp.pad(b1.reshape(scale, width), ((0, 0), (0, padc))).reshape(scale * widthp, 1)

    # 3x3 branch convs: scale-fold per out channel, im2col layout
    # (nums, widthp, 9*widthp), column order (kh, kw, ci) matching the kernel.
    wcf = wc * sc[:, None, None, None, :]                    # (nums,3,3,ci,co)
    wct = jnp.transpose(wcf, (0, 1, 2, 4, 3))                # (nums,3,3,co,ci)
    wct = jnp.pad(wct, ((0, 0), (0, 0), (0, 0), (0, padc), (0, padc)))
    wct = jnp.transpose(wct, (0, 3, 1, 2, 4)).reshape(nums, widthp, 9 * widthp)
    bcp = jnp.pad(bc, ((0, 0), (0, padc)))[..., None]        # (nums, widthp, 1)

    # conv3 (1x1): scale-fold per out channel, split per input group:
    # (scale, Cout, widthp) so the kernel accumulates per-split partial dots.
    w3f = (w3 * s3[None, :]).T                               # (Cout, WS)
    w3t = w3f.reshape(Cout, scale, width)
    w3t = jnp.pad(w3t, ((0, 0), (0, 0), (0, padc)))          # (Cout, scale, widthp)
    w3t = jnp.transpose(w3t, (1, 0, 2))                      # (scale, Cout, widthp)

    return {
        "w1t": w1t.astype(jnp.bfloat16), "b1": b1p,
        "wct": wct.astype(jnp.bfloat16), "bc": bcp,
        "w3t": w3t.astype(jnp.bfloat16), "b3": b3[:, None],
        "widthp": widthp,
    }


# --------------------------------------------------------------------------
# Pure-JAX reference (lax.conv, NHWC) for correctness checking.
# quantize=True folds BN into the conv weights and rounds weights / conv inputs
# to bf16 at exactly the kernel's rounding points (f32 accumulation everywhere).
# quantize=False is the straight f32 conv -> BN -> ReLU module semantics.
# --------------------------------------------------------------------------
def bottle2neck_ref(x_nhwc, raw, *, width, scale, nums, quantize=False):
    dn = ("NHWC", "HWIO", "NHWC")

    def q(a):
        return a.astype(jnp.bfloat16).astype(jnp.float32) if quantize else a

    def conv(a, w, pad):
        return lax.conv_general_dilated(q(a), q(w), (1, 1), pad,
                                        dimension_numbers=dn)

    def bnorm(a, g, b, m, v, eps=1e-5):
        return (a - m) / jnp.sqrt(v + eps) * g + b

    def conv_bn(a, w, bn, pad):
        if quantize:
            s, bias = fold_bn(*bn)
            return conv(a, w * s, pad) + bias   # last weight axis = out channels
        return bnorm(conv(a, w, pad), *bn)

    x = q(x_nhwc)
    out = jax.nn.relu(conv_bn(x, raw["w1"][None, None], raw["bn1"], "VALID"))
    spx = [out[..., i * width:(i + 1) * width] for i in range(scale)]
    outs = []
    sp = None
    for i in range(nums):
        sp_in = spx[i] if i == 0 else sp + spx[i]
        sp = jax.nn.relu(conv_bn(sp_in, raw["wc"][i], raw["bns"][i],
                                 ((1, 1), (1, 1))))
        outs.append(sp)
    if scale != 1:
        outs.append(spx[nums])
    cat = jnp.concatenate(outs, axis=-1)
    out = conv_bn(cat, raw["w3"][None, None], raw["bn3"], "VALID")
    return jax.nn.relu(out + x)


# --------------------------------------------------------------------------
if __name__ == "__main__":
    # Module config: Bottle2neck(inplanes=64, planes=16), baseWidth=26, scale=4
    inplanes, planes = 64, 16
    baseWidth, scale = 26, 4
    expansion = 4
    width = int(math.floor(planes * (baseWidth / 64.0)))   # = 6
    nums = scale - 1                                        # = 3
    WS = width * scale                                      # = 24
    Cout = planes * expansion                               # = 64 == inplanes

    # batch folded onto lanes: 2 parallel grid steps x 4 images -> 1024 lanes/dot
    N, H, W = 8, 16, 16

    key = jax.random.PRNGKey(0)
    keys = jax.random.split(key, 12)

    w1 = jax.random.normal(keys[0], (inplanes, WS), jnp.float32) * 0.1
    wc = jax.random.normal(keys[1], (nums, 3, 3, width, width), jnp.float32) * 0.1
    w3 = jax.random.normal(keys[2], (WS, Cout), jnp.float32) * 0.1

    def make_bn(k, c):
        k1, k2, k3, k4 = jax.random.split(k, 4)
        g = jax.random.uniform(k1, (c,), jnp.float32, 0.5, 1.5)
        b = jax.random.normal(k2, (c,), jnp.float32) * 0.1
        m = jax.random.normal(k3, (c,), jnp.float32) * 0.1
        v = jax.random.uniform(k4, (c,), jnp.float32, 0.5, 1.5)
        return g, b, m, v

    bn1 = make_bn(keys[3], WS)
    bns = [make_bn(keys[4 + i], width) for i in range(nums)]
    bn3 = make_bn(keys[8], Cout)
    raw = {"w1": w1, "wc": wc, "w3": w3, "bn1": bn1, "bns": bns, "bn3": bn3}

    params = prepare_params(w1, wc, w3, bn1, bns, bn3,
                            width=width, scale=scale, nums=nums)

    # NCHW input, exactly like the PyTorch module
    x = jax.random.normal(keys[9], (N, inplanes, H, W), jnp.float32)

    out = bottle2neck_pallas(x, params, width=width, scale=scale, nums=nums)
    out = jax.block_until_ready(out)
    out_f32 = np.asarray(out.astype(jnp.float32))

    x_nhwc = jnp.transpose(x, (0, 2, 3, 1))

    # Tight check: reference with BN folded into bf16 weights / bf16-rounded conv
    # inputs and f32 accumulation (mirrors the kernel's rounding points; the
    # tolerance covers the final bf16 store).
    ref_q = bottle2neck_ref(x_nhwc, raw, width=width, scale=scale, nums=nums,
                            quantize=True)
    ref_q = np.transpose(np.asarray(ref_q), (0, 3, 1, 2))
    np.testing.assert_allclose(out_f32, ref_q, rtol=3e-3, atol=3e-3)

    # Sanity check vs the full-f32 module reference (bounds total bf16 error).
    ref_f = bottle2neck_ref(x_nhwc, raw, width=width, scale=scale, nums=nums)
    ref_f = np.transpose(np.asarray(ref_f), (0, 3, 1, 2))
    np.testing.assert_allclose(out_f32, ref_f, rtol=1e-1, atol=1e-1)

    print("KERNEL_OK")
</pallas_src>

<mosaic_0001>
module attributes {stable_mosaic.version = 11 : i64} {
  func.func @bottle2neck_kernel(%arg0: i32, %arg1: memref<64x1024xbf16, #tpu.memory_space<vmem>>, %arg2: memref<9x8x1024xf32, #tpu.memory_space<vmem>>, %arg3: memref<32x64xbf16, #tpu.memory_space<vmem>>, %arg4: memref<32x1xf32, #tpu.memory_space<vmem>>, %arg5: memref<3x8x72xbf16, #tpu.memory_space<vmem>>, %arg6: memref<3x8x1xf32, #tpu.memory_space<vmem>>, %arg7: memref<4x64x8xbf16, #tpu.memory_space<vmem>>, %arg8: memref<64x1xf32, #tpu.memory_space<vmem>>, %arg9: memref<64x1024xbf16, #tpu.memory_space<vmem>>) attributes {dimension_semantics = [#tpu.dimension_semantics<parallel>], iteration_bounds = array<i64: 2>, scalar_prefetch = 0 : i64, scratch_operands = 0 : i64, tpu.core_type = #tpu.core_type<tc>, window_params = [{transform_indices = @transform_0, window_bounds = array<i64: 64, 1024>}, {pipeline_mode = #tpu.pipeline_mode<synchronous>, transform_indices = @transform_1, window_bounds = array<i64: 9, 8, 1024>}, {pipeline_mode = #tpu.pipeline_mode<synchronous>, transform_indices = @transform_2, window_bounds = array<i64: 32, 64>}, {pipeline_mode = #tpu.pipeline_mode<synchronous>, transform_indices = @transform_3, window_bounds = array<i64: 32, 1>}, {pipeline_mode = #tpu.pipeline_mode<synchronous>, transform_indices = @transform_4, window_bounds = array<i64: 3, 8, 72>}, {pipeline_mode = #tpu.pipeline_mode<synchronous>, transform_indices = @transform_5, window_bounds = array<i64: 3, 8, 1>}, {pipeline_mode = #tpu.pipeline_mode<synchronous>, transform_indices = @transform_6, window_bounds = array<i64: 4, 64, 8>}, {pipeline_mode = #tpu.pipeline_mode<synchronous>, transform_indices = @transform_7, window_bounds = array<i64: 64, 1>}, {transform_indices = @transform_8, window_bounds = array<i64: 64, 1024>}]} {
    %c0 = arith.constant 0 : index
    %c0_0 = arith.constant 0 : index
    %0 = vector.load %arg1[%c0, %c0_0] : memref<64x1024xbf16, #tpu.memory_space<vmem>>, vector<64x1024xbf16>
    %c0_1 = arith.constant 0 : index
    %c0_2 = arith.constant 0 : index
    %1 = vector.load %arg3[%c0_1, %c0_2] : memref<32x64xbf16, #tpu.memory_space<vmem>>, vector<32x64xbf16>
    %cst = arith.constant dense<0.000000e+00> : vector<32x1024xf32>
    %2 = tpu.matmul %1, %0, %cst {dimension_numbers = #tpu.dot_dimension_numbers<[1], [0], [0], [1], [0, 0, 1, 1], [], []>} : vector<32x64xbf16>, vector<64x1024xbf16>, vector<32x1024xf32> -> vector<32x1024xf32>
    %c0_3 = arith.constant 0 : index
    %c0_4 = arith.constant 0 : index
    %3 = vector.load %arg4[%c0_3, %c0_4] : memref<32x1xf32, #tpu.memory_space<vmem>>, vector<32x1xf32>
    %4 = vector.broadcast %3 : vector<32x1xf32> to vector<32x1024xf32>
    %5 = arith.addf %2, %4 : vector<32x1024xf32>
    %cst_5 = arith.constant 0.000000e+00 : f32
    %6 = vector.broadcast %cst_5 : f32 to vector<32x1024xf32>
    %7 = arith.maximumf %5, %6 : vector<32x1024xf32>
    %8 = vector.extract_strided_slice %7 {offsets = [0, 0], sizes = [8, 1024], strides = [1, 1]} : vector<32x1024xf32> to vector<8x1024xf32>
    %c17_i32 = arith.constant 17 : i32
    %9 = tpu.dynamic_rotate %8 by %c17_i32 dim 1 : vector<8x1024xf32>, i32 -> vector<8x1024xf32>
    %c0_6 = arith.constant 0 : index
    %c0_7 = arith.constant 0 : index
    %c0_8 = arith.constant 0 : index
    %10 = vector.load %arg2[%c0_6, %c0_7, %c0_8] : memref<9x8x1024xf32, #tpu.memory_space<vmem>>, vector<1x8x1024xf32>
    %11 = vector.shape_cast %10 : vector<1x8x1024xf32> to vector<8x1024xf32>
    %12 = arith.mulf %9, %11 : vector<8x1024xf32>
    %c16_i32 = arith.constant 16 : i32
    %13 = tpu.dynamic_rotate %8 by %c16_i32 dim 1 : vector<8x1024xf32>, i32 -> vector<8x1024xf32>
    %c1 = arith.constant 1 : index
    %c0_9 = arith.constant 0 : index
    %c0_10 = arith.constant 0 : index
    %14 = vector.load %arg2[%c1, %c0_9, %c0_10] : memref<9x8x1024xf32, #tpu.memory_space<vmem>>, vector<1x8x1024xf32>
    %15 = vector.shape_cast %14 : vector<1x8x1024xf32> to vector<8x1024xf32>
    %16 = arith.mulf %13, %15 : vector<8x1024xf32>
    %c15_i32 = arith.constant 15 : i32
    %17 = tpu.dynamic_rotate %8 by %c15_i32 dim 1 : vector<8x1024xf32>, i32 -> vector<8x1024xf32>
    %c2 = arith.constant 2 : index
    %c0_11 = arith.constant 0 : index
    %c0_12 = arith.constant 0 : index
    %18 = vector.load %arg2[%c2, %c0_11, %c0_12] : memref<9x8x1024xf32, #tpu.memory_space<vmem>>, vector<1x8x1024xf32>
    %19 = vector.shape_cast %18 : vector<1x8x1024xf32> to vector<8x1024xf32>
    %20 = arith.mulf %17, %19 : vector<8x1024xf32>
    %c1_i32 = arith.constant 1 : i32
    %21 = tpu.dynamic_rotate %8 by %c1_i32 dim 1 : vector<8x1024xf32>, i32 -> vector<8x1024xf32>
    %c3 = arith.constant 3 : index
    %c0_13 = arith.constant 0 : index
    %c0_14 = arith.constant 0 : index
    %22 = vector.load %arg2[%c3, %c0_13, %c0_14] : memref<9x8x1024xf32, #tpu.memory_space<vmem>>, vector<1x8x1024xf32>
    %23 = vector.shape_cast %22 : vector<1x8x1024xf32> to vector<8x1024xf32>
    %24 = arith.mulf %21, %23 : vector<8x1024xf32>
    %c1023_i32 = arith.constant 1023 : i32
    %25 = tpu.dynamic_rotate %8 by %c1023_i32 dim 1 : vector<8x1024xf32>, i32 -> vector<8x1024xf32>
    %c5 = arith.constant 5 : index
    %c0_15 = arith.constant 0 : index
    %c0_16 = arith.constant 0 : index
    %26 = vector.load %arg2[%c5, %c0_15, %c0_16] : memref<9x8x1024xf32, #tpu.memory_space<vmem>>, vector<1x8x1024xf32>
    %27 = vector.shape_cast %26 : vector<1x8x1024xf32> to vector<8x1024xf32>
    %28 = arith.mulf %25, %27 : vector<8x1024xf32>
    %c1009_i32 = arith.constant 1009 : i32
    %29 = tpu.dynamic_rotate %8 by %c1009_i32 dim 1 : vector<8x1024xf32>, i32 -> vector<8x1024xf32>
    %c6 = arith.constant 6 : index
    %c0_17 = arith.constant 0 : index
    %c0_18 = arith.constant 0 : index
    %30 = vector.load %arg2[%c6, %c0_17, %c0_18] : memref<9x8x1024xf32, #tpu.memory_space<vmem>>, vector<1x8x1024xf32>
    %31 = vector.shape_cast %30 : vector<1x8x1024xf32> to vector<8x1024xf32>
    %32 = arith.mulf %29, %31 : vector<8x1024xf32>
    %c1008_i32 = arith.constant 1008 : i32
    %33 = tpu.dynamic_rotate %8 by %c1008_i32 dim 1 : vector<8x1024xf32>, i32 -> vector<8x1024xf32>
    %c7 = arith.constant 7 : index
    %c0_19 = arith.constant 0 : index
    %c0_20 = arith.constant 0 : index
    %34 = vector.load %arg2[%c7, %c0_19, %c0_20] : memref<9x8x1024xf32, #tpu.memory_space<vmem>>, vector<1x8x1024xf32>
    %35 = vector.shape_cast %34 : vector<1x8x1024xf32> to vector<8x1024xf32>
    %36 = arith.mulf %33, %35 : vector<8x1024xf32>
    %c1007_i32 = arith.constant 1007 : i32
    %37 = tpu.dynamic_rotate %8 by %c1007_i32 dim 1 : vector<8x1024xf32>, i32 -> vector<8x1024xf32>
    %c8 = arith.constant 8 : index
    %c0_21 = arith.constant 0 : index
    %c0_22 = arith.constant 0 : index
    %38 = vector.load %arg2[%c8, %c0_21, %c0_22] : memref<9x8x1024xf32, #tpu.memory_space<vmem>>, vector<1x8x1024xf32>
    %39 = vector.shape_cast %38 : vector<1x8x1024xf32> to vector<8x1024xf32>
    %40 = arith.mulf %37, %39 : vector<8x1024xf32>
    %41 = tpu.concatenate %12, %16, %20, %24, %8, %28, %32, %36, %40 in 0 : vector<8x1024xf32>, vector<8x1024xf32>, vector<8x1024xf32>, vector<8x1024xf32>, vector<8x1024xf32>, vector<8x1024xf32>, vector<8x1024xf32>, vector<8x1024xf32>, vector<8x1024xf32> -> vector<72x1024xf32>
    %42 = arith.truncf %41 : vector<72x1024xf32> to vector<72x1024xbf16>
    %c0_23 = arith.constant 0 : index
    %c0_24 = arith.constant 0 : index
    %c0_25 = arith.constant 0 : index
    %43 = vector.load %arg5[%c0_23, %c0_24, %c0_25] : memref<3x8x72xbf16, #tpu.memory_space<vmem>>, vector<1x8x72xbf16>
    %44 = vector.shape_cast %43 : vector<1x8x72xbf16> to vector<8x72xbf16>
    %cst_26 = arith.constant dense<0.000000e+00> : vector<8x1024xf32>
    %45 = tpu.matmul %44, %42, %cst_26 {dimension_numbers = #tpu.dot_dimension_numbers<[1], [0], [0], [1], [0, 0, 1, 1], [], []>} : vector<8x72xbf16>, vector<72x1024xbf16>, vector<8x1024xf32> -> vector<8x1024xf32>
    %c0_27 = arith.constant 0 : index
    %c0_28 = arith.constant 0 : index
    %c0_29 = arith.constant 0 : index
    %46 = vector.load %arg6[%c0_27, %c0_28, %c0_29] : memref<3x8x1xf32, #tpu.memory_space<vmem>>, vector<1x8x1xf32>
    %47 = vector.shape_cast %46 : vector<1x8x1xf32> to vector<8x1xf32>
    %48 = vector.broadcast %47 : vector<8x1xf32> to vector<8x1024xf32>
    %49 = arith.addf %45, %48 : vector<8x1024xf32>
    %cst_30 = arith.constant 0.000000e+00 : f32
    %50 = vector.broadcast %cst_30 : f32 to vector<8x1024xf32>
    %51 = arith.maximumf %49, %50 : vector<8x1024xf32>
    %c0_31 = arith.constant 0 : index
    %c0_32 = arith.constant 0 : index
    %c0_33 = arith.constant 0 : index
    %52 = vector.load %arg7[%c0_31, %c0_32, %c0_33] : memref<4x64x8xbf16, #tpu.memory_space<vmem>>, vector<1x64x8xbf16>
    %53 = vector.shape_cast %52 : vector<1x64x8xbf16> to vector<64x8xbf16>
    %54 = arith.truncf %51 : vector<8x1024xf32> to vector<8x1024xbf16>
    %cst_34 = arith.constant dense<0.000000e+00> : vector<64x1024xf32>
    %55 = tpu.matmul %53, %54, %cst_34 {dimension_numbers = #tpu.dot_dimension_numbers<[1], [0], [0], [1], [0, 0, 1, 1], [], []>} : vector<64x8xbf16>, vector<8x1024xbf16>, vector<64x1024xf32> -> vector<64x1024xf32>
    %56 = vector.extract_strided_slice %7 {offsets = [8, 0], sizes = [8, 1024], strides = [1, 1]} : vector<32x1024xf32> to vector<8x1024xf32>
    %57 = arith.addf %51, %56 : vector<8x1024xf32>
    %c17_i32_35 = arith.constant 17 : i32
    %58 = tpu.dynamic_rotate %57 by %c17_i32_35 dim 1 : vector<8x1024xf32>, i32 -> vector<8x1024xf32>
    %c0_36 = arith.constant 0 : index
    %c0_37 = arith.constant 0 : index
    %c0_38 = arith.constant 0 : index
    %59 = vector.load %arg2[%c0_36, %c0_37, %c0_38] : memref<9x8x1024xf32, #tpu.memory_space<vmem>>, vector<1x8x1024xf32>
    %60 = vector.shape_cast %59 : vector<1x8x1024xf32> to vector<8x1024xf32>
    %61 = arith.mulf %58, %60 : vector<8x1024xf32>
    %c16_i32_39 = arith.constant 16 : i32
    %62 = tpu.dynamic_rotate %57 by %c16_i32_39 dim 1 : vector<8x1024xf32>, i32 -> vector<8x1024xf32>
    %c1_40 = arith.constant 1 : index
    %c0_41 = arith.constant 0 : index
    %c0_42 = arith.constant 0 : index
    %63 = vector.load %arg2[%c1_40, %c0_41, %c0_42] : memref<9x8x1024xf32, #tpu.memory_space<vmem>>, vector<1x8x1024xf32>
    %64 = vector.shape_cast %63 : vector<1x8x1024xf32> to vector<8x1024xf32>
    %65 = arith.mulf %62, %64 : vector<8x1024xf32>
    %c15_i32_43 = arith.constant 15 : i32
    %66 = tpu.dynamic_rotate %57 by %c15_i32_43 dim 1 : vector<8x1024xf32>, i32 -> vector<8x1024xf32>
    %c2_44 = arith.constant 2 : index
    %c0_45 = arith.constant 0 : index
    %c0_46 = arith.constant 0 : index
    %67 = vector.load %arg2[%c2_44, %c0_45, %c0_46] : memref<9x8x1024xf32, #tpu.memory_space<vmem>>, vector<1x8x1024xf32>
    %68 = vector.shape_cast %67 : vector<1x8x1024xf32> to vector<8x1024xf32>
    %69 = arith.mulf %66, %68 : vector<8x1024xf32>
    %c1_i32_47 = arith.constant 1 : i32
    %70 = tpu.dynamic_rotate %57 by %c1_i32_47 dim 1 : vector<8x1024xf32>, i32 -> vector<8x1024xf32>
    %c3_48 = arith.constant 3 : index
    %c0_49 = arith.constant 0 : index
    %c0_50 = arith.constant 0 : index
    %71 = vector.load %arg2[%c3_48, %c0_49, %c0_50] : memref<9x8x1024xf32, #tpu.memory_space<vmem>>, vector<1x8x1024xf32>
    %72 = vector.shape_cast %71 : vector<1x8x1024xf32> to vector<8x1024xf32>
    %73 = arith.mulf %70, %72 : vector<8x1024xf32>
    %c1023_i32_51 = arith.constant 1023 : i32
    %74 = tpu.dynamic_rotate %57 by %c1023_i32_51 dim 1 : vector<8x1024xf32>, i32 -> vector<8x1024xf32>
    %c5_52 = arith.constant 5 : index
    %c0_53 = arith.constant 0 : index
    %c0_54 = arith.constant 0 : index
    %75 = vector.load %arg2[%c5_52, %c0_53, %c0_54] : memref<9x8x1024xf32, #tpu.memory_space<vmem>>, vector<1x8x1024xf32>
    %76 = vector.shape_cast %75 : vector<1x8x1024xf32> to vector<8x1024xf32>
    %77 = arith.mulf %74, %76 : vector<8x1024xf32>
    %c1009_i32_55 = arith.constant 1009 : i32
    %78 = tpu.dynamic_rotate %57 by %c1009_i32_55 dim 1 : vector<8x1024xf32>, i32 -> vector<8x1024xf32>
    %c6_56 = arith.constant 6 : index
    %c0_57 = arith.constant 0 : index
    %c0_58 = arith.constant 0 : index
    %79 = vector.load %arg2[%c6_56, %c0_57, %c0_58] : memref<9x8x1024xf32, #tpu.memory_space<vmem>>, vector<1x8x1024xf32>
    %80 = vector.shape_cast %79 : vector<1x8x1024xf32> to vector<8x1024xf32>
    %81 = arith.mulf %78, %80 : vector<8x1024xf32>
    %c1008_i32_59 = arith.constant 1008 : i32
    %82 = tpu.dynamic_rotate %57 by %c1008_i32_59 dim 1 : vector<8x1024xf32>, i32 -> vector<8x1024xf32>
    %c7_60 = arith.constant 7 : index
    %c0_61 = arith.constant 0 : index
    %c0_62 = arith.constant 0 : index
    %83 = vector.load %arg2[%c7_60, %c0_61, %c0_62] : memref<9x8x1024xf32, #tpu.memory_space<vmem>>, vector<1x8x1024xf32>
    %84 = vector.shape_cast %83 : vector<1x8x1024xf32> to vector<8x1024xf32>
    %85 = arith.mulf %82, %84 : vector<8x1024xf32>
    %c1007_i32_63 = arith.constant 1007 : i32
    %86 = tpu.dynamic_rotate %57 by %c1007_i32_63 dim 1 : vector<8x1024xf32>, i32 -> vector<8x1024xf32>
    %c8_64 = arith.constant 8 : index
    %c0_65 = arith.constant 0 : index
    %c0_66 = arith.constant 0 : index
    %87 = vector.load %arg2[%c8_64, %c0_65, %c0_66] : memref<9x8x1024xf32, #tpu.memory_space<vmem>>, vector<1x8x1024xf32>
    %88 = vector.shape_cast %87 : vector<1x8x1024xf32> to vector<8x1024xf32>
    %89 = arith.mulf %86, %88 : vector<8x1024xf32>
    %90 = tpu.concatenate %61, %65, %69, %73, %57, %77, %81, %85, %89 in 0 : vector<8x1024xf32>, vector<8x1024xf32>, vector<8x1024xf32>, vector<8x1024xf32>, vector<8x1024xf32>, vector<8x1024xf32>, vector<8x1024xf32>, vector<8x1024xf32>, vector<8x1024xf32> -> vector<72x1024xf32>
    %91 = arith.truncf %90 : vector<72x1024xf32> to vector<72x1024xbf16>
    %c1_67 = arith.constant 1 : index
    %c0_68 = arith.constant 0 : index
    %c0_69 = arith.constant 0 : index
    %92 = vector.load %arg5[%c1_67, %c0_68, %c0_69] : memref<3x8x72xbf16, #tpu.memory_space<vmem>>, vector<1x8x72xbf16>
    %93 = vector.shape_cast %92 : vector<1x8x72xbf16> to vector<8x72xbf16>
    %cst_70 = arith.constant dense<0.000000e+00> : vector<8x1024xf32>
    %94 = tpu.matmul %93, %91, %cst_70 {dimension_numbers = #tpu.dot_dimension_numbers<[1], [0], [0], [1], [0, 0, 1, 1], [], []>} : vector<8x72xbf16>, vector<72x1024xbf16>, vector<8x1024xf32> -> vector<8x1024xf32>
    %c1_71 = arith.constant 1 : index
    %c0_72 = arith.constant 0 : index
    %c0_73 = arith.constant 0 : index
    %95 = vector.load %arg6[%c1_71, %c0_72, %c0_73] : memref<3x8x1xf32, #tpu.memory_space<vmem>>, vector<1x8x1xf32>
    %96 = vector.shape_cast %95 : vector<1x8x1xf32> to vector<8x1xf32>
    %97 = vector.broadcast %96 : vector<8x1xf32> to vector<8x1024xf32>
    %98 = arith.addf %94, %97 : vector<8x1024xf32>
    %cst_74 = arith.constant 0.000000e+00 : f32
    %99 = vector.broadcast %cst_74 : f32 to vector<8x1024xf32>
    %100 = arith.maximumf %98, %99 : vector<8x1024xf32>
    %c1_75 = arith.constant 1 : index
    %c0_76 = arith.constant 0 : index
    %c0_77 = arith.constant 0 : index
    %101 = vector.load %arg7[%c1_75, %c0_76, %c0_77] : memref<4x64x8xbf16, #tpu.memory_space<vmem>>, vector<1x64x8xbf16>
    %102 = vector.shape_cast %101 : vector<1x64x8xbf16> to vector<64x8xbf16>
    %103 = arith.truncf %100 : vector<8x1024xf32> to vector<8x1024xbf16>
    %cst_78 = arith.constant dense<0.000000e+00> : vector<64x1024xf32>
    %104 = tpu.matmul %102, %103, %cst_78 {dimension_numbers = #tpu.dot_dimension_numbers<[1], [0], [0], [1], [0, 0, 1, 1], [], []>} : vector<64x8xbf16>, vector<8x1024xbf16>, vector<64x1024xf32> -> vector<64x1024xf32>
    %105 = arith.addf %55, %104 : vector<64x1024xf32>
    %106 = vector.extract_strided_slice %7 {offsets = [16, 0], sizes = [8, 1024], strides = [1, 1]} : vector<32x1024xf32> to vector<8x1024xf32>
    %107 = arith.addf %100, %106 : vector<8x1024xf32>
    %c17_i32_79 = arith.constant 17 : i32
    %108 = tpu.dynamic_rotate %107 by %c17_i32_79 dim 1 : vector<8x1024xf32>, i32 -> vector<8x1024xf32>
    %c0_80 = arith.constant 0 : index
    %c0_81 = arith.constant 0 : index
    %c0_82 = arith.constant 0 : index
    %109 = vector.load %arg2[%c0_80, %c0_81, %c0_82] : memref<9x8x1024xf32, #tpu.memory_space<vmem>>, vector<1x8x1024xf32>
    %110 = vector.shape_cast %109 : vector<1x8x1024xf32> to vector<8x1024xf32>
    %111 = arith.mulf %108, %110 : vector<8x1024xf32>
    %c16_i32_83 = arith.constant 16 : i32
    %112 = tpu.dynamic_rotate %107 by %c16_i32_83 dim 1 : vector<8x1024xf32>, i32 -> vector<8x1024xf32>
    %c1_84 = arith.constant 1 : index
    %c0_85 = arith.constant 0 : index
    %c0_86 = arith.constant 0 : index
    %113 = vector.load %arg2[%c1_84, %c0_85, %c0_86] : memref<9x8x1024xf32, #tpu.memory_space<vmem>>, vector<1x8x1024xf32>
    %114 = vector.shape_cast %113 : vector<1x8x1024xf32> to vector<8x1024xf32>
    %115 = arith.mulf %112, %114 : vector<8x1024xf32>
    %c15_i32_87 = arith.constant 15 : i32
    %116 = tpu.dynamic_rotate %107 by %c15_i32_87 dim 1 : vector<8x1024xf32>, i32 -> vector<8x1024xf32>
    %c2_88 = arith.constant 2 : index
    %c0_89 = arith.constant 0 : index
    %c0_90 = arith.constant 0 : index
    %117 = vector.load %arg2[%c2_88, %c0_89, %c0_90] : memref<9x8x1024xf32, #tpu.memory_space<vmem>>, vector<1x8x1024xf32>
    %118 = vector.shape_cast %117 : vector<1x8x1024xf32> to vector<8x1024xf32>
    %119 = arith.mulf %116, %118 : vector<8x1024xf32>
    %c1_i32_91 = arith.constant 1 : i32
    %120 = tpu.dynamic_rotate %107 by %c1_i32_91 dim 1 : vector<8x1024xf32>, i32 -> vector<8x1024xf32>
    %c3_92 = arith.constant 3 : index
    %c0_93 = arith.constant 0 : index
    %c0_94 = arith.constant 0 : index
    %121 = vector.load %arg2[%c3_92, %c0_93, %c0_94] : memref<9x8x1024xf32, #tpu.memory_space<vmem>>, vector<1x8x1024xf32>
    %122 = vector.shape_cast %121 : vector<1x8x1024xf32> to vector<8x1024xf32>
    %123 = arith.mulf %120, %122 : vector<8x1024xf32>
    %c1023_i32_95 = arith.constant 1023 : i32
    %124 = tpu.dynamic_rotate %107 by %c1023_i32_95 dim 1 : vector<8x1024xf32>, i32 -> vector<8x1024xf32>
    %c5_96 = arith.constant 5 : index
    %c0_97 = arith.constant 0 : index
    %c0_98 = arith.constant 0 : index
    %125 = vector.load %arg2[%c5_96, %c0_97, %c0_98] : memref<9x8x1024xf32, #tpu.memory_space<vmem>>, vector<1x8x1024xf32>
    %126 = vector.shape_cast %125 : vector<1x8x1024xf32> to vector<8x1024xf32>
    %127 = arith.mulf %124, %126 : vector<8x1024xf32>
    %c1009_i32_99 = arith.constant 1009 : i32
    %128 = tpu.dynamic_rotate %107 by %c1009_i32_99 dim 1 : vector<8x1024xf32>, i32 -> vector<8x1024xf32>
    %c6_100 = arith.constant 6 : index
    %c0_101 = arith.constant 0 : index
    %c0_102 = arith.constant 0 : index
    %129 = vector.load %arg2[%c6_100, %c0_101, %c0_102] : memref<9x8x1024xf32, #tpu.memory_space<vmem>>, vector<1x8x1024xf32>
    %130 = vector.shape_cast %129 : vector<1x8x1024xf32> to vector<8x1024xf32>
    %131 = arith.mulf %128, %130 : vector<8x1024xf32>
    %c1008_i32_103 = arith.constant 1008 : i32
    %132 = tpu.dynamic_rotate %107 by %c1008_i32_103 dim 1 : vector<8x1024xf32>, i32 -> vector<8x1024xf32>
    %c7_104 = arith.constant 7 : index
    %c0_105 = arith.constant 0 : index
    %c0_106 = arith.constant 0 : index
    %133 = vector.load %arg2[%c7_104, %c0_105, %c0_106] : memref<9x8x1024xf32, #tpu.memory_space<vmem>>, vector<1x8x1024xf32>
    %134 = vector.shape_cast %133 : vector<1x8x1024xf32> to vector<8x1024xf32>
    %135 = arith.mulf %132, %134 : vector<8x1024xf32>
    %c1007_i32_107 = arith.constant 1007 : i32
    %136 = tpu.dynamic_rotate %107 by %c1007_i32_107 dim 1 : vector<8x1024xf32>, i32 -> vector<8x1024xf32>
    %c8_108 = arith.constant 8 : index
    %c0_109 = arith.constant 0 : index
    %c0_110 = arith.constant 0 : index
    %137 = vector.load %arg2[%c8_108, %c0_109, %c0_110] : memref<9x8x1024xf32, #tpu.memory_space<vmem>>, vector<1x8x1024xf32>
    %138 = vector.shape_cast %137 : vector<1x8x1024xf32> to vector<8x1024xf32>
    %139 = arith.mulf %136, %138 : vector<8x1024xf32>
    %140 = tpu.concatenate %111, %115, %119, %123, %107, %127, %131, %135, %139 in 0 : vector<8x1024xf32>, vector<8x1024xf32>, vector<8x1024xf32>, vector<8x1024xf32>, vector<8x1024xf32>, vector<8x1024xf32>, vector<8x1024xf32>, vector<8x1024xf32>, vector<8x1024xf32> -> vector<72x1024xf32>
    %141 = arith.truncf %140 : vector<72x1024xf32> to vector<72x1024xbf16>
    %c2_111 = arith.constant 2 : index
    %c0_112 = arith.constant 0 : index
    %c0_113 = arith.constant 0 : index
    %142 = vector.load %arg5[%c2_111, %c0_112, %c0_113] : memref<3x8x72xbf16, #tpu.memory_space<vmem>>, vector<1x8x72xbf16>
    %143 = vector.shape_cast %142 : vector<1x8x72xbf16> to vector<8x72xbf16>
    %cst_114 = arith.constant dense<0.000000e+00> : vector<8x1024xf32>
    %144 = tpu.matmul %143, %141, %cst_114 {dimension_numbers = #tpu.dot_dimension_numbers<[1], [0], [0], [1], [0, 0, 1, 1], [], []>} : vector<8x72xbf16>, vector<72x1024xbf16>, vector<8x1024xf32> -> vector<8x1024xf32>
    %c2_115 = arith.constant 2 : index
    %c0_116 = arith.constant 0 : index
    %c0_117 = arith.constant 0 : index
    %145 = vector.load %arg6[%c2_115, %c0_116, %c0_117] : memref<3x8x1xf32, #tpu.memory_space<vmem>>, vector<1x8x1xf32>
    %146 = vector.shape_cast %145 : vector<1x8x1xf32> to vector<8x1xf32>
    %147 = vector.broadcast %146 : vector<8x1xf32> to vector<8x1024xf32>
    %148 = arith.addf %144, %147 : vector<8x1024xf32>
    %cst_118 = arith.constant 0.000000e+00 : f32
    %149 = vector.broadcast %cst_118 : f32 to vector<8x1024xf32>
    %150 = arith.maximumf %148, %149 : vector<8x1024xf32>
    %c2_119 = arith.constant 2 : index
    %c0_120 = arith.constant 0 : index
    %c0_121 = arith.constant 0 : index
    %151 = vector.load %arg7[%c2_119, %c0_120, %c0_121] : memref<4x64x8xbf16, #tpu.memory_space<vmem>>, vector<1x64x8xbf16>
    %152 = vector.shape_cast %151 : vector<1x64x8xbf16> to vector<64x8xbf16>
    %153 = arith.truncf %150 : vector<8x1024xf32> to vector<8x1024xbf16>
    %cst_122 = arith.constant dense<0.000000e+00> : vector<64x1024xf32>
    %154 = tpu.matmul %152, %153, %cst_122 {dimension_numbers = #tpu.dot_dimension_numbers<[1], [0], [0], [1], [0, 0, 1, 1], [], []>} : vector<64x8xbf16>, vector<8x1024xbf16>, vector<64x1024xf32> -> vector<64x1024xf32>
    %155 = arith.addf %105, %154 : vector<64x1024xf32>
    %156 = vector.extract_strided_slice %7 {offsets = [24, 0], sizes = [8, 1024], strides = [1, 1]} : vector<32x1024xf32> to vector<8x1024xf32>
    %157 = arith.truncf %156 : vector<8x1024xf32> to vector<8x1024xbf16>
    %c3_123 = arith.constant 3 : index
    %c0_124 = arith.constant 0 : index
    %c0_125 = arith.constant 0 : index
    %158 = vector.load %arg7[%c3_123, %c0_124, %c0_125] : memref<4x64x8xbf16, #tpu.memory_space<vmem>>, vector<1x64x8xbf16>
    %159 = vector.shape_cast %158 : vector<1x64x8xbf16> to vector<64x8xbf16>
    %cst_126 = arith.constant dense<0.000000e+00> : vector<64x1024xf32>
    %160 = tpu.matmul %159, %157, %cst_126 {dimension_numbers = #tpu.dot_dimension_numbers<[1], [0], [0], [1], [0, 0, 1, 1], [], []>} : vector<64x8xbf16>, vector<8x1024xbf16>, vector<64x1024xf32> -> vector<64x1024xf32>
    %161 = arith.addf %155, %160 : vector<64x1024xf32>
    %c0_127 = arith.constant 0 : index
    %c0_128 = arith.constant 0 : index
    %162 = vector.load %arg8[%c0_127, %c0_128] : memref<64x1xf32, #tpu.memory_space<vmem>>, vector<64x1xf32>
    %163 = vector.broadcast %162 : vector<64x1xf32> to vector<64x1024xf32>
    %164 = arith.addf %161, %163 : vector<64x1024xf32>
    %165 = arith.extf %0 : vector<64x1024xbf16> to vector<64x1024xf32>
    %166 = arith.addf %164, %165 : vector<64x1024xf32>
    %cst_129 = arith.constant 0.000000e+00 : f32
    %167 = vector.broadcast %cst_129 : f32 to vector<64x1024xf32>
    %168 = arith.maximumf %166, %167 : vector<64x1024xf32>
    %169 = arith.truncf %168 : vector<64x1024xf32> to vector<64x1024xbf16>
    %c0_130 = arith.constant 0 : index
    %c0_131 = arith.constant 0 : index
    %170 = vector.load %arg9[%c0_130, %c0_131] : memref<64x1024xbf16, #tpu.memory_space<vmem>>, vector<64x1024xbf16>
    tpu.vector_store %arg9[%c0_130, %c0_131], %169 {strides = array<i32>} : memref<64x1024xbf16, #tpu.memory_space<vmem>>, vector<64x1024xbf16>,
    return
  }
  func.func @transform_0(%arg0: i32) -> (i32, i32) {
    %c0_i32 = arith.constant 0 : i32
    %c0_i32_0 = arith.constant 0 : i32
    return %c0_i32, %arg0 : i32, i32
  }
  func.func @transform_1(%arg0: i32) -> (i32, i32, i32) {
    %c0_i32 = arith.constant 0 : i32
    %c0_i32_0 = arith.constant 0 : i32
    %c0_i32_1 = arith.constant 0 : i32
    %c0_i32_2 = arith.constant 0 : i32
    return %c0_i32, %c0_i32_0, %c0_i32_1 : i32, i32, i32
  }
  func.func @transform_2(%arg0: i32) -> (i32, i32) {
    %c0_i32 = arith.constant 0 : i32
    %c0_i32_0 = arith.constant 0 : i32
    %c0_i32_1 = arith.constant 0 : i32
    return %c0_i32, %c0_i32_0 : i32, i32
  }
  func.func @transform_3(%arg0: i32) -> (i32, i32) {
    %c0_i32 = arith.constant 0 : i32
    %c0_i32_0 = arith.constant 0 : i32
    %c0_i32_1 = arith.constant 0 : i32
    return %c0_i32, %c0_i32_0 : i32, i32
  }
  func.func @transform_4(%arg0: i32) -> (i32, i32, i32) {
    %c0_i32 = arith.constant 0 : i32
    %c0_i32_0 = arith.constant 0 : i32
    %c0_i32_1 = arith.constant 0 : i32
    %c0_i32_2 = arith.constant 0 : i32
    return %c0_i32, %c0_i32_0, %c0_i32_1 : i32, i32, i32
  }
  func.func @transform_5(%arg0: i32) -> (i32, i32, i32) {
    %c0_i32 = arith.constant 0 : i32
    %c0_i32_0 = arith.constant 0 : i32
    %c0_i32_1 = arith.constant 0 : i32
    %c0_i32_2 = arith.constant 0 : i32
    return %c0_i32, %c0_i32_0, %c0_i32_1 : i32, i32, i32
  }
  func.func @transform_6(%arg0: i32) -> (i32, i32, i32) {
    %c0_i32 = arith.constant 0 : i32
    %c0_i32_0 = arith.constant 0 : i32
    %c0_i32_1 = arith.constant 0 : i32
    %c0_i32_2 = arith.constant 0 : i32
    return %c0_i32, %c0_i32_0, %c0_i32_1 : i32, i32, i32
  }
  func.func @transform_7(%arg0: i32) -> (i32, i32) {
    %c0_i32 = arith.constant 0 : i32
    %c0_i32_0 = arith.constant 0 : i32
    %c0_i32_1 = arith.constant 0 : i32
    return %c0_i32, %c0_i32_0 : i32, i32
  }
  func.func @transform_8(%arg0: i32) -> (i32, i32) {
    %c0_i32 = arith.constant 0 : i32
    %c0_i32_0 = arith.constant 0 : i32
    return %c0_i32, %arg0 : i32, i32
  }
}

</mosaic_0001>

<llo_original>
// kernel: tpu_custom_call.1
$region0: #{tpu_custom_call.1}
  #allocation0 [shape = 'u32[]', space=smem, size = 0x4, offset = 0x4, fixed_abs, tag = 'smem constant byte address 0x4 - core index']
  #allocation1 [shape = 'u32[72,128]{1,0:T(1,128)}', space=vmem, size = 0x9000, scoped, tag = 'internal scratch']
  %s0 = inlined_call_operand.hbm [shape: bf16[64,2048], index: 0, kind: input, shape index: {}]
  %s1 = inlined_call_operand.hbm [shape: f32[9,8,1024], index: 1, kind: input, shape index: {}]
  %s2 = inlined_call_operand.vmem [shape: bf16[32,64], index: 2, kind: input, shape index: {}]
  %s3 = inlined_call_operand.vmem [shape: f32[32,1], index: 3, kind: input, shape index: {}]
  %s4 = inlined_call_operand.vmem [shape: bf16[3,8,72], index: 4, kind: input, shape index: {}]
  %s5 = inlined_call_operand.vmem [shape: f32[3,8,1], index: 5, kind: input, shape index: {}]
  %s6 = inlined_call_operand.vmem [shape: bf16[4,64,8], index: 6, kind: input, shape index: {}]
  %s7 = inlined_call_operand.vmem [shape: f32[64,1], index: 7, kind: input, shape index: {}]
  %s8 = inlined_call_operand.hbm [shape: bf16[64,2048], index: 8, kind: output, shape index: {}]
  %s9 = sld [smem:[#allocation0]]
  $region73: #{tpu_custom_call.1} parent=0
    _
  %s11 = ssub.s32 1, %s9
  %s12 = scalar_select 0, %s11, %s9
  $region1: #{tpu_custom_call.1} parent=0
    #allocation2 [shape = 'u8[262144]{0}', space=vmem, size = 0x40000, scoped, tag = 'input window, operand 0']
    #allocation3 [shape = 's32[2]{0}', space=sflag, size = 0x8, scoped, tag = 'scoped memory for tpu_custom_call.1']
    #allocation4 [shape = 's32[2]{0}', space=sflag, size = 0x8, scoped, tag = 'scoped memory for tpu_custom_call.1']
    #allocation5 [shape = 'u8[294912]{0}', space=vmem, size = 0x48000, scoped, tag = 'input window, operand 1, single buffered']
    #allocation6 [shape = 's32[1]{0}', space=sflag, size = 0x4, scoped, tag = 'scoped memory for tpu_custom_call.1']
    #allocation7 [shape = 'u8[262144]{0}', space=vmem, size = 0x40000, scoped, tag = 'output window, operand 0']
    %13 = vsyncpa [#allocation3], 0
    %s14 = scalar_lea.sflag [#allocation3], 1
    %15 = vsyncpa %s14, 0
    %16 = vsyncpa [#allocation6], 0
    %17 = vsyncpa [#allocation4], 0
    %s18 = scalar_lea.sflag [#allocation4], 1
    %19 = vsyncpa %s18, 0
    loop: start=0, step=1, limit=4
    $region2: #{tpu_custom_call.1} parent=1 // loop_pre_header
      _
    $region3: #{tpu_custom_call.1} parent=1 // loop_header
      %s21 = sphi 0, %s25
      %p22 = scmp.ge.s32.totalorder %s21, 4
      %s31 = sphi 0, %s33
      %s34 = sphi 0, %s31
      %s35 = sphi 0, %s34
      %s51 = sphi 0, %s35
      %s55 = sphi 0, %s55
      %s57 = sphi 0, %s55
      %s58 = sphi 0, %s57
      %s72 = sphi 0, %s58
      %s76 = sphi 0, %s76
      %s78 = sphi 0, %s76
      %s79 = sphi 0, %s78
      %s93 = sphi 0, %s79
      %s97 = sphi 0, %s97
      %s99 = sphi 0, %s97
      %s100 = sphi 0, %s99
      %s114 = sphi 0, %s100
      %s118 = sphi 0, %s118
      %s120 = sphi 0, %s118
      %s121 = sphi 0, %s120
      %s135 = sphi 0, %s121
      %s139 = sphi 0, %s139
      %s141 = sphi 0, %s139
      %s142 = sphi 0, %s141
      %s156 = sphi 0, %s142
      %s160 = sphi 0, %s160
      %s162 = sphi 0, %s160
      %s163 = sphi 0, %s162
      %s177 = sphi 0, %s163
      %s181 = sphi 0, %s181
      %s183 = sphi 0, %s181
      %s184 = sphi 0, %s183
      %s198 = sphi 0, %s184
      %s204 = sphi 0, %s206
      %s207 = sphi 0, %s204
      %s208 = sphi 0, %s207
      %s224 = sphi 0, %s208
    $region4: #{tpu_custom_call.1} parent=1 // loop_header_branch
      %24 = sbr.rel (%p22) target = $region8
    $region5: #{tpu_custom_call.1} parent=1 // loop_body
      %s26 = ssub.s32 %s21, 1
      %s27 = ssub.s32 %s21, 2
      %s28 = sadd.s32 %s21, 1
      %s29 = ssub.s32 %s21, %s28
      %p30 = scmp.eq.s32.totalorder %s29, 0
      %s32 = sadd.s32 %s31, 1
      %s33 = scalar_select %p30, %s31, %s32
      %p36 = pneg %p30
      %p37 = scmp.eq.s32.totalorder %s21, 1
      %p38 = por %p36, %p37
      %p39 = scmp.ne.s32.totalorder %s31, %s34
      %p40 = scmp.eq.s32.totalorder %s21, 0
      %p41 = por %p39, %p40
      %p42 = scmp.ne.s32.totalorder %s31, %s34
      %p43 = scmp.eq.s32.totalorder %s26, 1
      %p44 = por %p42, %p43
      %p45 = scmp.ne.s32.totalorder %s34, %s35
      %p46 = scmp.eq.s32.totalorder %s26, 0
      %p47 = por %p45, %p46
      %p48 = scmp.ne.s32.totalorder %s34, %s35
      %p49 = scmp.eq.s32.totalorder %s27, 1
      %p50 = por %p48, %p49
      %p52 = scmp.ne.s32.totalorder %s35, %s51
      %p53 = scmp.eq.s32.totalorder %s27, 0
      %p54 = por %p52, %p53
      %s56 = sadd.s32 %s55, 1
      %p59 = scmp.eq.s32.totalorder %s21, 1
      %p60 = scmp.ne.s32.totalorder %s55, %s57
      %p61 = scmp.eq.s32.totalorder %s21, 0
      %p62 = por %p60, %p61
      %p63 = scmp.ne.s32.totalorder %s55, %s57
      %p64 = scmp.eq.s32.totalorder %s26, 1
      %p65 = por %p63, %p64
      %p66 = scmp.ne.s32.totalorder %s57, %s58
      %p67 = scmp.eq.s32.totalorder %s26, 0
      %p68 = por %p66, %p67
      %p69 = scmp.ne.s32.totalorder %s57, %s58
      %p70 = scmp.eq.s32.totalorder %s27, 1
      %p71 = por %p69, %p70
      %p73 = scmp.ne.s32.totalorder %s58, %s72
      %p74 = scmp.eq.s32.totalorder %s27, 0
      %p75 = por %p73, %p74
      %s77 = sadd.s32 %s76, 1
      %p80 = scmp.eq.s32.totalorder %s21, 1
      %p81 = scmp.ne.s32.totalorder %s76, %s78
      %p82 = scmp.eq.s32.totalorder %s21, 0
      %p83 = por %p81, %p82
      %p84 = scmp.ne.s32.totalorder %s76, %s78
      %p85 = scmp.eq.s32.totalorder %s26, 1
      %p86 = por %p84, %p85
      %p87 = scmp.ne.s32.totalorder %s78, %s79
      %p88 = scmp.eq.s32.totalorder %s26, 0
      %p89 = por %p87, %p88
      %p90 = scmp.ne.s32.totalorder %s78, %s79
      %p91 = scmp.eq.s32.totalorder %s27, 1
      %p92 = por %p90, %p91
      %p94 = scmp.ne.s32.totalorder %s79, %s93
      %p95 = scmp.eq.s32.totalorder %s27, 0
      %p96 = por %p94, %p95
      %s98 = sadd.s32 %s97, 1
      %p101 = scmp.eq.s32.totalorder %s21, 1
      %p102 = scmp.ne.s32.totalorder %s97, %s99
      %p103 = scmp.eq.s32.totalorder %s21, 0
      %p104 = por %p102, %p103
      %p105 = scmp.ne.s32.totalorder %s97, %s99
      %p106 = scmp.eq.s32.totalorder %s26, 1
      %p107 = por %p105, %p106
      %p108 = scmp.ne.s32.totalorder %s99, %s100
      %p109 = scmp.eq.s32.totalorder %s26, 0
      %p110 = por %p108, %p109
      %p111 = scmp.ne.s32.totalorder %s99, %s100
      %p112 = scmp.eq.s32.totalorder %s27, 1
      %p113 = por %p111, %p112
      %p115 = scmp.ne.s32.totalorder %s100, %s114
      %p116 = scmp.eq.s32.totalorder %s27, 0
      %p117 = por %p115, %p116
      %s119 = sadd.s32 %s118, 1
      %p122 = scmp.eq.s32.totalorder %s21, 1
      %p123 = scmp.ne.s32.totalorder %s118, %s120
      %p124 = scmp.eq.s32.totalorder %s21, 0
      %p125 = por %p123, %p124
      %p126 = scmp.ne.s32.totalorder %s118, %s120
      %p127 = scmp.eq.s32.totalorder %s26, 1
      %p128 = por %p126, %p127
      %p129 = scmp.ne.s32.totalorder %s120, %s121
      %p130 = scmp.eq.s32.totalorder %s26, 0
      %p131 = por %p129, %p130
      %p132 = scmp.ne.s32.totalorder %s120, %s121
      %p133 = scmp.eq.s32.totalorder %s27, 1
      %p134 = por %p132, %p133
      %p136 = scmp.ne.s32.totalorder %s121, %s135
      %p137 = scmp.eq.s32.totalorder %s27, 0
      %p138 = por %p136, %p137
      %s140 = sadd.s32 %s139, 1
      %p143 = scmp.eq.s32.totalorder %s21, 1
      %p144 = scmp.ne.s32.totalorder %s139, %s141
      %p145 = scmp.eq.s32.totalorder %s21, 0
      %p146 = por %p144, %p145
      %p147 = scmp.ne.s32.totalorder %s139, %s141
      %p148 = scmp.eq.s32.totalorder %s26, 1
      %p149 = por %p147, %p148
      %p150 = scmp.ne.s32.totalorder %s141, %s142
      %p151 = scmp.eq.s32.totalorder %s26, 0
      %p152 = por %p150, %p151
      %p153 = scmp.ne.s32.totalorder %s141, %s142
      %p154 = scmp.eq.s32.totalorder %s27, 1
      %p155 = por %p153, %p154
      %p157 = scmp.ne.s32.totalorder %s142, %s156
      %p158 = scmp.eq.s32.totalorder %s27, 0
      %p159 = por %p157, %p158
      %s161 = sadd.s32 %s160, 1
      %p164 = scmp.eq.s32.totalorder %s21, 1
      %p165 = scmp.ne.s32.totalorder %s160, %s162
      %p166 = scmp.eq.s32.totalorder %s21, 0
      %p167 = por %p165, %p166
      %p168 = scmp.ne.s32.totalorder %s160, %s162
      %p169 = scmp.eq.s32.totalorder %s26, 1
      %p170 = por %p168, %p169
      %p171 = scmp.ne.s32.totalorder %s162, %s163
      %p172 = scmp.eq.s32.totalorder %s26, 0
      %p173 = por %p171, %p172
      %p174 = scmp.ne.s32.totalorder %s162, %s163
      %p175 = scmp.eq.s32.totalorder %s27, 1
      %p176 = por %p174, %p175
      %p178 = scmp.ne.s32.totalorder %s163, %s177
      %p179 = scmp.eq.s32.totalorder %s27, 0
      %p180 = por %p178, %p179
      %s182 = sadd.s32 %s181, 1
      %p185 = scmp.eq.s32.totalorder %s21, 1
      %p186 = scmp.ne.s32.totalorder %s181, %s183
      %p187 = scmp.eq.s32.totalorder %s21, 0
      %p188 = por %p186, %p187
      %p189 = scmp.ne.s32.totalorder %s181, %s183
      %p190 = scmp.eq.s32.totalorder %s26, 1
      %p191 = por %p189, %p190
      %p192 = scmp.ne.s32.totalorder %s183, %s184
      %p193 = scmp.eq.s32.totalorder %s26, 0
      %p194 = por %p192, %p193
      %p195 = scmp.ne.s32.totalorder %s183, %s184
      %p196 = scmp.eq.s32.totalorder %s27, 1
      %p197 = por %p195, %p196
      %p199 = scmp.ne.s32.totalorder %s184, %s198
      %p200 = scmp.eq.s32.totalorder %s27, 0
      %p201 = por %p199, %p200
      %s202 = ssub.s32 %s21, %s28
      %p203 = scmp.eq.s32.totalorder %s202, 0
      %s205 = sadd.s32 %s204, 1
      %s206 = scalar_select %p203, %s204, %s205
      %p209 = pneg %p203
      %p210 = scmp.eq.s32.totalorder %s21, 1
      %p211 = por %p209, %p210
      %p212 = scmp.ne.s32.totalorder %s204, %s207
      %p213 = scmp.eq.s32.totalorder %s21, 0
      %p214 = por %p212, %p213
      %p215 = scmp.ne.s32.totalorder %s204, %s207
      %p216 = scmp.eq.s32.totalorder %s26, 1
      %p217 = por %p215, %p216
      %p218 = scmp.ne.s32.totalorder %s207, %s208
      %p219 = scmp.eq.s32.totalorder %s26, 0
      %p220 = por %p218, %p219
      %p221 = scmp.ne.s32.totalorder %s207, %s208
      %p222 = scmp.eq.s32.totalorder %s27, 1
      %p223 = por %p221, %p222
      %p225 = scmp.ne.s32.totalorder %s208, %s224
      %p226 = scmp.eq.s32.totalorder %s27, 0
      %p227 = por %p225, %p226
      %p228 = scmp.le.s32.totalorder 1, %s21
      %p229 = scmp.lt.s32.totalorder %s21, 3
      %p230 = pnand %p228, %p229
      %p231 = pneg %p230
      // Predicated region
      $region9: #{tpu_custom_call.1} parent=5 // pred_check
        _
      $region10: #{tpu_custom_call.1} parent=5 // pred_check_branch
        %233 = sbr.rel (%p230) target = $region12
      $region11: #{tpu_custom_call.1} parent=5 // pred_region
        %s234 = ssub.s32 %s21, 1
        // Predicated region
        $region13: #{tpu_custom_call.1} parent=11 // pred_check
          %p235 = pneg %p68
        $region14: #{tpu_custom_call.1} parent=11 // pred_check_branch
          %237 = sbr.rel (%p235) target = $region16
        $region15: #{tpu_custom_call.1} parent=11 // pred_region
          %239 = vsyncadd [#allocation6], 0
          %s240 = sshll.u32 %s1, 4
          %s241 = int_to_ptr.hbm [resolvable:$true] %s240
          %s242 = sshll.u32 [#allocation5], 4
          %s243 = int_to_ptr.vmem [resolvable:$true] %s242
          %248 = dma.hbm_to_vmem [thread:$0]  %s241, 9216, %s243, [#allocation6], 1024, 1024, 64
        $region16: #{tpu_custom_call.1} parent=11 // pred_fallthru
          _
        // Predicated region
        $region17: #{tpu_custom_call.1} parent=11 // pred_check
          %p249 = pneg %p89
        $region18: #{tpu_custom_call.1} parent=11 // pred_check_branch
          %251 = sbr.rel (%p249) target = $region20
        $region19: #{tpu_custom_call.1} parent=11 // pred_region
          _
        $region20: #{tpu_custom_call.1} parent=11 // pred_fallthru
          _
        // Predicated region
        $region21: #{tpu_custom_call.1} parent=11 // pred_check
          %p252 = pneg %p110
        $region22: #{tpu_custom_call.1} parent=11 // pred_check_branch
          %254 = sbr.rel (%p252) target = $region24
        $region23: #{tpu_custom_call.1} parent=11 // pred_region
          _
        $region24: #{tpu_custom_call.1} parent=11 // pred_fallthru
          _
        // Predicated region
        $region25: #{tpu_custom_call.1} parent=11 // pred_check
          %p255 = pneg %p131
        $region26: #{tpu_custom_call.1} parent=11 // pred_check_branch
          %257 = sbr.rel (%p255) target = $region28
        $region27: #{tpu_custom_call.1} parent=11 // pred_region
          _
        $region28: #{tpu_custom_call.1} parent=11 // pred_fallthru
          _
        // Predicated region
        $region29: #{tpu_custom_call.1} parent=11 // pred_check
          %p258 = pneg %p152
        $region30: #{tpu_custom_call.1} parent=11 // pred_check_branch
          %260 = sbr.rel (%p258) target = $region32
        $region31: #{tpu_custom_call.1} parent=11 // pred_region
          _
        $region32: #{tpu_custom_call.1} parent=11 // pred_fallthru
          _
        // Predicated region
        $region33: #{tpu_custom_call.1} parent=11 // pred_check
          %p261 = pneg %p173
        $region34: #{tpu_custom_call.1} parent=11 // pred_check_branch
          %263 = sbr.rel (%p261) target = $region36
        $region35: #{tpu_custom_call.1} parent=11 // pred_region
          _
        $region36: #{tpu_custom_call.1} parent=11 // pred_fallthru
          _
        // Predicated region
        $region37: #{tpu_custom_call.1} parent=11 // pred_check
          %p264 = pneg %p194
        $region38: #{tpu_custom_call.1} parent=11 // pred_check_branch
          %266 = sbr.rel (%p264) target = $region40
        $region39: #{tpu_custom_call.1} parent=11 // pred_region
          _
        $region40: #{tpu_custom_call.1} parent=11 // pred_fallthru
          _
      $region12: #{tpu_custom_call.1} parent=5 // pred_fallthru
        _
      %p267 = scmp.lt.s32.totalorder %s21, 2
      // Predicated region
      $region41: #{tpu_custom_call.1} parent=5 // pred_check
        %p268 = pneg %p267
      $region42: #{tpu_custom_call.1} parent=5 // pred_check_branch
        %270 = sbr.rel (%p268) target = $region44
      $region43: #{tpu_custom_call.1} parent=5 // pred_region
        // Predicated region
        $region45: #{tpu_custom_call.1} parent=43 // pred_check
          %p271 = pneg %p41
        $region46: #{tpu_custom_call.1} parent=43 // pred_check_branch
          %273 = sbr.rel (%p271) target = $region48
        $region47: #{tpu_custom_call.1} parent=43 // pred_region
          %s274 = sand.u32 %s31, 1
          %s275 = scalar_lea.sflag [#allocation3], %s274
          %s276 = sand.u32 %s31, 1
          %s277 = smul.addr %s276, 256
          %s278 = scalar_lea.vmem [#allocation2], %s277
          %s279 = smul.u32 8, %s21
          %281 = vsyncadd %s275, 0
          %s282 = smul.addr %s279, 4
          %s283 = scalar_lea.hbm %s0, %s282
          %s284 = sshll.u32 %s283, 4
          %s285 = int_to_ptr.hbm [resolvable:$true] %s284
          %s286 = sshll.u32 %s278, 4
          %s287 = int_to_ptr.vmem [resolvable:$true] %s286
          %292 = dma.hbm_to_vmem [thread:$0]  %s285, 4096, %s287, %s275, 1024, 512, 32
        $region48: #{tpu_custom_call.1} parent=43 // pred_fallthru
          _
      $region44: #{tpu_custom_call.1} parent=5 // pred_fallthru
        _
      %p293 = scmp.le.s32.totalorder 1, %s21
      %p294 = scmp.lt.s32.totalorder %s21, 3
      %p295 = pnand %p293, %p294
      %p296 = pneg %p295
      // Predicated region
      $region49: #{tpu_custom_call.1} parent=5 // pred_check
        _
      $region50: #{tpu_custom_call.1} parent=5 // pred_check_branch
        %298 = sbr.rel (%p295) target = $region52
      $region51: #{tpu_custom_call.1} parent=5 // pred_region
        %s299 = ssub.s32 %s21, 1
        %s300 = sand.u32 %s34, 1
        %s301 = scalar_lea.sflag [#allocation3], %s300
        %s302 = sand.u32 %s34, 1
        %s303 = smul.addr %s302, 256
        %s304 = scalar_lea.vmem [#allocation2], %s303
        // Predicated region
        $region53: #{tpu_custom_call.1} parent=51 // pred_check
          %p305 = pneg %p47
        $region54: #{tpu_custom_call.1} parent=51 // pred_check_branch
          %307 = sbr.rel (%p305) target = $region56
        $region55: #{tpu_custom_call.1} parent=51 // pred_region
          %309 = dma.done %s301, 4096
        $region56: #{tpu_custom_call.1} parent=51 // pred_fallthru
          _
        // Predicated region
        $region57: #{tpu_custom_call.1} parent=51 // pred_check
          %p310 = pneg %p68
        $region58: #{tpu_custom_call.1} parent=51 // pred_check_branch
          %312 = sbr.rel (%p310) target = $region60
        $region59: #{tpu_custom_call.1} parent=51 // pred_region
          %314 = dma.done [#allocation6], 9216
        $region60: #{tpu_custom_call.1} parent=51 // pred_fallthru
          _
        %s315 = sand.u32 %s34, 1
        %s316 = scalar_lea.sflag [#allocation3], %s315
        %s317 = sand.u32 %s34, 1
        %s318 = smul.addr %s317, 256
        %s319 = scalar_lea.vmem [#allocation2], %s318
        %p320 = pneg %p47
        %p321 = pneg %p44
        %p322 = pneg %p68
        %p323 = pneg %p65
        %p324 = pneg %p89
        %p325 = pneg %p86
        %p326 = pneg %p110
        %p327 = pneg %p107
        %p328 = pneg %p131
        %p329 = pneg %p128
        %p330 = pneg %p152
        %p331 = pneg %p149
        %p332 = pneg %p173
        %p333 = pneg %p170
        %p334 = pneg %p194
        %p335 = pneg %p191
        %p336 = pneg %p220
        %p337 = pneg %p217
        %s338 = sand.u32 %s207, 1
        %s339 = scalar_lea.sflag [#allocation4], %s338
        %s340 = sand.u32 %s207, 1
        %s341 = smul.addr %s340, 256
        %s342 = scalar_lea.vmem [#allocation7], %s341
        %s343 = smul.u32 8, %s26
        %s344 = smul.u32 8, %s26
        %v346 = vld [vmem:[%s304] sm:$0xff]
        %v347 = vld [vmem:[%s304 + $0x8] sm:$0xff]
        %v348 = vld [vmem:[%s304 + $0x10] sm:$0xff]
        %v349 = vld [vmem:[%s304 + $0x18] sm:$0xff]
        %v350 = vld [vmem:[%s304 + $0x20] sm:$0xff]
        %v351 = vld [vmem:[%s304 + $0x28] sm:$0xff]
        %v352 = vld [vmem:[%s304 + $0x30] sm:$0xff]
        %v353 = vld [vmem:[%s304 + $0x38] sm:$0xff]
        %v354 = vld [vmem:[%s304 + $0x40] sm:$0xff]
        %v355 = vld [vmem:[%s304 + $0x48] sm:$0xff]
        %v356 = vld [vmem:[%s304 + $0x50] sm:$0xff]
        %v357 = vld [vmem:[%s304 + $0x58] sm:$0xff]
        %v358 = vld [vmem:[%s304 + $0x60] sm:$0xff]
        %v359 = vld [vmem:[%s304 + $0x68] sm:$0xff]
        %v360 = vld [vmem:[%s304 + $0x70] sm:$0xff]
        %v361 = vld [vmem:[%s304 + $0x78] sm:$0xff]
        %v362 = vld [vmem:[%s304 + $0x80] sm:$0xff]
        %v363 = vld [vmem:[%s304 + $0x88] sm:$0xff]
        %v364 = vld [vmem:[%s304 + $0x90] sm:$0xff]
        %v365 = vld [vmem:[%s304 + $0x98] sm:$0xff]
        %v366 = vld [vmem:[%s304 + $0xa0] sm:$0xff]
        %v367 = vld [vmem:[%s304 + $0xa8] sm:$0xff]
        %v368 = vld [vmem:[%s304 + $0xb0] sm:$0xff]
        %v369 = vld [vmem:[%s304 + $0xb8] sm:$0xff]
        %v370 = vld [vmem:[%s304 + $0xc0] sm:$0xff]
        %v371 = vld [vmem:[%s304 + $0xc8] sm:$0xff]
        %v372 = vld [vmem:[%s304 + $0xd0] sm:$0xff]
        %v373 = vld [vmem:[%s304 + $0xd8] sm:$0xff]
        %v374 = vld [vmem:[%s304 + $0xe0] sm:$0xff]
        %v375 = vld [vmem:[%s304 + $0xe8] sm:$0xff]
        %v376 = vld [vmem:[%s304 + $0xf0] sm:$0xff]
        %v377 = vld [vmem:[%s304 + $0xf8] sm:$0xff]
        %v378 = vld [vmem:[%s2] sm:$0xf]
        %v379 = vld [vmem:[%s2 + $0x4] sm:$0xf]
        %v380 = vld [vmem:[%s2 + $0x8] sm:$0xf]
        %v381 = vld [vmem:[%s2 + $0xc] sm:$0xf]
        %v382 = vld [vmem:[%s3] sm:$0xff]
        %v383 = vld [vmem:[%s3 + $0x8] sm:$0xff]
        %v384 = vld [vmem:[%s3 + $0x10] sm:$0xff]
        %v385 = vld [vmem:[%s3 + $0x18] sm:$0xff]
        %387 = vset.pattern.permute.xlu0 0
        %388 = vperm.xlu0 %387, %v382
        %v389 = vpop.permute.xlu0 %388
        %392 = vset.pattern.permute.xlu0 0
        %393 = vperm.xlu0 %392, %v383
        %v394 = vpop.permute.xlu0 %393
        %397 = vset.pattern.permute.xlu0 0
        %398 = vperm.xlu0 %397, %v384
        %v399 = vpop.permute.xlu0 %398
        %402 = vset.pattern.permute.xlu0 0
        %403 = vperm.xlu0 %402, %v385
        %v404 = vpop.permute.xlu0 %403
        %v410 = vunpack.c.l.b16 %v378
        %v411 = vunpack.c.l.b16 %v379
        %v412 = vunpack.c.l.b16 %v380
        %v413 = vunpack.c.l.b16 %v381
        %v414 = vpack.c.b16 %v411, %v410
        %v415 = vpack.c.b16 %v413, %v412
        %v448 = vunpack.c.l.b16 %v346
        %v449 = vunpack.c.h.b16 %v346
        %v450 = vunpack.c.l.b16 %v347
        %v451 = vunpack.c.h.b16 %v347
        %v452 = vunpack.c.l.b16 %v348
        %v453 = vunpack.c.h.b16 %v348
        %v454 = vunpack.c.l.b16 %v349
        %v455 = vunpack.c.h.b16 %v349
        %v456 = vunpack.c.l.b16 %v350
        %v457 = vunpack.c.h.b16 %v350
        %v458 = vunpack.c.l.b16 %v351
        %v459 = vunpack.c.h.b16 %v351
        %v460 = vunpack.c.l.b16 %v352
        %v461 = vunpack.c.h.b16 %v352
        %v462 = vunpack.c.l.b16 %v353
        %v463 = vunpack.c.h.b16 %v353
        %v464 = vunpack.c.l.b16 %v354
        %v465 = vunpack.c.h.b16 %v354
        %v466 = vunpack.c.l.b16 %v355
        %v467 = vunpack.c.h.b16 %v355
        %v468 = vunpack.c.l.b16 %v356
        %v469 = vunpack.c.h.b16 %v356
        %v470 = vunpack.c.l.b16 %v357
        %v471 = vunpack.c.h.b16 %v357
        %v472 = vunpack.c.l.b16 %v358
        %v473 = vunpack.c.h.b16 %v358
        %v474 = vunpack.c.l.b16 %v359
        %v475 = vunpack.c.h.b16 %v359
        %v476 = vunpack.c.l.b16 %v360
        %v477 = vunpack.c.h.b16 %v360
        %v478 = vunpack.c.l.b16 %v361
        %v479 = vunpack.c.h.b16 %v361
        %v480 = vunpack.c.l.b16 %v362
        %v481 = vunpack.c.h.b16 %v362
        %v482 = vunpack.c.l.b16 %v363
        %v483 = vunpack.c.h.b16 %v363
        %v484 = vunpack.c.l.b16 %v364
        %v485 = vunpack.c.h.b16 %v364
        %v486 = vunpack.c.l.b16 %v365
        %v487 = vunpack.c.h.b16 %v365
        %v488 = vunpack.c.l.b16 %v366
        %v489 = vunpack.c.h.b16 %v366
        %v490 = vunpack.c.l.b16 %v367
        %v491 = vunpack.c.h.b16 %v367
        %v492 = vunpack.c.l.b16 %v368
        %v493 = vunpack.c.h.b16 %v368
        %v494 = vunpack.c.l.b16 %v369
        %v495 = vunpack.c.h.b16 %v369
        %v496 = vunpack.c.l.b16 %v370
        %v497 = vunpack.c.h.b16 %v370
        %v498 = vunpack.c.l.b16 %v371
        %v499 = vunpack.c.h.b16 %v371
        %v500 = vunpack.c.l.b16 %v372
        %v501 = vunpack.c.h.b16 %v372
        %v502 = vunpack.c.l.b16 %v373
        %v503 = vunpack.c.h.b16 %v373
        %v504 = vunpack.c.l.b16 %v374
        %v505 = vunpack.c.h.b16 %v374
        %v506 = vunpack.c.l.b16 %v375
        %v507 = vunpack.c.h.b16 %v375
        %v508 = vunpack.c.l.b16 %v376
        %v509 = vunpack.c.h.b16 %v376
        %v510 = vunpack.c.l.b16 %v377
        %v511 = vunpack.c.h.b16 %v377
        %v512 = vpack.c.b16 %v456, %v448
        %v513 = vpack.c.b16 %v457, %v449
        %v514 = vpack.c.b16 %v458, %v450
        %v515 = vpack.c.b16 %v459, %v451
        %v516 = vpack.c.b16 %v460, %v452
        %v517 = vpack.c.b16 %v461, %v453
        %v518 = vpack.c.b16 %v462, %v454
        %v519 = vpack.c.b16 %v463, %v455
        %v520 = vpack.c.b16 %v472, %v464
        %v521 = vpack.c.b16 %v473, %v465
        %v522 = vpack.c.b16 %v474, %v466
        %v523 = vpack.c.b16 %v475, %v467
        %v524 = vpack.c.b16 %v476, %v468
        %v525 = vpack.c.b16 %v477, %v469
        %v526 = vpack.c.b16 %v478, %v470
        %v527 = vpack.c.b16 %v479, %v471
        %v528 = vpack.c.b16 %v488, %v480
        %v529 = vpack.c.b16 %v489, %v481
        %v530 = vpack.c.b16 %v490, %v482
        %v531 = vpack.c.b16 %v491, %v483
        %v532 = vpack.c.b16 %v492, %v484
        %v533 = vpack.c.b16 %v493, %v485
        %v534 = vpack.c.b16 %v494, %v486
        %v535 = vpack.c.b16 %v495, %v487
        %v536 = vpack.c.b16 %v504, %v496
        %v537 = vpack.c.b16 %v505, %v497
        %v538 = vpack.c.b16 %v506, %v498
        %v539 = vpack.c.b16 %v507, %v499
        %v540 = vpack.c.b16 %v508, %v500
        %v541 = vpack.c.b16 %v509, %v501
        %v542 = vpack.c.b16 %v510, %v502
        %v543 = vpack.c.b16 %v511, %v503
        %vm576 = vcmask 523264
        %v578 = vsel %vm576, %v414, 0
        %v581 = vsel %vm576, %v415, 0
        %583 = vmatpush.bf16.msra.mxu0 0
        %584 = vmatpush.bf16.msra.mxu0 0
        %585 = vmatpush.bf16.msra.mxu0 0
        %586 = vmatpush.bf16.msra.mxu0 0
        %587 = vmatpush.bf16.msra.mxu0 %v536
        %588 = vmatpush.bf16.msra.mxu0 %v528
        %589 = vmatpush.bf16.msra.mxu0 %v520
        %590 = vmatpush.bf16.msra.mxu0 %v512
        %591 = vmatmul.bf16.gmra.mxu0 %v578
        %v592 = vpop.f32.mrf.mxu0
        %v593 = vadd.f32 %v389, %v592
        %v594 = vpop.f32.mrf.mxu0
        %v595 = vadd.f32 %v394, %v594
        %596 = vmatmul.bf16.gmra.mxu0 %v581
        %v597 = vpop.f32.mrf.mxu0
        %v598 = vadd.f32 %v399, %v597
        %v599 = vpop.f32.mrf.mxu0
        %v600 = vadd.f32 %v404, %v599
        %601 = vdwg.mxu0
        %602 = vmatpush.bf16.msra.mxu0 0
        %603 = vmatpush.bf16.msra.mxu0 0
        %604 = vmatpush.bf16.msra.mxu0 0
        %605 = vmatpush.bf16.msra.mxu0 0
        %606 = vmatpush.bf16.msra.mxu0 %v537
        %607 = vmatpush.bf16.msra.mxu0 %v529
        %608 = vmatpush.bf16.msra.mxu0 %v521
        %609 = vmatpush.bf16.msra.mxu0 %v513
        %610 = vmatmul.bf16.gmra.mxu0 %v578
        %v611 = vpop.f32.mrf.mxu0
        %v612 = vadd.f32 %v389, %v611
        %v613 = vpop.f32.mrf.mxu0
        %v614 = vadd.f32 %v394, %v613
        %615 = vmatmul.bf16.gmra.mxu0 %v581
        %v616 = vpop.f32.mrf.mxu0
        %v617 = vadd.f32 %v399, %v616
        %v618 = vpop.f32.mrf.mxu0
        %v619 = vadd.f32 %v404, %v618
        %620 = vdwg.mxu0
        %621 = vmatpush.bf16.msra.mxu0 0
        %622 = vmatpush.bf16.msra.mxu0 0
        %623 = vmatpush.bf16.msra.mxu0 0
        %624 = vmatpush.bf16.msra.mxu0 0
        %625 = vmatpush.bf16.msra.mxu0 %v538
        %626 = vmatpush.bf16.msra.mxu0 %v530
        %627 = vmatpush.bf16.msra.mxu0 %v522
        %628 = vmatpush.bf16.msra.mxu0 %v514
        %629 = vmatmul.bf16.gmra.mxu0 %v578
        %v630 = vpop.f32.mrf.mxu0
        %v631 = vadd.f32 %v389, %v630
        %v632 = vpop.f32.mrf.mxu0
        %v633 = vadd.f32 %v394, %v632
        %634 = vmatmul.bf16.gmra.mxu0 %v581
        %v635 = vpop.f32.mrf.mxu0
        %v636 = vadd.f32 %v399, %v635
        %v637 = vpop.f32.mrf.mxu0
        %v638 = vadd.f32 %v404, %v637
        %639 = vdwg.mxu0
        %640 = vmatpush.bf16.msra.mxu0 0
        %641 = vmatpush.bf16.msra.mxu0 0
        %642 = vmatpush.bf16.msra.mxu0 0
        %643 = vmatpush.bf16.msra.mxu0 0
        %644 = vmatpush.bf16.msra.mxu0 %v539
        %645 = vmatpush.bf16.msra.mxu0 %v531
        %646 = vmatpush.bf16.msra.mxu0 %v523
        %647 = vmatpush.bf16.msra.mxu0 %v515
        %648 = vmatmul.bf16.gmra.mxu0 %v578
        %v649 = vpop.f32.mrf.mxu0
        %v650 = vadd.f32 %v389, %v649
        %v651 = vpop.f32.mrf.mxu0
        %v652 = vadd.f32 %v394, %v651
        %653 = vmatmul.bf16.gmra.mxu0 %v581
        %v654 = vpop.f32.mrf.mxu0
        %v655 = vadd.f32 %v399, %v654
        %v656 = vpop.f32.mrf.mxu0
        %v657 = vadd.f32 %v404, %v656
        %658 = vdwg.mxu0
        %659 = vmatpush.bf16.msra.mxu0 0
        %660 = vmatpush.bf16.msra.mxu0 0
        %661 = vmatpush.bf16.msra.mxu0 0
        %662 = vmatpush.bf16.msra.mxu0 0
        %663 = vmatpush.bf16.msra.mxu0 %v540
        %664 = vmatpush.bf16.msra.mxu0 %v532
        %665 = vmatpush.bf16.msra.mxu0 %v524
        %666 = vmatpush.bf16.msra.mxu0 %v516
        %667 = vmatmul.bf16.gmra.mxu0 %v578
        %v668 = vpop.f32.mrf.mxu0
        %v669 = vadd.f32 %v389, %v668
        %v670 = vpop.f32.mrf.mxu0
        %v671 = vadd.f32 %v394, %v670
        %672 = vmatmul.bf16.gmra.mxu0 %v581
        %v673 = vpop.f32.mrf.mxu0
        %v674 = vadd.f32 %v399, %v673
        %v675 = vpop.f32.mrf.mxu0
        %v676 = vadd.f32 %v404, %v675
        %677 = vdwg.mxu0
        %678 = vmatpush.bf16.msra.mxu0 0
        %679 = vmatpush.bf16.msra.mxu0 0
        %680 = vmatpush.bf16.msra.mxu0 0
        %681 = vmatpush.bf16.msra.mxu0 0
        %682 = vmatpush.bf16.msra.mxu0 %v541
        %683 = vmatpush.bf16.msra.mxu0 %v533
        %684 = vmatpush.bf16.msra.mxu0 %v525
        %685 = vmatpush.bf16.msra.mxu0 %v517
        %686 = vmatmul.bf16.gmra.mxu0 %v578
        %v687 = vpop.f32.mrf.mxu0
        %v688 = vadd.f32 %v389, %v687
        %v689 = vpop.f32.mrf.mxu0
        %v690 = vadd.f32 %v394, %v689
        %691 = vmatmul.bf16.gmra.mxu0 %v581
        %v692 = vpop.f32.mrf.mxu0
        %v693 = vadd.f32 %v399, %v692
        %v694 = vpop.f32.mrf.mxu0
        %v695 = vadd.f32 %v404, %v694
        %696 = vdwg.mxu0
        %697 = vmatpush.bf16.msra.mxu0 0
        %698 = vmatpush.bf16.msra.mxu0 0
        %699 = vmatpush.bf16.msra.mxu0 0
        %700 = vmatpush.bf16.msra.mxu0 0
        %701 = vmatpush.bf16.msra.mxu0 %v542
        %702 = vmatpush.bf16.msra.mxu0 %v534
        %703 = vmatpush.bf16.msra.mxu0 %v526
        %704 = vmatpush.bf16.msra.mxu0 %v518
        %705 = vmatmul.bf16.gmra.mxu0 %v578
        %v706 = vpop.f32.mrf.mxu0
        %v707 = vadd.f32 %v389, %v706
        %v708 = vpop.f32.mrf.mxu0
        %v709 = vadd.f32 %v394, %v708
        %710 = vmatmul.bf16.gmra.mxu0 %v581
        %v711 = vpop.f32.mrf.mxu0
        %v712 = vadd.f32 %v399, %v711
        %v713 = vpop.f32.mrf.mxu0
        %v714 = vadd.f32 %v404, %v713
        %715 = vdwg.mxu0
        %716 = vmatpush.bf16.msra.mxu0 0
        %717 = vmatpush.bf16.msra.mxu0 0
        %718 = vmatpush.bf16.msra.mxu0 0
        %719 = vmatpush.bf16.msra.mxu0 0
        %720 = vmatpush.bf16.msra.mxu0 %v543
        %721 = vmatpush.bf16.msra.mxu0 %v535
        %722 = vmatpush.bf16.msra.mxu0 %v527
        %723 = vmatpush.bf16.msra.mxu0 %v519
        %724 = vmatmul.bf16.gmra.mxu0 %v578
        %v725 = vpop.f32.mrf.mxu0
        %v726 = vadd.f32 %v389, %v725
        %v727 = vpop.f32.mrf.mxu0
        %v728 = vadd.f32 %v394, %v727
        %729 = vmatmul.bf16.gmra.mxu0 %v581
        %v730 = vpop.f32.mrf.mxu0
        %v731 = vadd.f32 %v399, %v730
        %v732 = vpop.f32.mrf.mxu0
        %v733 = vadd.f32 %v404, %v732
        %734 = vdwg.mxu0
        %v735 = vmax.f32 %v593, 0.0
        %v736 = vmax.f32 %v612, 0.0
        %v737 = vmax.f32 %v631, 0.0
        %v738 = vmax.f32 %v650, 0.0
        %v739 = vmax.f32 %v669, 0.0
        %v740 = vmax.f32 %v688, 0.0
        %v741 = vmax.f32 %v707, 0.0
        %v742 = vmax.f32 %v726, 0.0
        %v743 = vmax.f32 %v595, 0.0
        %v744 = vmax.f32 %v614, 0.0
        %v745 = vmax.f32 %v633, 0.0
        %v746 = vmax.f32 %v652, 0.0
        %v747 = vmax.f32 %v671, 0.0
        %v748 = vmax.f32 %v690, 0.0
        %v749 = vmax.f32 %v709, 0.0
        %v750 = vmax.f32 %v728, 0.0
        %v751 = vmax.f32 %v598, 0.0
        %v752 = vmax.f32 %v617, 0.0
        %v753 = vmax.f32 %v636, 0.0
        %v754 = vmax.f32 %v655, 0.0
        %v755 = vmax.f32 %v674, 0.0
        %v756 = vmax.f32 %v693, 0.0
        %v757 = vmax.f32 %v712, 0.0
        %v758 = vmax.f32 %v731, 0.0
        %v759 = vmax.f32 %v600, 0.0
        %v760 = vmax.f32 %v619, 0.0
        %v761 = vmax.f32 %v638, 0.0
        %v762 = vmax.f32 %v657, 0.0
        %v763 = vmax.f32 %v676, 0.0
        %v764 = vmax.f32 %v695, 0.0
        %v765 = vmax.f32 %v714, 0.0
        %v766 = vmax.f32 %v733, 0.0
        %767 = vrot.lane.b32.xlu0 %v735, 17
        %v768 = vpop.permute.xlu0 %767
        %769 = vrot.lane.b32.xlu0 %v736, 17
        %v770 = vpop.permute.xlu0 %769
        %771 = vrot.lane.b32.xlu0 %v737, 17
        %v772 = vpop.permute.xlu0 %771
        %773 = vrot.lane.b32.xlu0 %v738, 17
        %v774 = vpop.permute.xlu0 %773
        %775 = vrot.lane.b32.xlu0 %v739, 17
        %v776 = vpop.permute.xlu0 %775
        %777 = vrot.lane.b32.xlu0 %v740, 17
        %v778 = vpop.permute.xlu0 %777
        %779 = vrot.lane.b32.xlu0 %v741, 17
        %v780 = vpop.permute.xlu0 %779
        %781 = vrot.lane.b32.xlu0 %v742, 17
        %v782 = vpop.permute.xlu0 %781
        %v783 = vlaneseq
        %v784 = vand.u32 %v783, 127
        %vm785 = vcmp.lt.s32.totalorder %v784, 17
        %v786 = vsel %vm785, %v780, %v782
        %v787 = vsel %vm785, %v778, %v780
        %v788 = vsel %vm785, %v776, %v778
        %v789 = vsel %vm785, %v774, %v776
        %v790 = vsel %vm785, %v772, %v774
        %v791 = vsel %vm785, %v770, %v772
        %v792 = vsel %vm785, %v768, %v770
        %v793 = vsel %vm785, %v782, %v768
        %v794 = vld [vmem:[#allocation5] sm:$0xff]
        %v795 = vld [vmem:[#allocation5 + $0x8] sm:$0xff]
        %v796 = vld [vmem:[#allocation5 + $0x10] sm:$0xff]
        %v797 = vld [vmem:[#allocation5 + $0x18] sm:$0xff]
        %v798 = vld [vmem:[#allocation5 + $0x20] sm:$0xff]
        %v799 = vld [vmem:[#allocation5 + $0x28] sm:$0xff]
        %v800 = vld [vmem:[#allocation5 + $0x30] sm:$0xff]
        %v801 = vld [vmem:[#allocation5 + $0x38] sm:$0xff]
        %v802 = vmul.f32 %v793, %v794
        %v803 = vmul.f32 %v792, %v795
        %v804 = vmul.f32 %v791, %v796
        %v805 = vmul.f32 %v790, %v797
        %v806 = vmul.f32 %v789, %v798
        %v807 = vmul.f32 %v788, %v799
        %v808 = vmul.f32 %v787, %v800
        %v809 = vmul.f32 %v786, %v801
        %810 = vrot.lane.b32.xlu0 %v735, 16
        %v811 = vpop.permute.xlu0 %810
        %812 = vrot.lane.b32.xlu0 %v736, 16
        %v813 = vpop.permute.xlu0 %812
        %814 = vrot.lane.b32.xlu0 %v737, 16
        %v815 = vpop.permute.xlu0 %814
        %816 = vrot.lane.b32.xlu0 %v738, 16
        %v817 = vpop.permute.xlu0 %816
        %818 = vrot.lane.b32.xlu0 %v739, 16
        %v819 = vpop.permute.xlu0 %818
        %820 = vrot.lane.b32.xlu0 %v740, 16
        %v821 = vpop.permute.xlu0 %820
        %822 = vrot.lane.b32.xlu0 %v741, 16
        %v823 = vpop.permute.xlu0 %822
        %824 = vrot.lane.b32.xlu0 %v742, 16
        %v825 = vpop.permute.xlu0 %824
        %vm826 = vcmp.lt.s32.totalorder %v784, 16
        %v827 = vsel %vm826, %v823, %v825
        %v828 = vsel %vm826, %v821, %v823
        %v829 = vsel %vm826, %v819, %v821
        %v830 = vsel %vm826, %v817, %v819
        %v831 = vsel %vm826, %v815, %v817
        %v832 = vsel %vm826, %v813, %v815
        %v833 = vsel %vm826, %v811, %v813
        %v834 = vsel %vm826, %v825, %v811
        %s835 = scalar_lea.vmem [#allocation5], 64
        %v836 = vld [vmem:[%s835] sm:$0xff]
        %v837 = vld [vmem:[%s835 + $0x8] sm:$0xff]
        %v838 = vld [vmem:[%s835 + $0x10] sm:$0xff]
        %v839 = vld [vmem:[%s835 + $0x18] sm:$0xff]
        %v840 = vld [vmem:[%s835 + $0x20] sm:$0xff]
        %v841 = vld [vmem:[%s835 + $0x28] sm:$0xff]
        %v842 = vld [vmem:[%s835 + $0x30] sm:$0xff]
        %v843 = vld [vmem:[%s835 + $0x38] sm:$0xff]
        %v844 = vmul.f32 %v834, %v836
        %v845 = vmul.f32 %v833, %v837
        %v846 = vmul.f32 %v832, %v838
        %v847 = vmul.f32 %v831, %v839
        %v848 = vmul.f32 %v830, %v840
        %v849 = vmul.f32 %v829, %v841
        %v850 = vmul.f32 %v828, %v842
        %v851 = vmul.f32 %v827, %v843
        %852 = vrot.lane.b32.xlu0 %v735, 15
        %v853 = vpop.permute.xlu0 %852
        %854 = vrot.lane.b32.xlu0 %v736, 15
        %v855 = vpop.permute.xlu0 %854
        %856 = vrot.lane.b32.xlu0 %v737, 15
        %v857 = vpop.permute.xlu0 %856
        %858 = vrot.lane.b32.xlu0 %v738, 15
        %v859 = vpop.permute.xlu0 %858
        %860 = vrot.lane.b32.xlu0 %v739, 15
        %v861 = vpop.permute.xlu0 %860
        %862 = vrot.lane.b32.xlu0 %v740, 15
        %v863 = vpop.permute.xlu0 %862
        %864 = vrot.lane.b32.xlu0 %v741, 15
        %v865 = vpop.permute.xlu0 %864
        %866 = vrot.lane.b32.xlu0 %v742, 15
        %v867 = vpop.permute.xlu0 %866
        %vm868 = vcmp.lt.s32.totalorder %v784, 15
        %v869 = vsel %vm868, %v865, %v867
        %v870 = vsel %vm868, %v863, %v865
        %v871 = vsel %vm868, %v861, %v863
        %v872 = vsel %vm868, %v859, %v861
        %v873 = vsel %vm868, %v857, %v859
        %v874 = vsel %vm868, %v855, %v857
        %v875 = vsel %vm868, %v853, %v855
        %v876 = vsel %vm868, %v867, %v853
        %s877 = scalar_lea.vmem [#allocation5], 128
        %v878 = vld [vmem:[%s877] sm:$0xff]
        %v879 = vld [vmem:[%s877 + $0x8] sm:$0xff]
        %v880 = vld [vmem:[%s877 + $0x10] sm:$0xff]
        %v881 = vld [vmem:[%s877 + $0x18] sm:$0xff]
        %v882 = vld [vmem:[%s877 + $0x20] sm:$0xff]
        %v883 = vld [vmem:[%s877 + $0x28] sm:$0xff]
        %v884 = vld [vmem:[%s877 + $0x30] sm:$0xff]
        %v885 = vld [vmem:[%s877 + $0x38] sm:$0xff]
        %v886 = vmul.f32 %v876, %v878
        %v887 = vmul.f32 %v875, %v879
        %v888 = vmul.f32 %v874, %v880
        %v889 = vmul.f32 %v873, %v881
        %v890 = vmul.f32 %v872, %v882
        %v891 = vmul.f32 %v871, %v883
        %v892 = vmul.f32 %v870, %v884
        %v893 = vmul.f32 %v869, %v885
        %894 = vrot.lane.b32.xlu0 %v735, 1
        %v895 = vpop.permute.xlu0 %894
        %896 = vrot.lane.b32.xlu0 %v736, 1
        %v897 = vpop.permute.xlu0 %896
        %898 = vrot.lane.b32.xlu0 %v737, 1
        %v899 = vpop.permute.xlu0 %898
        %900 = vrot.lane.b32.xlu0 %v738, 1
        %v901 = vpop.permute.xlu0 %900
        %902 = vrot.lane.b32.xlu0 %v739, 1
        %v903 = vpop.permute.xlu0 %902
        %904 = vrot.lane.b32.xlu0 %v740, 1
        %v905 = vpop.permute.xlu0 %904
        %906 = vrot.lane.b32.xlu0 %v741, 1
        %v907 = vpop.permute.xlu0 %906
        %908 = vrot.lane.b32.xlu0 %v742, 1
        %v909 = vpop.permute.xlu0 %908
        %vm910 = vcmp.lt.s32.totalorder %v784, 1
        %v911 = vsel %vm910, %v907, %v909
        %v912 = vsel %vm910, %v905, %v907
        %v913 = vsel %vm910, %v903, %v905
        %v914 = vsel %vm910, %v901, %v903
        %v915 = vsel %vm910, %v899, %v901
        %v916 = vsel %vm910, %v897, %v899
        %v917 = vsel %vm910, %v895, %v897
        %v918 = vsel %vm910, %v909, %v895
        %s919 = scalar_lea.vmem [#allocation5], 192
        %v920 = vld [vmem:[%s919] sm:$0xff]
        %v921 = vld [vmem:[%s919 + $0x8] sm:$0xff]
        %v922 = vld [vmem:[%s919 + $0x10] sm:$0xff]
        %v923 = vld [vmem:[%s919 + $0x18] sm:$0xff]
        %v924 = vld [vmem:[%s919 + $0x20] sm:$0xff]
        %v925 = vld [vmem:[%s919 + $0x28] sm:$0xff]
        %v926 = vld [vmem:[%s919 + $0x30] sm:$0xff]
        %v927 = vld [vmem:[%s919 + $0x38] sm:$0xff]
        %v928 = vmul.f32 %v918, %v920
        %v929 = vmul.f32 %v917, %v921
        %v930 = vmul.f32 %v916, %v922
        %v931 = vmul.f32 %v915, %v923
        %v932 = vmul.f32 %v914, %v924
        %v933 = vmul.f32 %v913, %v925
        %v934 = vmul.f32 %v912, %v926
        %v935 = vmul.f32 %v911, %v927
        %936 = vrot.lane.b32.xlu0 %v735, 127
        %v937 = vpop.permute.xlu0 %936
        %938 = vrot.lane.b32.xlu0 %v736, 127
        %v939 = vpop.permute.xlu0 %938
        %940 = vrot.lane.b32.xlu0 %v737, 127
        %v941 = vpop.permute.xlu0 %940
        %942 = vrot.lane.b32.xlu0 %v738, 127
        %v943 = vpop.permute.xlu0 %942
        %944 = vrot.lane.b32.xlu0 %v739, 127
        %v945 = vpop.permute.xlu0 %944
        %946 = vrot.lane.b32.xlu0 %v740, 127
        %v947 = vpop.permute.xlu0 %946
        %948 = vrot.lane.b32.xlu0 %v741, 127
        %v949 = vpop.permute.xlu0 %948
        %950 = vrot.lane.b32.xlu0 %v742, 127
        %v951 = vpop.permute.xlu0 %950
        %vm952 = vcmp.lt.s32.totalorder %v784, 127
        %v953 = vsel %vm952, %v949, %v951
        %v954 = vsel %vm952, %v947, %v949
        %v955 = vsel %vm952, %v945, %v947
        %v956 = vsel %vm952, %v943, %v945
        %v957 = vsel %vm952, %v941, %v943
        %v958 = vsel %vm952, %v939, %v941
        %v959 = vsel %vm952, %v937, %v939
        %v960 = vsel %vm952, %v951, %v937
        %s961 = scalar_lea.vmem [#allocation5], 320
        %v962 = vld [vmem:[%s961] sm:$0xff]
        %v963 = vld [vmem:[%s961 + $0x8] sm:$0xff]
        %v964 = vld [vmem:[%s961 + $0x10] sm:$0xff]
        %v965 = vld [vmem:[%s961 + $0x18] sm:$0xff]
        %v966 = vld [vmem:[%s961 + $0x20] sm:$0xff]
        %v967 = vld [vmem:[%s961 + $0x28] sm:$0xff]
        %v968 = vld [vmem:[%s961 + $0x30] sm:$0xff]
        %v969 = vld [vmem:[%s961 + $0x38] sm:$0xff]
        %v970 = vmul.f32 %v959, %v962
        %v971 = vmul.f32 %v958, %v963
        %v972 = vmul.f32 %v957, %v964
        %v973 = vmul.f32 %v956, %v965
        %v974 = vmul.f32 %v955, %v966
        %v975 = vmul.f32 %v954, %v967
        %v976 = vmul.f32 %v953, %v968
        %v977 = vmul.f32 %v960, %v969
        %978 = vrot.lane.b32.xlu0 %v735, 113
        %v979 = vpop.permute.xlu0 %978
        %980 = vrot.lane.b32.xlu0 %v736, 113
        %v981 = vpop.permute.xlu0 %980
        %982 = vrot.lane.b32.xlu0 %v737, 113
        %v983 = vpop.permute.xlu0 %982
        %984 = vrot.lane.b32.xlu0 %v738, 113
        %v985 = vpop.permute.xlu0 %984
        %986 = vrot.lane.b32.xlu0 %v739, 113
        %v987 = vpop.permute.xlu0 %986
        %988 = vrot.lane.b32.xlu0 %v740, 113
        %v989 = vpop.permute.xlu0 %988
        %990 = vrot.lane.b32.xlu0 %v741, 113
        %v991 = vpop.permute.xlu0 %990
        %992 = vrot.lane.b32.xlu0 %v742, 113
        %v993 = vpop.permute.xlu0 %992
        %vm994 = vcmp.lt.s32.totalorder %v784, 113
        %v995 = vsel %vm994, %v991, %v993
        %v996 = vsel %vm994, %v989, %v991
        %v997 = vsel %vm994, %v987, %v989
        %v998 = vsel %vm994, %v985, %v987
        %v999 = vsel %vm994, %v983, %v985
        %v1000 = vsel %vm994, %v981, %v983
        %v1001 = vsel %vm994, %v979, %v981
        %v1002 = vsel %vm994, %v993, %v979
        %s1003 = scalar_lea.vmem [#allocation5], 384
        %v1004 = vld [vmem:[%s1003] sm:$0xff]
        %v1005 = vld [vmem:[%s1003 + $0x8] sm:$0xff]
        %v1006 = vld [vmem:[%s1003 + $0x10] sm:$0xff]
        %v1007 = vld [vmem:[%s1003 + $0x18] sm:$0xff]
        %v1008 = vld [vmem:[%s1003 + $0x20] sm:$0xff]
        %v1009 = vld [vmem:[%s1003 + $0x28] sm:$0xff]
        %v1010 = vld [vmem:[%s1003 + $0x30] sm:$0xff]
        %v1011 = vld [vmem:[%s1003 + $0x38] sm:$0xff]
        %v1012 = vmul.f32 %v1001, %v1004
        %v1013 = vmul.f32 %v1000, %v1005
        %v1014 = vmul.f32 %v999, %v1006
        %v1015 = vmul.f32 %v998, %v1007
        %v1016 = vmul.f32 %v997, %v1008
        %v1017 = vmul.f32 %v996, %v1009
        %v1018 = vmul.f32 %v995, %v1010
        %v1019 = vmul.f32 %v1002, %v1011
        %1020 = vrot.lane.b32.xlu0 %v735, 112
        %v1021 = vpop.permute.xlu0 %1020
        %1022 = vrot.lane.b32.xlu0 %v736, 112
        %v1023 = vpop.permute.xlu0 %1022
        %1024 = vrot.lane.b32.xlu0 %v737, 112
        %v1025 = vpop.permute.xlu0 %1024
        %1026 = vrot.lane.b32.xlu0 %v738, 112
        %v1027 = vpop.permute.xlu0 %1026
        %1028 = vrot.lane.b32.xlu0 %v739, 112
        %v1029 = vpop.permute.xlu0 %1028
        %1030 = vrot.lane.b32.xlu0 %v740, 112
        %v1031 = vpop.permute.xlu0 %1030
        %1032 = vrot.lane.b32.xlu0 %v741, 112
        %v1033 = vpop.permute.xlu0 %1032
        %1034 = vrot.lane.b32.xlu0 %v742, 112
        %v1035 = vpop.permute.xlu0 %1034
        %vm1036 = vcmp.lt.s32.totalorder %v784, 112
        %v1037 = vsel %vm1036, %v1033, %v1035
        %v1038 = vsel %vm1036, %v1031, %v1033
        %v1039 = vsel %vm1036, %v1029, %v1031
        %v1040 = vsel %vm1036, %v1027, %v1029
        %v1041 = vsel %vm1036, %v1025, %v1027
        %v1042 = vsel %vm1036, %v1023, %v1025
        %v1043 = vsel %vm1036, %v1021, %v1023
        %v1044 = vsel %vm1036, %v1035, %v1021
        %s1045 = scalar_lea.vmem [#allocation5], 448
        %v1046 = vld [vmem:[%s1045] sm:$0xff]
        %v1047 = vld [vmem:[%s1045 + $0x8] sm:$0xff]
        %v1048 = vld [vmem:[%s1045 + $0x10] sm:$0xff]
        %v1049 = vld [vmem:[%s1045 + $0x18] sm:$0xff]
        %v1050 = vld [vmem:[%s1045 + $0x20] sm:$0xff]
        %v1051 = vld [vmem:[%s1045 + $0x28] sm:$0xff]
        %v1052 = vld [vmem:[%s1045 + $0x30] sm:$0xff]
        %v1053 = vld [vmem:[%s1045 + $0x38] sm:$0xff]
        %v1054 = vmul.f32 %v1043, %v1046
        %v1055 = vmul.f32 %v1042, %v1047
        %v1056 = vmul.f32 %v1041, %v1048
        %v1057 = vmul.f32 %v1040, %v1049
        %v1058 = vmul.f32 %v1039, %v1050
        %v1059 = vmul.f32 %v1038, %v1051
        %v1060 = vmul.f32 %v1037, %v1052
        %v1061 = vmul.f32 %v1044, %v1053
        %1062 = vrot.lane.b32.xlu0 %v735, 111
        %v1063 = vpop.permute.xlu0 %1062
        %1064 = vrot.lane.b32.xlu0 %v736, 111
        %v1065 = vpop.permute.xlu0 %1064
        %1066 = vrot.lane.b32.xlu0 %v737, 111
        %v1067 = vpop.permute.xlu0 %1066
        %1068 = vrot.lane.b32.xlu0 %v738, 111
        %v1069 = vpop.permute.xlu0 %1068
        %1070 = vrot.lane.b32.xlu0 %v739, 111
        %v1071 = vpop.permute.xlu0 %1070
        %1072 = vrot.lane.b32.xlu0 %v740, 111
        %v1073 = vpop.permute.xlu0 %1072
        %1074 = vrot.lane.b32.xlu0 %v741, 111
        %v1075 = vpop.permute.xlu0 %1074
        %1076 = vrot.lane.b32.xlu0 %v742, 111
        %v1077 = vpop.permute.xlu0 %1076
        %vm1078 = vcmp.lt.s32.totalorder %v784, 111
        %v1079 = vsel %vm1078, %v1075, %v1077
        %v1080 = vsel %vm1078, %v1073, %v1075
        %v1081 = vsel %vm1078, %v1071, %v1073
        %v1082 = vsel %vm1078, %v1069, %v1071
        %v1083 = vsel %vm1078, %v1067, %v1069
        %v1084 = vsel %vm1078, %v1065, %v1067
        %v1085 = vsel %vm1078, %v1063, %v1065
        %v1086 = vsel %vm1078, %v1077, %v1063
        %s1087 = scalar_lea.vmem [#allocation5], 512
        %v1088 = vld [vmem:[%s1087] sm:$0xff]
        %v1089 = vld [vmem:[%s1087 + $0x8] sm:$0xff]
        %v1090 = vld [vmem:[%s1087 + $0x10] sm:$0xff]
        %v1091 = vld [vmem:[%s1087 + $0x18] sm:$0xff]
        %v1092 = vld [vmem:[%s1087 + $0x20] sm:$0xff]
        %v1093 = vld [vmem:[%s1087 + $0x28] sm:$0xff]
        %v1094 = vld [vmem:[%s1087 + $0x30] sm:$0xff]
        %v1095 = vld [vmem:[%s1087 + $0x38] sm:$0xff]
        %v1096 = vmul.f32 %v1085, %v1088
        %v1097 = vmul.f32 %v1084, %v1089
        %v1098 = vmul.f32 %v1083, %v1090
        %v1099 = vmul.f32 %v1082, %v1091
        %v1100 = vmul.f32 %v1081, %v1092
        %v1101 = vmul.f32 %v1080, %v1093
        %v1102 = vmul.f32 %v1079, %v1094
        %v1103 = vmul.f32 %v1086, %v1095
        %v1104 = vpack.c.bf16 %v844, %v802
        %v1105 = vpack.c.bf16 %v845, %v803
        %v1106 = vpack.c.bf16 %v846, %v804
        %v1107 = vpack.c.bf16 %v847, %v805
        %v1108 = vpack.c.bf16 %v848, %v806
        %v1109 = vpack.c.bf16 %v849, %v807
        %v1110 = vpack.c.bf16 %v850, %v808
        %v1111 = vpack.c.bf16 %v851, %v809
        %v1112 = vpack.c.bf16 %v928, %v886
        %v1113 = vpack.c.bf16 %v929, %v887
        %v1114 = vpack.c.bf16 %v930, %v888
        %v1115 = vpack.c.bf16 %v931, %v889
        %v1116 = vpack.c.bf16 %v932, %v890
        %v1117 = vpack.c.bf16 %v933, %v891
        %v1118 = vpack.c.bf16 %v934, %v892
        %v1119 = vpack.c.bf16 %v935, %v893
        %v1120 = vpack.c.bf16 %v970, %v735
        %v1121 = vpack.c.bf16 %v971, %v736
        %v1122 = vpack.c.bf16 %v972, %v737
        %v1123 = vpack.c.bf16 %v973, %v738
        %v1124 = vpack.c.bf16 %v974, %v739
        %v1125 = vpack.c.bf16 %v975, %v740
        %v1126 = vpack.c.bf16 %v976, %v741
        %v1127 = vpack.c.bf16 %v977, %v742
        %v1128 = vpack.c.bf16 %v1054, %v1012
        %v1129 = vpack.c.bf16 %v1055, %v1013
        %v1130 = vpack.c.bf16 %v1056, %v1014
        %v1131 = vpack.c.bf16 %v1057, %v1015
        %v1132 = vpack.c.bf16 %v1058, %v1016
        %v1133 = vpack.c.bf16 %v1059, %v1017
        %v1134 = vpack.c.bf16 %v1060, %v1018
        %v1135 = vpack.c.bf16 %v1061, %v1019
        %v1136 = vpack.c.bf16 %v1096, %v1096
        %v1137 = vpack.c.bf16 %v1097, %v1097
        %v1138 = vpack.c.bf16 %v1098, %v1098
        %v1139 = vpack.c.bf16 %v1099, %v1099
        %v1140 = vpack.c.bf16 %v1100, %v1100
        %v1141 = vpack.c.bf16 %v1101, %v1101
        %v1142 = vpack.c.bf16 %v1102, %v1102
        %v1143 = vpack.c.bf16 %v1103, %v1103
        %v1144 = vld [vmem:[%s4] sm:$0xf]
        %v1145 = vld [vmem:[%s5] sm:$0xff]
        %1147 = vset.pattern.permute.xlu0 0
        %1148 = vperm.xlu0 %1147, %v1145
        %v1149 = vpop.permute.xlu0 %1148
        %vm1151 = vcmask 588800
        %v1153 = vsel %vm1151, %v1144, 0
        %vm1155 = vcmask 1043456
        %v1157 = vsel %vm1155, %v1136, 0
        %v1160 = vsel %vm1155, %v1137, 0
        %v1163 = vsel %vm1155, %v1138, 0
        %v1166 = vsel %vm1155, %v1139, 0
        %v1169 = vsel %vm1155, %v1140, 0
        %v1172 = vsel %vm1155, %v1141, 0
        %v1175 = vsel %vm1155, %v1142, 0
        %v1178 = vsel %vm1155, %v1143, 0
        %1180 = vmatpush.bf16.msra.mxu0 0
        %1181 = vmatpush.bf16.msra.mxu0 0
        %1182 = vmatpush.bf16.msra.mxu0 0
        %1183 = vmatpush.bf16.msra.mxu0 %v1157
        %1184 = vmatpush.bf16.msra.mxu0 %v1128
        %1185 = vmatpush.bf16.msra.mxu0 %v1120
        %1186 = vmatpush.bf16.msra.mxu0 %v1112
        %1187 = vmatpush.bf16.msra.mxu0 %v1104
        %1188 = vmatmul.bf16.gmra.mxu0 %v1153
        %v1189 = vpop.f32.mrf.mxu0
        %v1190 = vadd.f32 %v1149, %v1189
        %v1191 = vpop.f32.mrf.mxu0
        %1192 = vdwg.mxu0
        %1193 = vmatpush.bf16.msra.mxu0 0
        %1194 = vmatpush.bf16.msra.mxu0 0
        %1195 = vmatpush.bf16.msra.mxu0 0
        %1196 = vmatpush.bf16.msra.mxu0 %v1160
        %1197 = vmatpush.bf16.msra.mxu0 %v1129
        %1198 = vmatpush.bf16.msra.mxu0 %v1121
        %1199 = vmatpush.bf16.msra.mxu0 %v1113
        %1200 = vmatpush.bf16.msra.mxu0 %v1105
        %1201 = vmatmul.bf16.gmra.mxu0 %v1153
        %v1202 = vpop.f32.mrf.mxu0
        %v1203 = vadd.f32 %v1149, %v1202
        %v1204 = vpop.f32.mrf.mxu0
        %1205 = vdwg.mxu0
        %1206 = vmatpush.bf16.msra.mxu0 0
        %1207 = vmatpush.bf16.msra.mxu0 0
        %1208 = vmatpush.bf16.msra.mxu0 0
        %1209 = vmatpush.bf16.msra.mxu0 %v1163
        %1210 = vmatpush.bf16.msra.mxu0 %v1130
        %1211 = vmatpush.bf16.msra.mxu0 %v1122
        %1212 = vmatpush.bf16.msra.mxu0 %v1114
        %1213 = vmatpush.bf16.msra.mxu0 %v1106
        %1214 = vmatmul.bf16.gmra.mxu0 %v1153
        %v1215 = vpop.f32.mrf.mxu0
        %v1216 = vadd.f32 %v1149, %v1215
        %v1217 = vpop.f32.mrf.mxu0
        %1218 = vdwg.mxu0
        %1219 = vmatpush.bf16.msra.mxu0 0
        %1220 = vmatpush.bf16.msra.mxu0 0
        %1221 = vmatpush.bf16.msra.mxu0 0
        %1222 = vmatpush.bf16.msra.mxu0 %v1166
        %1223 = vmatpush.bf16.msra.mxu0 %v1131
        %1224 = vmatpush.bf16.msra.mxu0 %v1123
        %1225 = vmatpush.bf16.msra.mxu0 %v1115
        %1226 = vmatpush.bf16.msra.mxu0 %v1107
        %1227 = vmatmul.bf16.gmra.mxu0 %v1153
        %v1228 = vpop.f32.mrf.mxu0
        %v1229 = vadd.f32 %v1149, %v1228
        %v1230 = vpop.f32.mrf.mxu0
        %1231 = vdwg.mxu0
        %1232 = vmatpush.bf16.msra.mxu0 0
        %1233 = vmatpush.bf16.msra.mxu0 0
        %1234 = vmatpush.bf16.msra.mxu0 0
        %1235 = vmatpush.bf16.msra.mxu0 %v1169
        %1236 = vmatpush.bf16.msra.mxu0 %v1132
        %1237 = vmatpush.bf16.msra.mxu0 %v1124
        %1238 = vmatpush.bf16.msra.mxu0 %v1116
        %1239 = vmatpush.bf16.msra.mxu0 %v1108
        %1240 = vmatmul.bf16.gmra.mxu0 %v1153
        %v1241 = vpop.f32.mrf.mxu0
        %v1242 = vadd.f32 %v1149, %v1241
        %v1243 = vpop.f32.mrf.mxu0
        %1244 = vdwg.mxu0
        %1245 = vmatpush.bf16.msra.mxu0 0
        %1246 = vmatpush.bf16.msra.mxu0 0
        %1247 = vmatpush.bf16.msra.mxu0 0
        %1248 = vmatpush.bf16.msra.mxu0 %v1172
        %1249 = vmatpush.bf16.msra.mxu0 %v1133
        %1250 = vmatpush.bf16.msra.mxu0 %v1125
        %1251 = vmatpush.bf16.msra.mxu0 %v1117
        %1252 = vmatpush.bf16.msra.mxu0 %v1109
        %1253 = vmatmul.bf16.gmra.mxu0 %v1153
        %v1254 = vpop.f32.mrf.mxu0
        %v1255 = vadd.f32 %v1149, %v1254
        %v1256 = vpop.f32.mrf.mxu0
        %1257 = vdwg.mxu0
        %1258 = vmatpush.bf16.msra.mxu0 0
        %1259 = vmatpush.bf16.msra.mxu0 0
        %1260 = vmatpush.bf16.msra.mxu0 0
        %1261 = vmatpush.bf16.msra.mxu0 %v1175
        %1262 = vmatpush.bf16.msra.mxu0 %v1134
        %1263 = vmatpush.bf16.msra.mxu0 %v1126
        %1264 = vmatpush.bf16.msra.mxu0 %v1118
        %1265 = vmatpush.bf16.msra.mxu0 %v1110
        %1266 = vmatmul.bf16.gmra.mxu0 %v1153
        %v1267 = vpop.f32.mrf.mxu0
        %v1268 = vadd.f32 %v1149, %v1267
        %v1269 = vpop.f32.mrf.mxu0
        %1270 = vdwg.mxu0
        %1271 = vmatpush.bf16.msra.mxu0 0
        %1272 = vmatpush.bf16.msra.mxu0 0
        %1273 = vmatpush.bf16.msra.mxu0 0
        %1274 = vmatpush.bf16.msra.mxu0 %v1178
        %1275 = vmatpush.bf16.msra.mxu0 %v1135
        %1276 = vmatpush.bf16.msra.mxu0 %v1127
        %1277 = vmatpush.bf16.msra.mxu0 %v1119
        %1278 = vmatpush.bf16.msra.mxu0 %v1111
        %1279 = vmatmul.bf16.gmra.mxu0 %v1153
        %v1280 = vpop.f32.mrf.mxu0
        %v1281 = vadd.f32 %v1149, %v1280
        %v1282 = vpop.f32.mrf.mxu0
        %1283 = vdwg.mxu0
        %v1284 = vmax.f32 %v1190, 0.0
        %v1285 = vmax.f32 %v1203, 0.0
        %v1286 = vmax.f32 %v1216, 0.0
        %v1287 = vmax.f32 %v1229, 0.0
        %v1288 = vmax.f32 %v1242, 0.0
        %v1289 = vmax.f32 %v1255, 0.0
        %v1290 = vmax.f32 %v1268, 0.0
        %v1291 = vmax.f32 %v1281, 0.0
        %v1292 = vld [vmem:[%s6] sm:$0xf]
        %v1293 = vld [vmem:[%s6 + $0x4] sm:$0xf]
        %v1294 = vld [vmem:[%s6 + $0x8] sm:$0xf]
        %v1295 = vld [vmem:[%s6 + $0xc] sm:$0xf]
        %v1296 = vld [vmem:[%s6 + $0x10] sm:$0xf]
        %v1297 = vld [vmem:[%s6 + $0x14] sm:$0xf]
        %v1298 = vld [vmem:[%s6 + $0x18] sm:$0xf]
        %v1299 = vld [vmem:[%s6 + $0x1c] sm:$0xf]
        %v1300 = vpack.c.bf16 %v1284, %v1284
        %v1301 = vpack.c.bf16 %v1285, %v1285
        %v1302 = vpack.c.bf16 %v1286, %v1286
        %v1303 = vpack.c.bf16 %v1287, %v1287
        %v1304 = vpack.c.bf16 %v1288, %v1288
        %v1305 = vpack.c.bf16 %v1289, %v1289
        %v1306 = vpack.c.bf16 %v1290, %v1290
        %v1307 = vpack.c.bf16 %v1291, %v1291
        %v1308 = vadd.f32 %v1284, %v743
        %v1309 = vadd.f32 %v1285, %v744
        %v1310 = vadd.f32 %v1286, %v745
        %v1311 = vadd.f32 %v1287, %v746
        %v1312 = vadd.f32 %v1288, %v747
        %v1313 = vadd.f32 %v1289, %v748
        %v1314 = vadd.f32 %v1290, %v749
        %v1315 = vadd.f32 %v1291, %v750
        %1316 = vrot.lane.b32.xlu0 %v1308, 17
        %v1317 = vpop.permute.xlu0 %1316
        %1318 = vrot.lane.b32.xlu0 %v1309, 17
        %v1319 = vpop.permute.xlu0 %1318
        %1320 = vrot.lane.b32.xlu0 %v1310, 17
        %v1321 = vpop.permute.xlu0 %1320
        %1322 = vrot.lane.b32.xlu0 %v1311, 17
        %v1323 = vpop.permute.xlu0 %1322
        %1324 = vrot.lane.b32.xlu0 %v1312, 17
        %v1325 = vpop.permute.xlu0 %1324
        %1326 = vrot.lane.b32.xlu0 %v1313, 17
        %v1327 = vpop.permute.xlu0 %1326
        %1328 = vrot.lane.b32.xlu0 %v1314, 17
        %v1329 = vpop.permute.xlu0 %1328
        %1330 = vrot.lane.b32.xlu0 %v1315, 17
        %v1331 = vpop.permute.xlu0 %1330
        %v1332 = vsel %vm785, %v1329, %v1331
        %v1333 = vsel %vm785, %v1327, %v1329
        %v1334 = vsel %vm785, %v1325, %v1327
        %v1335 = vsel %vm785, %v1323, %v1325
        %v1336 = vsel %vm785, %v1321, %v1323
        %v1337 = vsel %vm785, %v1319, %v1321
        %v1338 = vsel %vm785, %v1317, %v1319
        %v1339 = vsel %vm785, %v1331, %v1317
        %v1340 = vmul.f32 %v1339, %v794
        %v1341 = vmul.f32 %v1338, %v795
        %v1342 = vmul.f32 %v1337, %v796
        %v1343 = vmul.f32 %v1336, %v797
        %v1344 = vmul.f32 %v1335, %v798
        %v1345 = vmul.f32 %v1334, %v799
        %v1346 = vmul.f32 %v1333, %v800
        %v1347 = vmul.f32 %v1332, %v801
        %1348 = vrot.lane.b32.xlu0 %v1308, 16
        %v1349 = vpop.permute.xlu0 %1348
        %1350 = vrot.lane.b32.xlu0 %v1309, 16
        %v1351 = vpop.permute.xlu0 %1350
        %1352 = vrot.lane.b32.xlu0 %v1310, 16
        %v1353 = vpop.permute.xlu0 %1352
        %1354 = vrot.lane.b32.xlu0 %v1311, 16
        %v1355 = vpop.permute.xlu0 %1354
        %1356 = vrot.lane.b32.xlu0 %v1312, 16
        %v1357 = vpop.permute.xlu0 %1356
        %1358 = vrot.lane.b32.xlu0 %v1313, 16
        %v1359 = vpop.permute.xlu0 %1358
        %1360 = vrot.lane.b32.xlu0 %v1314, 16
        %v1361 = vpop.permute.xlu0 %1360
        %1362 = vrot.lane.b32.xlu0 %v1315, 16
        %v1363 = vpop.permute.xlu0 %1362
        %v1364 = vsel %vm826, %v1361, %v1363
        %v1365 = vsel %vm826, %v1359, %v1361
        %v1366 = vsel %vm826, %v1357, %v1359
        %v1367 = vsel %vm826, %v1355, %v1357
        %v1368 = vsel %vm826, %v1353, %v1355
        %v1369 = vsel %vm826, %v1351, %v1353
        %v1370 = vsel %vm826, %v1349, %v1351
        %v1371 = vsel %vm826, %v1363, %v1349
        %v1372 = vmul.f32 %v1371, %v836
        %v1373 = vmul.f32 %v1370, %v837
        %v1374 = vmul.f32 %v1369, %v838
        %v1375 = vmul.f32 %v1368, %v839
        %v1376 = vmul.f32 %v1367, %v840
        %v1377 = vmul.f32 %v1366, %v841
        %v1378 = vmul.f32 %v1365, %v842
        %v1379 = vmul.f32 %v1364, %v843
        %1380 = vrot.lane.b32.xlu0 %v1308, 15
        %v1381 = vpop.permute.xlu0 %1380
        %1382 = vrot.lane.b32.xlu0 %v1309, 15
        %v1383 = vpop.permute.xlu0 %1382
        %1384 = vrot.lane.b32.xlu0 %v1310, 15
        %v1385 = vpop.permute.xlu0 %1384
        %1386 = vrot.lane.b32.xlu0 %v1311, 15
        %v1387 = vpop.permute.xlu0 %1386
        %1388 = vrot.lane.b32.xlu0 %v1312, 15
        %v1389 = vpop.permute.xlu0 %1388
        %1390 = vrot.lane.b32.xlu0 %v1313, 15
        %v1391 = vpop.permute.xlu0 %1390
        %1392 = vrot.lane.b32.xlu0 %v1314, 15
        %v1393 = vpop.permute.xlu0 %1392
        %1394 = vrot.lane.b32.xlu0 %v1315, 15
        %v1395 = vpop.permute.xlu0 %1394
        %v1396 = vsel %vm868, %v1393, %v1395
        %v1397 = vsel %vm868, %v1391, %v1393
        %v1398 = vsel %vm868, %v1389, %v1391
        %v1399 = vsel %vm868, %v1387, %v1389
        %v1400 = vsel %vm868, %v1385, %v1387
        %v1401 = vsel %vm868, %v1383, %v1385
        %v1402 = vsel %vm868, %v1381, %v1383
        %v1403 = vsel %vm868, %v1395, %v1381
        %v1404 = vmul.f32 %v1403, %v878
        %v1405 = vmul.f32 %v1402, %v879
        %v1406 = vmul.f32 %v1401, %v880
        %v1407 = vmul.f32 %v1400, %v881
        %v1408 = vmul.f32 %v1399, %v882
        %v1409 = vmul.f32 %v1398, %v883
        %v1410 = vmul.f32 %v1397, %v884
        %v1411 = vmul.f32 %v1396, %v885
        %1412 = vrot.lane.b32.xlu0 %v1308, 1
        %v1413 = vpop.permute.xlu0 %1412
        %1414 = vrot.lane.b32.xlu0 %v1309, 1
        %v1415 = vpop.permute.xlu0 %1414
        %1416 = vrot.lane.b32.xlu0 %v1310, 1
        %v1417 = vpop.permute.xlu0 %1416
        %1418 = vrot.lane.b32.xlu0 %v1311, 1
        %v1419 = vpop.permute.xlu0 %1418
        %1420 = vrot.lane.b32.xlu0 %v1312, 1
        %v1421 = vpop.permute.xlu0 %1420
        %1422 = vrot.lane.b32.xlu0 %v1313, 1
        %v1423 = vpop.permute.xlu0 %1422
        %1424 = vrot.lane.b32.xlu0 %v1314, 1
        %v1425 = vpop.permute.xlu0 %1424
        %1426 = vrot.lane.b32.xlu0 %v1315, 1
        %v1427 = vpop.permute.xlu0 %1426
        %v1428 = vsel %vm910, %v1425, %v1427
        %v1429 = vsel %vm910, %v1423, %v1425
        %v1430 = vsel %vm910, %v1421, %v1423
        %v1431 = vsel %vm910, %v1419, %v1421
        %v1432 = vsel %vm910, %v1417, %v1419
        %v1433 = vsel %vm910, %v1415, %v1417
        %v1434 = vsel %vm910, %v1413, %v1415
        %v1435 = vsel %vm910, %v1427, %v1413
        %v1436 = vmul.f32 %v1435, %v920
        %v1437 = vmul.f32 %v1434, %v921
        %v1438 = vmul.f32 %v1433, %v922
        %v1439 = vmul.f32 %v1432, %v923
        %v1440 = vmul.f32 %v1431, %v924
        %v1441 = vmul.f32 %v1430, %v925
        %v1442 = vmul.f32 %v1429, %v926
        %v1443 = vmul.f32 %v1428, %v927
        %1444 = vrot.lane.b32.xlu0 %v1308, 127
        %v1445 = vpop.permute.xlu0 %1444
        %1446 = vrot.lane.b32.xlu0 %v1309, 127
        %v1447 = vpop.permute.xlu0 %1446
        %1448 = vrot.lane.b32.xlu0 %v1310, 127
        %v1449 = vpop.permute.xlu0 %1448
        %1450 = vrot.lane.b32.xlu0 %v1311, 127
        %v1451 = vpop.permute.xlu0 %1450
        %1452 = vrot.lane.b32.xlu0 %v1312, 127
        %v1453 = vpop.permute.xlu0 %1452
        %1454 = vrot.lane.b32.xlu0 %v1313, 127
        %v1455 = vpop.permute.xlu0 %1454
        %1456 = vrot.lane.b32.xlu0 %v1314, 127
        %v1457 = vpop.permute.xlu0 %1456
        %1458 = vrot.lane.b32.xlu0 %v1315, 127
        %v1459 = vpop.permute.xlu0 %1458
        %v1460 = vsel %vm952, %v1457, %v1459
        %v1461 = vsel %vm952, %v1455, %v1457
        %v1462 = vsel %vm952, %v1453, %v1455
        %v1463 = vsel %vm952, %v1451, %v1453
        %v1464 = vsel %vm952, %v1449, %v1451
        %v1465 = vsel %vm952, %v1447, %v1449
        %v1466 = vsel %vm952, %v1445, %v1447
        %v1467 = vsel %vm952, %v1459, %v1445
        %v1468 = vmul.f32 %v1466, %v962
        %v1469 = vmul.f32 %v1465, %v963
        %v1470 = vmul.f32 %v1464, %v964
        %v1471 = vmul.f32 %v1463, %v965
        %v1472 = vmul.f32 %v1462, %v966
        %v1473 = vmul.f32 %v1461, %v967
        %v1474 = vmul.f32 %v1460, %v968
        %v1475 = vmul.f32 %v1467, %v969
        %1476 = vrot.lane.b32.xlu0 %v1308, 113
        %v1477 = vpop.permute.xlu0 %1476
        %1478 = vrot.lane.b32.xlu0 %v1309, 113
        %v1479 = vpop.permute.xlu0 %1478
        %1480 = vrot.lane.b32.xlu0 %v1310, 113
        %v1481 = vpop.permute.xlu0 %1480
        %1482 = vrot.lane.b32.xlu0 %v1311, 113
        %v1483 = vpop.permute.xlu0 %1482
        %1484 = vrot.lane.b32.xlu0 %v1312, 113
        %v1485 = vpop.permute.xlu0 %1484
        %1486 = vrot.lane.b32.xlu0 %v1313, 113
        %v1487 = vpop.permute.xlu0 %1486
        %1488 = vrot.lane.b32.xlu0 %v1314, 113
        %v1489 = vpop.permute.xlu0 %1488
        %1490 = vrot.lane.b32.xlu0 %v1315, 113
        %v1491 = vpop.permute.xlu0 %1490
        %v1492 = vsel %vm994, %v1489, %v1491
        %v1493 = vsel %vm994, %v1487, %v1489
        %v1494 = vsel %vm994, %v1485, %v1487
        %v1495 = vsel %vm994, %v1483, %v1485
        %v1496 = vsel %vm994, %v1481, %v1483
        %v1497 = vsel %vm994, %v1479, %v1481
        %v1498 = vsel %vm994, %v1477, %v1479
        %v1499 = vsel %vm994, %v1491, %v1477
        %v1500 = vmul.f32 %v1498, %v1004
        %v1501 = vmul.f32 %v1497, %v1005
        %v1502 = vmul.f32 %v1496, %v1006
        %v1503 = vmul.f32 %v1495, %v1007
        %v1504 = vmul.f32 %v1494, %v1008
        %v1505 = vmul.f32 %v1493, %v1009
        %v1506 = vmul.f32 %v1492, %v1010
        %v1507 = vmul.f32 %v1499, %v1011
        %1508 = vrot.lane.b32.xlu0 %v1308, 112
        %v1509 = vpop.permute.xlu0 %1508
        %1510 = vrot.lane.b32.xlu0 %v1309, 112
        %v1511 = vpop.permute.xlu0 %1510
        %1512 = vrot.lane.b32.xlu0 %v1310, 112
        %v1513 = vpop.permute.xlu0 %1512
        %1514 = vrot.lane.b32.xlu0 %v1311, 112
        %v1515 = vpop.permute.xlu0 %1514
        %1516 = vrot.lane.b32.xlu0 %v1312, 112
        %v1517 = vpop.permute.xlu0 %1516
        %1518 = vrot.lane.b32.xlu0 %v1313, 112
        %v1519 = vpop.permute.xlu0 %1518
        %1520 = vrot.lane.b32.xlu0 %v1314, 112
        %v1521 = vpop.permute.xlu0 %1520
        %1522 = vrot.lane.b32.xlu0 %v1315, 112
        %v1523 = vpop.permute.xlu0 %1522
        %v1524 = vsel %vm1036, %v1521, %v1523
        %v1525 = vsel %vm1036, %v1519, %v1521
        %v1526 = vsel %vm1036, %v1517, %v1519
        %v1527 = vsel %vm1036, %v1515, %v1517
        %v1528 = vsel %vm1036, %v1513, %v1515
        %v1529 = vsel %vm1036, %v1511, %v1513
        %v1530 = vsel %vm1036, %v1509, %v1511
        %v1531 = vsel %vm1036, %v1523, %v1509
        %v1532 = vmul.f32 %v1530, %v1046
        %v1533 = vmul.f32 %v1529, %v1047
        %v1534 = vmul.f32 %v1528, %v1048
        %v1535 = vmul.f32 %v1527, %v1049
        %v1536 = vmul.f32 %v1526, %v1050
        %v1537 = vmul.f32 %v1525, %v1051
        %v1538 = vmul.f32 %v1524, %v1052
        %v1539 = vmul.f32 %v1531, %v1053
        %1540 = vrot.lane.b32.xlu0 %v1308, 111
        %v1541 = vpop.permute.xlu0 %1540
        %1542 = vrot.lane.b32.xlu0 %v1309, 111
        %v1543 = vpop.permute.xlu0 %1542
        %1544 = vrot.lane.b32.xlu0 %v1310, 111
        %v1545 = vpop.permute.xlu0 %1544
        %1546 = vrot.lane.b32.xlu0 %v1311, 111
        %v1547 = vpop.permute.xlu0 %1546
        %1548 = vrot.lane.b32.xlu0 %v1312, 111
        %v1549 = vpop.permute.xlu0 %1548
        %1550 = vrot.lane.b32.xlu0 %v1313, 111
        %v1551 = vpop.permute.xlu0 %1550
        %1552 = vrot.lane.b32.xlu0 %v1314, 111
        %v1553 = vpop.permute.xlu0 %1552
        %1554 = vrot.lane.b32.xlu0 %v1315, 111
        %v1555 = vpop.permute.xlu0 %1554
        %v1556 = vsel %vm1078, %v1553, %v1555
        %v1557 = vsel %vm1078, %v1551, %v1553
        %v1558 = vsel %vm1078, %v1549, %v1551
        %v1559 = vsel %vm1078, %v1547, %v1549
        %v1560 = vsel %vm1078, %v1545, %v1547
        %v1561 = vsel %vm1078, %v1543, %v1545
        %v1562 = vsel %vm1078, %v1541, %v1543
        %v1563 = vsel %vm1078, %v1555, %v1541
        %v1564 = vmul.f32 %v1562, %v1088
        %v1565 = vmul.f32 %v1561, %v1089
        %v1566 = vmul.f32 %v1560, %v1090
        %v1567 = vmul.f32 %v1559, %v1091
        %v1568 = vmul.f32 %v1558, %v1092
        %v1569 = vmul.f32 %v1557, %v1093
        %v1570 = vmul.f32 %v1556, %v1094
        %v1571 = vmul.f32 %v1563, %v1095
        %v1572 = vpack.c.bf16 %v1372, %v1340
        %v1573 = vpack.c.bf16 %v1373, %v1341
        %v1574 = vpack.c.bf16 %v1374, %v1342
        %v1575 = vpack.c.bf16 %v1375, %v1343
        %v1576 = vpack.c.bf16 %v1376, %v1344
        %v1577 = vpack.c.bf16 %v1377, %v1345
        %v1578 = vpack.c.bf16 %v1378, %v1346
        %v1579 = vpack.c.bf16 %v1379, %v1347
        %v1580 = vpack.c.bf16 %v1436, %v1404
        %v1581 = vpack.c.bf16 %v1437, %v1405
        %v1582 = vpack.c.bf16 %v1438, %v1406
        %v1583 = vpack.c.bf16 %v1439, %v1407
        %v1584 = vpack.c.bf16 %v1440, %v1408
        %v1585 = vpack.c.bf16 %v1441, %v1409
        %v1586 = vpack.c.bf16 %v1442, %v1410
        %v1587 = vpack.c.bf16 %v1443, %v1411
        %v1588 = vpack.c.bf16 %v1468, %v1308
        %v1589 = vpack.c.bf16 %v1469, %v1309
        %v1590 = vpack.c.bf16 %v1470, %v1310
        %v1591 = vpack.c.bf16 %v1471, %v1311
        %v1592 = vpack.c.bf16 %v1472, %v1312
        %v1593 = vpack.c.bf16 %v1473, %v1313
        %v1594 = vpack.c.bf16 %v1474, %v1314
        %v1595 = vpack.c.bf16 %v1475, %v1315
        %v1596 = vpack.c.bf16 %v1532, %v1500
        %v1597 = vpack.c.bf16 %v1533, %v1501
        %v1598 = vpack.c.bf16 %v1534, %v1502
        %v1599 = vpack.c.bf16 %v1535, %v1503
        %v1600 = vpack.c.bf16 %v1536, %v1504
        %v1601 = vpack.c.bf16 %v1537, %v1505
        %v1602 = vpack.c.bf16 %v1538, %v1506
        %v1603 = vpack.c.bf16 %v1539, %v1507
        %v1604 = vpack.c.bf16 %v1564, %v1564
        %v1605 = vpack.c.bf16 %v1565, %v1565
        %v1606 = vpack.c.bf16 %v1566, %v1566
        %v1607 = vpack.c.bf16 %v1567, %v1567
        %v1608 = vpack.c.bf16 %v1568, %v1568
        %v1609 = vpack.c.bf16 %v1569, %v1569
        %v1610 = vpack.c.bf16 %v1570, %v1570
        %v1611 = vpack.c.bf16 %v1571, %v1571
        %s1612 = scalar_lea.vmem %s4, 4
        %v1613 = vld [vmem:[%s1612] sm:$0xf]
        %s1614 = scalar_lea.vmem %s5, 8
        %v1615 = vld [vmem:[%s1614] sm:$0xff]
        %1617 = vset.pattern.permute.xlu0 0
        %1618 = vperm.xlu0 %1617, %v1615
        %v1619 = vpop.permute.xlu0 %1618
        %v1622 = vsel %vm1151, %v1613, 0
        %v1625 = vsel %vm1155, %v1604, 0
        %v1628 = vsel %vm1155, %v1605, 0
        %v1631 = vsel %vm1155, %v1606, 0
        %v1634 = vsel %vm1155, %v1607, 0
        %v1637 = vsel %vm1155, %v1608, 0
        %v1640 = vsel %vm1155, %v1609, 0
        %v1643 = vsel %vm1155, %v1610, 0
        %v1646 = vsel %vm1155, %v1611, 0
        %1648 = vmatpush.bf16.msra.mxu0 0
        %1649 = vmatpush.bf16.msra.mxu0 0
        %1650 = vmatpush.bf16.msra.mxu0 0
        %1651 = vmatpush.bf16.msra.mxu0 %v1625
        %1652 = vmatpush.bf16.msra.mxu0 %v1596
        %1653 = vmatpush.bf16.msra.mxu0 %v1588
        %1654 = vmatpush.bf16.msra.mxu0 %v1580
        %1655 = vmatpush.bf16.msra.mxu0 %v1572
        %1656 = vmatmul.bf16.gmra.mxu0 %v1622
        %v1657 = vpop.f32.mrf.mxu0
        %v1658 = vadd.f32 %v1619, %v1657
        %v1659 = vpop.f32.mrf.mxu0
        %1660 = vdwg.mxu0
        %1661 = vmatpush.bf16.msra.mxu0 0
        %1662 = vmatpush.bf16.msra.mxu0 0
        %1663 = vmatpush.bf16.msra.mxu0 0
        %1664 = vmatpush.bf16.msra.mxu0 %v1628
        %1665 = vmatpush.bf16.msra.mxu0 %v1597
        %1666 = vmatpush.bf16.msra.mxu0 %v1589
        %1667 = vmatpush.bf16.msra.mxu0 %v1581
        %1668 = vmatpush.bf16.msra.mxu0 %v1573
        %1669 = vmatmul.bf16.gmra.mxu0 %v1622
        %v1670 = vpop.f32.mrf.mxu0
        %v1671 = vadd.f32 %v1619, %v1670
        %v1672 = vpop.f32.mrf.mxu0
        %1673 = vdwg.mxu0
        %1674 = vmatpush.bf16.msra.mxu0 0
        %1675 = vmatpush.bf16.msra.mxu0 0
        %1676 = vmatpush.bf16.msra.mxu0 0
        %1677 = vmatpush.bf16.msra.mxu0 %v1631
        %1678 = vmatpush.bf16.msra.mxu0 %v1598
        %1679 = vmatpush.bf16.msra.mxu0 %v1590
        %1680 = vmatpush.bf16.msra.mxu0 %v1582
        %1681 = vmatpush.bf16.msra.mxu0 %v1574
        %1682 = vmatmul.bf16.gmra.mxu0 %v1622
        %v1683 = vpop.f32.mrf.mxu0
        %v1684 = vadd.f32 %v1619, %v1683
        %v1685 = vpop.f32.mrf.mxu0
        %1686 = vdwg.mxu0
        %1687 = vmatpush.bf16.msra.mxu0 0
        %1688 = vmatpush.bf16.msra.mxu0 0
        %1689 = vmatpush.bf16.msra.mxu0 0
        %1690 = vmatpush.bf16.msra.mxu0 %v1634
        %1691 = vmatpush.bf16.msra.mxu0 %v1599
        %1692 = vmatpush.bf16.msra.mxu0 %v1591
        %1693 = vmatpush.bf16.msra.mxu0 %v1583
        %1694 = vmatpush.bf16.msra.mxu0 %v1575
        %1695 = vmatmul.bf16.gmra.mxu0 %v1622
        %v1696 = vpop.f32.mrf.mxu0
        %v1697 = vadd.f32 %v1619, %v1696
        %v1698 = vpop.f32.mrf.mxu0
        %1699 = vdwg.mxu0
        %1700 = vmatpush.bf16.msra.mxu0 0
        %1701 = vmatpush.bf16.msra.mxu0 0
        %1702 = vmatpush.bf16.msra.mxu0 0
        %1703 = vmatpush.bf16.msra.mxu0 %v1637
        %1704 = vmatpush.bf16.msra.mxu0 %v1600
        %1705 = vmatpush.bf16.msra.mxu0 %v1592
        %1706 = vmatpush.bf16.msra.mxu0 %v1584
        %1707 = vmatpush.bf16.msra.mxu0 %v1576
        %1708 = vmatmul.bf16.gmra.mxu0 %v1622
        %v1709 = vpop.f32.mrf.mxu0
        %v1710 = vadd.f32 %v1619, %v1709
        %v1711 = vpop.f32.mrf.mxu0
        %1712 = vdwg.mxu0
        %1713 = vmatpush.bf16.msra.mxu0 0
        %1714 = vmatpush.bf16.msra.mxu0 0
        %1715 = vmatpush.bf16.msra.mxu0 0
        %1716 = vmatpush.bf16.msra.mxu0 %v1640
        %1717 = vmatpush.bf16.msra.mxu0 %v1601
        %1718 = vmatpush.bf16.msra.mxu0 %v1593
        %1719 = vmatpush.bf16.msra.mxu0 %v1585
        %1720 = vmatpush.bf16.msra.mxu0 %v1577
        %1721 = vmatmul.bf16.gmra.mxu0 %v1622
        %v1722 = vpop.f32.mrf.mxu0
        %v1723 = vadd.f32 %v1619, %v1722
        %v1724 = vpop.f32.mrf.mxu0
        %1725 = vdwg.mxu0
        %1726 = vmatpush.bf16.msra.mxu0 0
        %1727 = vmatpush.bf16.msra.mxu0 0
        %1728 = vmatpush.bf16.msra.mxu0 0
        %1729 = vmatpush.bf16.msra.mxu0 %v1643
        %1730 = vmatpush.bf16.msra.mxu0 %v1602
        %1731 = vmatpush.bf16.msra.mxu0 %v1594
        %1732 = vmatpush.bf16.msra.mxu0 %v1586
        %1733 = vmatpush.bf16.msra.mxu0 %v1578
        %1734 = vmatmul.bf16.gmra.mxu0 %v1622
        %v1735 = vpop.f32.mrf.mxu0
        %v1736 = vadd.f32 %v1619, %v1735
        %v1737 = vpop.f32.mrf.mxu0
        %1738 = vdwg.mxu0
        %1739 = vmatpush.bf16.msra.mxu0 0
        %1740 = vmatpush.bf16.msra.mxu0 0
        %1741 = vmatpush.bf16.msra.mxu0 0
        %1742 = vmatpush.bf16.msra.mxu0 %v1646
        %1743 = vmatpush.bf16.msra.mxu0 %v1603
        %1744 = vmatpush.bf16.msra.mxu0 %v1595
        %1745 = vmatpush.bf16.msra.mxu0 %v1587
        %1746 = vmatpush.bf16.msra.mxu0 %v1579
        %1747 = vmatmul.bf16.gmra.mxu0 %v1622
        %v1748 = vpop.f32.mrf.mxu0
        %v1749 = vadd.f32 %v1619, %v1748
        %v1750 = vpop.f32.mrf.mxu0
        %1751 = vdwg.mxu0
        %v1752 = vmax.f32 %v1658, 0.0
        %v1753 = vmax.f32 %v1671, 0.0
        %v1754 = vmax.f32 %v1684, 0.0
        %v1755 = vmax.f32 %v1697, 0.0
        %v1756 = vmax.f32 %v1710, 0.0
        %v1757 = vmax.f32 %v1723, 0.0
        %v1758 = vmax.f32 %v1736, 0.0
        %v1759 = vmax.f32 %v1749, 0.0
        %s1760 = scalar_lea.vmem %s6, 32
        %v1761 = vld [vmem:[%s1760] sm:$0xf]
        %v1762 = vld [vmem:[%s1760 + $0x4] sm:$0xf]
        %v1763 = vld [vmem:[%s1760 + $0x8] sm:$0xf]
        %v1764 = vld [vmem:[%s1760 + $0xc] sm:$0xf]
        %v1765 = vld [vmem:[%s1760 + $0x10] sm:$0xf]
        %v1766 = vld [vmem:[%s1760 + $0x14] sm:$0xf]
        %v1767 = vld [vmem:[%s1760 + $0x18] sm:$0xf]
        %v1768 = vld [vmem:[%s1760 + $0x1c] sm:$0xf]
        %v1769 = vpack.c.bf16 %v1752, %v1752
        %v1770 = vpack.c.bf16 %v1753, %v1753
        %v1771 = vpack.c.bf16 %v1754, %v1754
        %v1772 = vpack.c.bf16 %v1755, %v1755
        %v1773 = vpack.c.bf16 %v1756, %v1756
        %v1774 = vpack.c.bf16 %v1757, %v1757
        %v1775 = vpack.c.bf16 %v1758, %v1758
        %v1776 = vpack.c.bf16 %v1759, %v1759
        %v1785 = vunpack.c.l.b16 %v1761
        %v1786 = vunpack.c.l.b16 %v1762
        %v1787 = vunpack.c.l.b16 %v1763
        %v1788 = vunpack.c.l.b16 %v1764
        %v1789 = vunpack.c.l.b16 %v1765
        %v1790 = vunpack.c.l.b16 %v1766
        %v1791 = vunpack.c.l.b16 %v1767
        %v1792 = vunpack.c.l.b16 %v1768
        %v1793 = vpack.c.b16 %v1786, %v1785
        %v1794 = vpack.c.b16 %v1788, %v1787
        %v1795 = vpack.c.b16 %v1790, %v1789
        %v1796 = vpack.c.b16 %v1792, %v1791
        %vm1797 = vcmask 64512
        %v1799 = vsel %vm1797, %v1793, 0
        %v1802 = vsel %vm1797, %v1794, 0
        %v1805 = vsel %vm1797, %v1795, 0
        %v1808 = vsel %vm1797, %v1796, 0
        %v1811 = vsel %vm1155, %v1769, 0
        %v1814 = vsel %vm1155, %v1770, 0
        %v1817 = vsel %vm1155, %v1771, 0
        %v1820 = vsel %vm1155, %v1772, 0
        %v1823 = vsel %vm1155, %v1773, 0
        %v1826 = vsel %vm1155, %v1774, 0
        %v1829 = vsel %vm1155, %v1775, 0
        %v1832 = vsel %vm1155, %v1776, 0
        %1834 = vmatpush.bf16.msra.mxu0 0
        %1835 = vmatpush.bf16.msra.mxu0 0
        %1836 = vmatpush.bf16.msra.mxu0 0
        %1837 = vmatpush.bf16.msra.mxu0 0
        %1838 = vmatpush.bf16.msra.mxu0 0
        %1839 = vmatpush.bf16.msra.mxu0 0
        %1840 = vmatpush.bf16.msra.mxu0 0
        %1841 = vmatpush.bf16.msra.mxu0 %v1811
        %1842 = vmatmul.bf16.gmra.mxu0 %v1799
        %v1843 = vpop.f32.mrf.mxu0
        %v1844 = vadd.f32 0.0, %v1843
        %v1845 = vpop.f32.mrf.mxu0
        %v1846 = vadd.f32 0.0, %v1845
        %1847 = vmatmul.bf16.gmra.mxu0 %v1802
        %v1848 = vpop.f32.mrf.mxu0
        %v1849 = vadd.f32 0.0, %v1848
        %v1850 = vpop.f32.mrf.mxu0
        %v1851 = vadd.f32 0.0, %v1850
        %1852 = vmatmul.bf16.gmra.mxu0 %v1805
        %v1853 = vpop.f32.mrf.mxu0
        %v1854 = vadd.f32 0.0, %v1853
        %v1855 = vpop.f32.mrf.mxu0
        %v1856 = vadd.f32 0.0, %v1855
        %1857 = vmatmul.bf16.gmra.mxu0 %v1808
        %v1858 = vpop.f32.mrf.mxu0
        %v1859 = vadd.f32 0.0, %v1858
        %v1860 = vpop.f32.mrf.mxu0
        %v1861 = vadd.f32 0.0, %v1860
        %1862 = vdwg.mxu0
        %1863 = vmatpush.bf16.msra.mxu0 0
        %1864 = vmatpush.bf16.msra.mxu0 0
        %1865 = vmatpush.bf16.msra.mxu0 0
        %1866 = vmatpush.bf16.msra.mxu0 0
        %1867 = vmatpush.bf16.msra.mxu0 0
        %1868 = vmatpush.bf16.msra.mxu0 0
        %1869 = vmatpush.bf16.msra.mxu0 0
        %1870 = vmatpush.bf16.msra.mxu0 %v1814
        %1871 = vmatmul.bf16.gmra.mxu0 %v1799
        %v1872 = vpop.f32.mrf.mxu0
        %v1873 = vadd.f32 0.0, %v1872
        %v1874 = vpop.f32.mrf.mxu0
        %v1875 = vadd.f32 0.0, %v1874
        %1876 = vmatmul.bf16.gmra.mxu0 %v1802
        %v1877 = vpop.f32.mrf.mxu0
        %v1878 = vadd.f32 0.0, %v1877
        %v1879 = vpop.f32.mrf.mxu0
        %v1880 = vadd.f32 0.0, %v1879
        %1881 = vmatmul.bf16.gmra.mxu0 %v1805
        %v1882 = vpop.f32.mrf.mxu0
        %v1883 = vadd.f32 0.0, %v1882
        %v1884 = vpop.f32.mrf.mxu0
        %v1885 = vadd.f32 0.0, %v1884
        %1886 = vmatmul.bf16.gmra.mxu0 %v1808
        %v1887 = vpop.f32.mrf.mxu0
        %v1888 = vadd.f32 0.0, %v1887
        %v1889 = vpop.f32.mrf.mxu0
        %v1890 = vadd.f32 0.0, %v1889
        %1891 = vdwg.mxu0
        %1892 = vmatpush.bf16.msra.mxu0 0
        %1893 = vmatpush.bf16.msra.mxu0 0
        %1894 = vmatpush.bf16.msra.mxu0 0
        %1895 = vmatpush.bf16.msra.mxu0 0
        %1896 = vmatpush.bf16.msra.mxu0 0
        %1897 = vmatpush.bf16.msra.mxu0 0
        %1898 = vmatpush.bf16.msra.mxu0 0
        %1899 = vmatpush.bf16.msra.mxu0 %v1817
        %1900 = vmatmul.bf16.gmra.mxu0 %v1799
        %v1901 = vpop.f32.mrf.mxu0
        %v1902 = vadd.f32 0.0, %v1901
        %v1903 = vpop.f32.mrf.mxu0
        %v1904 = vadd.f32 0.0, %v1903
        %1905 = vmatmul.bf16.gmra.mxu0 %v1802
        %v1906 = vpop.f32.mrf.mxu0
        %v1907 = vadd.f32 0.0, %v1906
        %v1908 = vpop.f32.mrf.mxu0
        %v1909 = vadd.f32 0.0, %v1908
        %1910 = vmatmul.bf16.gmra.mxu0 %v1805
        %v1911 = vpop.f32.mrf.mxu0
        %v1912 = vadd.f32 0.0, %v1911
        %v1913 = vpop.f32.mrf.mxu0
        %v1914 = vadd.f32 0.0, %v1913
        %1915 = vmatmul.bf16.gmra.mxu0 %v1808
        %v1916 = vpop.f32.mrf.mxu0
        %v1917 = vadd.f32 0.0, %v1916
        %v1918 = vpop.f32.mrf.mxu0
        %v1919 = vadd.f32 0.0, %v1918
        %1920 = vdwg.mxu0
        %1921 = vmatpush.bf16.msra.mxu0 0
        %1922 = vmatpush.bf16.msra.mxu0 0
        %1923 = vmatpush.bf16.msra.mxu0 0
        %1924 = vmatpush.bf16.msra.mxu0 0
        %1925 = vmatpush.bf16.msra.mxu0 0
        %1926 = vmatpush.bf16.msra.mxu0 0
        %1927 = vmatpush.bf16.msra.mxu0 0
        %1928 = vmatpush.bf16.msra.mxu0 %v1820
        %1929 = vmatmul.bf16.gmra.mxu0 %v1799
        %v1930 = vpop.f32.mrf.mxu0
        %v1931 = vadd.f32 0.0, %v1930
        %v1932 = vpop.f32.mrf.mxu0
        %v1933 = vadd.f32 0.0, %v1932
        %1934 = vmatmul.bf16.gmra.mxu0 %v1802
        %v1935 = vpop.f32.mrf.mxu0
        %v1936 = vadd.f32 0.0, %v1935
        %v1937 = vpop.f32.mrf.mxu0
        %v1938 = vadd.f32 0.0, %v1937
        %1939 = vmatmul.bf16.gmra.mxu0 %v1805
        %v1940 = vpop.f32.mrf.mxu0
        %v1941 = vadd.f32 0.0, %v1940
        %v1942 = vpop.f32.mrf.mxu0
        %v1943 = vadd.f32 0.0, %v1942
        %1944 = vmatmul.bf16.gmra.mxu0 %v1808
        %v1945 = vpop.f32.mrf.mxu0
        %v1946 = vadd.f32 0.0, %v1945
        %v1947 = vpop.f32.mrf.mxu0
        %v1948 = vadd.f32 0.0, %v1947
        %1949 = vdwg.mxu0
        %1950 = vmatpush.bf16.msra.mxu0 0
        %1951 = vmatpush.bf16.msra.mxu0 0
        %1952 = vmatpush.bf16.msra.mxu0 0
        %1953 = vmatpush.bf16.msra.mxu0 0
        %1954 = vmatpush.bf16.msra.mxu0 0
        %1955 = vmatpush.bf16.msra.mxu0 0
        %1956 = vmatpush.bf16.msra.mxu0 0
        %1957 = vmatpush.bf16.msra.mxu0 %v1823
        %1958 = vmatmul.bf16.gmra.mxu0 %v1799
        %v1959 = vpop.f32.mrf.mxu0
        %v1960 = vadd.f32 0.0, %v1959
        %v1961 = vpop.f32.mrf.mxu0
        %v1962 = vadd.f32 0.0, %v1961
        %1963 = vmatmul.bf16.gmra.mxu0 %v1802
        %v1964 = vpop.f32.mrf.mxu0
        %v1965 = vadd.f32 0.0, %v1964
        %v1966 = vpop.f32.mrf.mxu0
        %v1967 = vadd.f32 0.0, %v1966
        %1968 = vmatmul.bf16.gmra.mxu0 %v1805
        %v1969 = vpop.f32.mrf.mxu0
        %v1970 = vadd.f32 0.0, %v1969
        %v1971 = vpop.f32.mrf.mxu0
        %v1972 = vadd.f32 0.0, %v1971
        %1973 = vmatmul.bf16.gmra.mxu0 %v1808
        %v1974 = vpop.f32.mrf.mxu0
        %v1975 = vadd.f32 0.0, %v1974
        %v1976 = vpop.f32.mrf.mxu0
        %v1977 = vadd.f32 0.0, %v1976
        %1978 = vdwg.mxu0
        %1979 = vmatpush.bf16.msra.mxu0 0
        %1980 = vmatpush.bf16.msra.mxu0 0
        %1981 = vmatpush.bf16.msra.mxu0 0
        %1982 = vmatpush.bf16.msra.mxu0 0
        %1983 = vmatpush.bf16.msra.mxu0 0
        %1984 = vmatpush.bf16.msra.mxu0 0
        %1985 = vmatpush.bf16.msra.mxu0 0
        %1986 = vmatpush.bf16.msra.mxu0 %v1826
        %1987 = vmatmul.bf16.gmra.mxu0 %v1799
        %v1988 = vpop.f32.mrf.mxu0
        %v1989 = vadd.f32 0.0, %v1988
        %v1990 = vpop.f32.mrf.mxu0
        %v1991 = vadd.f32 0.0, %v1990
        %1992 = vmatmul.bf16.gmra.mxu0 %v1802
        %v1993 = vpop.f32.mrf.mxu0
        %v1994 = vadd.f32 0.0, %v1993
        %v1995 = vpop.f32.mrf.mxu0
        %v1996 = vadd.f32 0.0, %v1995
        %1997 = vmatmul.bf16.gmra.mxu0 %v1805
        %v1998 = vpop.f32.mrf.mxu0
        %v1999 = vadd.f32 0.0, %v1998
        %v2000 = vpop.f32.mrf.mxu0
        %v2001 = vadd.f32 0.0, %v2000
        %2002 = vmatmul.bf16.gmra.mxu0 %v1808
        %v2003 = vpop.f32.mrf.mxu0
        %v2004 = vadd.f32 0.0, %v2003
        %v2005 = vpop.f32.mrf.mxu0
        %v2006 = vadd.f32 0.0, %v2005
        %2007 = vdwg.mxu0
        %2008 = vmatpush.bf16.msra.mxu0 0
        %2009 = vmatpush.bf16.msra.mxu0 0
        %2010 = vmatpush.bf16.msra.mxu0 0
        %2011 = vmatpush.bf16.msra.mxu0 0
        %2012 = vmatpush.bf16.msra.mxu0 0
        %2013 = vmatpush.bf16.msra.mxu0 0
        %2014 = vmatpush.bf16.msra.mxu0 0
        %2015 = vmatpush.bf16.msra.mxu0 %v1829
        %2016 = vmatmul.bf16.gmra.mxu0 %v1799
        %v2017 = vpop.f32.mrf.mxu0
        %v2018 = vadd.f32 0.0, %v2017
        %v2019 = vpop.f32.mrf.mxu0
        %v2020 = vadd.f32 0.0, %v2019
        %2021 = vmatmul.bf16.gmra.mxu0 %v1802
        %v2022 = vpop.f32.mrf.mxu0
        %v2023 = vadd.f32 0.0, %v2022
        %v2024 = vpop.f32.mrf.mxu0
        %v2025 = vadd.f32 0.0, %v2024
        %2026 = vmatmul.bf16.gmra.mxu0 %v1805
        %v2027 = vpop.f32.mrf.mxu0
        %v2028 = vadd.f32 0.0, %v2027
        %v2029 = vpop.f32.mrf.mxu0
        %v2030 = vadd.f32 0.0, %v2029
        %2031 = vmatmul.bf16.gmra.mxu0 %v1808
        %v2032 = vpop.f32.mrf.mxu0
        %v2033 = vadd.f32 0.0, %v2032
        %v2034 = vpop.f32.mrf.mxu0
        %v2035 = vadd.f32 0.0, %v2034
        %2036 = vdwg.mxu0
        %2037 = vmatpush.bf16.msra.mxu0 0
        %2038 = vmatpush.bf16.msra.mxu0 0
        %2039 = vmatpush.bf16.msra.mxu0 0
        %2040 = vmatpush.bf16.msra.mxu0 0
        %2041 = vmatpush.bf16.msra.mxu0 0
        %2042 = vmatpush.bf16.msra.mxu0 0
        %2043 = vmatpush.bf16.msra.mxu0 0
        %2044 = vmatpush.bf16.msra.mxu0 %v1832
        %2045 = vmatmul.bf16.gmra.mxu0 %v1799
        %v2046 = vpop.f32.mrf.mxu0
        %v2047 = vadd.f32 0.0, %v2046
        %v2048 = vpop.f32.mrf.mxu0
        %v2049 = vadd.f32 0.0, %v2048
        %2050 = vmatmul.bf16.gmra.mxu0 %v1802
        %v2051 = vpop.f32.mrf.mxu0
        %v2052 = vadd.f32 0.0, %v2051
        %v2053 = vpop.f32.mrf.mxu0
        %v2054 = vadd.f32 0.0, %v2053
        %2055 = vmatmul.bf16.gmra.mxu0 %v1805
        %v2056 = vpop.f32.mrf.mxu0
        %v2057 = vadd.f32 0.0, %v2056
        %v2058 = vpop.f32.mrf.mxu0
        %v2059 = vadd.f32 0.0, %v2058
        %2060 = vmatmul.bf16.gmra.mxu0 %v1808
        %v2061 = vpop.f32.mrf.mxu0
        %v2062 = vadd.f32 0.0, %v2061
        %v2063 = vpop.f32.mrf.mxu0
        %v2064 = vadd.f32 0.0, %v2063
        %2065 = vdwg.mxu0
        %v2074 = vunpack.c.l.b16 %v1292
        %v2075 = vunpack.c.l.b16 %v1293
        %v2076 = vunpack.c.l.b16 %v1294
        %v2077 = vunpack.c.l.b16 %v1295
        %v2078 = vunpack.c.l.b16 %v1296
        %v2079 = vunpack.c.l.b16 %v1297
        %v2080 = vunpack.c.l.b16 %v1298
        %v2081 = vunpack.c.l.b16 %v1299
        %v2082 = vpack.c.b16 %v2075, %v2074
        %v2083 = vpack.c.b16 %v2077, %v2076
        %v2084 = vpack.c.b16 %v2079, %v2078
        %v2085 = vpack.c.b16 %v2081, %v2080
        %v2087 = vsel %vm1797, %v2082, 0
        %v2090 = vsel %vm1797, %v2083, 0
        %v2093 = vsel %vm1797, %v2084, 0
        %v2096 = vsel %vm1797, %v2085, 0
        %v2099 = vsel %vm1155, %v1300, 0
        %v2102 = vsel %vm1155, %v1301, 0
        %v2105 = vsel %vm1155, %v1302, 0
        %v2108 = vsel %vm1155, %v1303, 0
        %v2111 = vsel %vm1155, %v1304, 0
        %v2114 = vsel %vm1155, %v1305, 0
        %v2117 = vsel %vm1155, %v1306, 0
        %v2120 = vsel %vm1155, %v1307, 0
        %2122 = vmatpush.bf16.msra.mxu0 0
        %2123 = vmatpush.bf16.msra.mxu0 0
        %2124 = vmatpush.bf16.msra.mxu0 0
        %2125 = vmatpush.bf16.msra.mxu0 0
        %2126 = vmatpush.bf16.msra.mxu0 0
        %2127 = vmatpush.bf16.msra.mxu0 0
        %2128 = vmatpush.bf16.msra.mxu0 0
        %2129 = vmatpush.bf16.msra.mxu0 %v2099
        %2130 = vmatmul.bf16.gmra.mxu0 %v2087
        %v2131 = vpop.f32.mrf.mxu0
        %v2132 = vadd.f32 %v1844, %v2131
        %v2133 = vpop.f32.mrf.mxu0
        %v2134 = vadd.f32 %v1846, %v2133
        %2135 = vmatmul.bf16.gmra.mxu0 %v2090
        %v2136 = vpop.f32.mrf.mxu0
        %v2137 = vadd.f32 %v1849, %v2136
        %v2138 = vpop.f32.mrf.mxu0
        %v2139 = vadd.f32 %v1851, %v2138
        %2140 = vmatmul.bf16.gmra.mxu0 %v2093
        %v2141 = vpop.f32.mrf.mxu0
        %v2142 = vadd.f32 %v1854, %v2141
        %v2143 = vpop.f32.mrf.mxu0
        %v2144 = vadd.f32 %v1856, %v2143
        %2145 = vmatmul.bf16.gmra.mxu0 %v2096
        %v2146 = vpop.f32.mrf.mxu0
        %v2147 = vadd.f32 %v1859, %v2146
        %v2148 = vpop.f32.mrf.mxu0
        %v2149 = vadd.f32 %v1861, %v2148
        %2150 = vdwg.mxu0
        %2151 = vmatpush.bf16.msra.mxu0 0
        %2152 = vmatpush.bf16.msra.mxu0 0
        %2153 = vmatpush.bf16.msra.mxu0 0
        %2154 = vmatpush.bf16.msra.mxu0 0
        %2155 = vmatpush.bf16.msra.mxu0 0
        %2156 = vmatpush.bf16.msra.mxu0 0
        %2157 = vmatpush.bf16.msra.mxu0 0
        %2158 = vmatpush.bf16.msra.mxu0 %v2102
        %2159 = vmatmul.bf16.gmra.mxu0 %v2087
        %v2160 = vpop.f32.mrf.mxu0
        %v2161 = vadd.f32 %v1873, %v2160
        %v2162 = vpop.f32.mrf.mxu0
        %v2163 = vadd.f32 %v1875, %v2162
        %2164 = vmatmul.bf16.gmra.mxu0 %v2090
        %v2165 = vpop.f32.mrf.mxu0
        %v2166 = vadd.f32 %v1878, %v2165
        %v2167 = vpop.f32.mrf.mxu0
        %v2168 = vadd.f32 %v1880, %v2167
        %2169 = vmatmul.bf16.gmra.mxu0 %v2093
        %v2170 = vpop.f32.mrf.mxu0
        %v2171 = vadd.f32 %v1883, %v2170
        %v2172 = vpop.f32.mrf.mxu0
        %v2173 = vadd.f32 %v1885, %v2172
        %2174 = vmatmul.bf16.gmra.mxu0 %v2096
        %v2175 = vpop.f32.mrf.mxu0
        %v2176 = vadd.f32 %v1888, %v2175
        %v2177 = vpop.f32.mrf.mxu0
        %v2178 = vadd.f32 %v1890, %v2177
        %2179 = vdwg.mxu0
        %2180 = vmatpush.bf16.msra.mxu0 0
        %2181 = vmatpush.bf16.msra.mxu0 0
        %2182 = vmatpush.bf16.msra.mxu0 0
        %2183 = vmatpush.bf16.msra.mxu0 0
        %2184 = vmatpush.bf16.msra.mxu0 0
        %2185 = vmatpush.bf16.msra.mxu0 0
        %2186 = vmatpush.bf16.msra.mxu0 0
        %2187 = vmatpush.bf16.msra.mxu0 %v2105
        %2188 = vmatmul.bf16.gmra.mxu0 %v2087
        %v2189 = vpop.f32.mrf.mxu0
        %v2190 = vadd.f32 %v1902, %v2189
        %v2191 = vpop.f32.mrf.mxu0
        %v2192 = vadd.f32 %v1904, %v2191
        %2193 = vmatmul.bf16.gmra.mxu0 %v2090
        %v2194 = vpop.f32.mrf.mxu0
        %v2195 = vadd.f32 %v1907, %v2194
        %v2196 = vpop.f32.mrf.mxu0
        %v2197 = vadd.f32 %v1909, %v2196
        %2198 = vmatmul.bf16.gmra.mxu0 %v2093
        %v2199 = vpop.f32.mrf.mxu0
        %v2200 = vadd.f32 %v1912, %v2199
        %v2201 = vpop.f32.mrf.mxu0
        %v2202 = vadd.f32 %v1914, %v2201
        %2203 = vmatmul.bf16.gmra.mxu0 %v2096
        %v2204 = vpop.f32.mrf.mxu0
        %v2205 = vadd.f32 %v1917, %v2204
        %v2206 = vpop.f32.mrf.mxu0
        %v2207 = vadd.f32 %v1919, %v2206
        %2208 = vdwg.mxu0
        %2209 = vmatpush.bf16.msra.mxu0 0
        %2210 = vmatpush.bf16.msra.mxu0 0
        %2211 = vmatpush.bf16.msra.mxu0 0
        %2212 = vmatpush.bf16.msra.mxu0 0
        %2213 = vmatpush.bf16.msra.mxu0 0
        %2214 = vmatpush.bf16.msra.mxu0 0
        %2215 = vmatpush.bf16.msra.mxu0 0
        %2216 = vmatpush.bf16.msra.mxu0 %v2108
        %2217 = vmatmul.bf16.gmra.mxu0 %v2087
        %v2218 = vpop.f32.mrf.mxu0
        %v2219 = vadd.f32 %v1931, %v2218
        %v2220 = vpop.f32.mrf.mxu0
        %v2221 = vadd.f32 %v1933, %v2220
        %2222 = vmatmul.bf16.gmra.mxu0 %v2090
        %v2223 = vpop.f32.mrf.mxu0
        %v2224 = vadd.f32 %v1936, %v2223
        %v2225 = vpop.f32.mrf.mxu0
        %v2226 = vadd.f32 %v1938, %v2225
        %2227 = vmatmul.bf16.gmra.mxu0 %v2093
        %v2228 = vpop.f32.mrf.mxu0
        %v2229 = vadd.f32 %v1941, %v2228
        %v2230 = vpop.f32.mrf.mxu0
        %v2231 = vadd.f32 %v1943, %v2230
        %2232 = vmatmul.bf16.gmra.mxu0 %v2096
        %v2233 = vpop.f32.mrf.mxu0
        %v2234 = vadd.f32 %v1946, %v2233
        %v2235 = vpop.f32.mrf.mxu0
        %v2236 = vadd.f32 %v1948, %v2235
        %2237 = vdwg.mxu0
        %2238 = vmatpush.bf16.msra.mxu0 0
        %2239 = vmatpush.bf16.msra.mxu0 0
        %2240 = vmatpush.bf16.msra.mxu0 0
        %2241 = vmatpush.bf16.msra.mxu0 0
        %2242 = vmatpush.bf16.msra.mxu0 0
        %2243 = vmatpush.bf16.msra.mxu0 0
        %2244 = vmatpush.bf16.msra.mxu0 0
        %2245 = vmatpush.bf16.msra.mxu0 %v2111
        %2246 = vmatmul.bf16.gmra.mxu0 %v2087
        %v2247 = vpop.f32.mrf.mxu0
        %v2248 = vadd.f32 %v1960, %v2247
        %v2249 = vpop.f32.mrf.mxu0
        %v2250 = vadd.f32 %v1962, %v2249
        %2251 = vmatmul.bf16.gmra.mxu0 %v2090
        %v2252 = vpop.f32.mrf.mxu0
        %v2253 = vadd.f32 %v1965, %v2252
        %v2254 = vpop.f32.mrf.mxu0
        %v2255 = vadd.f32 %v1967, %v2254
        %2256 = vmatmul.bf16.gmra.mxu0 %v2093
        %v2257 = vpop.f32.mrf.mxu0
        %v2258 = vadd.f32 %v1970, %v2257
        %v2259 = vpop.f32.mrf.mxu0
        %v2260 = vadd.f32 %v1972, %v2259
        %2261 = vmatmul.bf16.gmra.mxu0 %v2096
        %v2262 = vpop.f32.mrf.mxu0
        %v2263 = vadd.f32 %v1975, %v2262
        %v2264 = vpop.f32.mrf.mxu0
        %v2265 = vadd.f32 %v1977, %v2264
        %2266 = vdwg.mxu0
        %2267 = vmatpush.bf16.msra.mxu0 0
        %2268 = vmatpush.bf16.msra.mxu0 0
        %2269 = vmatpush.bf16.msra.mxu0 0
        %2270 = vmatpush.bf16.msra.mxu0 0
        %2271 = vmatpush.bf16.msra.mxu0 0
        %2272 = vmatpush.bf16.msra.mxu0 0
        %2273 = vmatpush.bf16.msra.mxu0 0
        %2274 = vmatpush.bf16.msra.mxu0 %v2114
        %2275 = vmatmul.bf16.gmra.mxu0 %v2087
        %v2276 = vpop.f32.mrf.mxu0
        %v2277 = vadd.f32 %v1989, %v2276
        %v2278 = vpop.f32.mrf.mxu0
        %v2279 = vadd.f32 %v1991, %v2278
        %2280 = vmatmul.bf16.gmra.mxu0 %v2090
        %v2281 = vpop.f32.mrf.mxu0
        %v2282 = vadd.f32 %v1994, %v2281
        %v2283 = vpop.f32.mrf.mxu0
        %v2284 = vadd.f32 %v1996, %v2283
        %2285 = vmatmul.bf16.gmra.mxu0 %v2093
        %v2286 = vpop.f32.mrf.mxu0
        %v2287 = vadd.f32 %v1999, %v2286
        %v2288 = vpop.f32.mrf.mxu0
        %v2289 = vadd.f32 %v2001, %v2288
        %2290 = vmatmul.bf16.gmra.mxu0 %v2096
        %v2291 = vpop.f32.mrf.mxu0
        %v2292 = vadd.f32 %v2004, %v2291
        %v2293 = vpop.f32.mrf.mxu0
        %v2294 = vadd.f32 %v2006, %v2293
        %2295 = vdwg.mxu0
        %2296 = vmatpush.bf16.msra.mxu0 0
        %2297 = vmatpush.bf16.msra.mxu0 0
        %2298 = vmatpush.bf16.msra.mxu0 0
        %2299 = vmatpush.bf16.msra.mxu0 0
        %2300 = vmatpush.bf16.msra.mxu0 0
        %2301 = vmatpush.bf16.msra.mxu0 0
        %2302 = vmatpush.bf16.msra.mxu0 0
        %2303 = vmatpush.bf16.msra.mxu0 %v2117
        %2304 = vmatmul.bf16.gmra.mxu0 %v2087
        %v2305 = vpop.f32.mrf.mxu0
        %v2306 = vadd.f32 %v2018, %v2305
        %v2307 = vpop.f32.mrf.mxu0
        %v2308 = vadd.f32 %v2020, %v2307
        %2309 = vmatmul.bf16.gmra.mxu0 %v2090
        %v2310 = vpop.f32.mrf.mxu0
        %v2311 = vadd.f32 %v2023, %v2310
        %v2312 = vpop.f32.mrf.mxu0
        %v2313 = vadd.f32 %v2025, %v2312
        %2314 = vmatmul.bf16.gmra.mxu0 %v2093
        %v2315 = vpop.f32.mrf.mxu0
        %v2316 = vadd.f32 %v2028, %v2315
        %v2317 = vpop.f32.mrf.mxu0
        %v2318 = vadd.f32 %v2030, %v2317
        %2319 = vmatmul.bf16.gmra.mxu0 %v2096
        %v2320 = vpop.f32.mrf.mxu0
        %v2321 = vadd.f32 %v2033, %v2320
        %v2322 = vpop.f32.mrf.mxu0
        %v2323 = vadd.f32 %v2035, %v2322
        %2324 = vdwg.mxu0
        %2325 = vmatpush.bf16.msra.mxu0 0
        %2326 = vmatpush.bf16.msra.mxu0 0
        %2327 = vmatpush.bf16.msra.mxu0 0
        %2328 = vmatpush.bf16.msra.mxu0 0
        %2329 = vmatpush.bf16.msra.mxu0 0
        %2330 = vmatpush.bf16.msra.mxu0 0
        %2331 = vmatpush.bf16.msra.mxu0 0
        %2332 = vmatpush.bf16.msra.mxu0 %v2120
        %2333 = vmatmul.bf16.gmra.mxu0 %v2087
        %v2334 = vpop.f32.mrf.mxu0
        %v2335 = vadd.f32 %v2047, %v2334
        %v2336 = vpop.f32.mrf.mxu0
        %v2337 = vadd.f32 %v2049, %v2336
        %2338 = vmatmul.bf16.gmra.mxu0 %v2090
        %v2339 = vpop.f32.mrf.mxu0
        %v2340 = vadd.f32 %v2052, %v2339
        %v2341 = vpop.f32.mrf.mxu0
        %v2342 = vadd.f32 %v2054, %v2341
        %2343 = vmatmul.bf16.gmra.mxu0 %v2093
        %v2344 = vpop.f32.mrf.mxu0
        %v2345 = vadd.f32 %v2057, %v2344
        %v2346 = vpop.f32.mrf.mxu0
        %v2347 = vadd.f32 %v2059, %v2346
        %2348 = vmatmul.bf16.gmra.mxu0 %v2096
        %v2349 = vpop.f32.mrf.mxu0
        %v2350 = vadd.f32 %v2062, %v2349
        %v2351 = vpop.f32.mrf.mxu0
        %v2352 = vadd.f32 %v2064, %v2351
        %2353 = vdwg.mxu0
        %v2354 = vadd.f32 %v1752, %v751
        %v2355 = vadd.f32 %v1753, %v752
        %v2356 = vadd.f32 %v1754, %v753
        %v2357 = vadd.f32 %v1755, %v754
        %v2358 = vadd.f32 %v1756, %v755
        %v2359 = vadd.f32 %v1757, %v756
        %v2360 = vadd.f32 %v1758, %v757
        %v2361 = vadd.f32 %v1759, %v758
        %2362 = vrot.lane.b32.xlu0 %v2354, 17
        %v2363 = vpop.permute.xlu0 %2362
        %2364 = vrot.lane.b32.xlu0 %v2355, 17
        %v2365 = vpop.permute.xlu0 %2364
        %2366 = vrot.lane.b32.xlu0 %v2356, 17
        %v2367 = vpop.permute.xlu0 %2366
        %2368 = vrot.lane.b32.xlu0 %v2357, 17
        %v2369 = vpop.permute.xlu0 %2368
        %2370 = vrot.lane.b32.xlu0 %v2358, 17
        %v2371 = vpop.permute.xlu0 %2370
        %2372 = vrot.lane.b32.xlu0 %v2359, 17
        %v2373 = vpop.permute.xlu0 %2372
        %2374 = vrot.lane.b32.xlu0 %v2360, 17
        %v2375 = vpop.permute.xlu0 %2374
        %2376 = vrot.lane.b32.xlu0 %v2361, 17
        %v2377 = vpop.permute.xlu0 %2376
        %v2378 = vsel %vm785, %v2375, %v2377
        %v2379 = vsel %vm785, %v2373, %v2375
        %v2380 = vsel %vm785, %v2371, %v2373
        %v2381 = vsel %vm785, %v2369, %v2371
        %v2382 = vsel %vm785, %v2367, %v2369
        %v2383 = vsel %vm785, %v2365, %v2367
        %v2384 = vsel %vm785, %v2363, %v2365
        %v2385 = vsel %vm785, %v2377, %v2363
        %v2386 = vmul.f32 %v2385, %v794
        %v2387 = vmul.f32 %v2384, %v795
        %v2388 = vmul.f32 %v2383, %v796
        %v2389 = vmul.f32 %v2382, %v797
        %v2390 = vmul.f32 %v2381, %v798
        %v2391 = vmul.f32 %v2380, %v799
        %v2392 = vmul.f32 %v2379, %v800
        %v2393 = vmul.f32 %v2378, %v801
        %2394 = vrot.lane.b32.xlu0 %v2354, 16
        %v2395 = vpop.permute.xlu0 %2394
        %2396 = vrot.lane.b32.xlu0 %v2355, 16
        %v2397 = vpop.permute.xlu0 %2396
        %2398 = vrot.lane.b32.xlu0 %v2356, 16
        %v2399 = vpop.permute.xlu0 %2398
        %2400 = vrot.lane.b32.xlu0 %v2357, 16
        %v2401 = vpop.permute.xlu0 %2400
        %2402 = vrot.lane.b32.xlu0 %v2358, 16
        %v2403 = vpop.permute.xlu0 %2402
        %2404 = vrot.lane.b32.xlu0 %v2359, 16
        %v2405 = vpop.permute.xlu0 %2404
        %2406 = vrot.lane.b32.xlu0 %v2360, 16
        %v2407 = vpop.permute.xlu0 %2406
        %2408 = vrot.lane.b32.xlu0 %v2361, 16
        %v2409 = vpop.permute.xlu0 %2408
        %v2410 = vsel %vm826, %v2407, %v2409
        %v2411 = vsel %vm826, %v2405, %v2407
        %v2412 = vsel %vm826, %v2403, %v2405
        %v2413 = vsel %vm826, %v2401, %v2403
        %v2414 = vsel %vm826, %v2399, %v2401
        %v2415 = vsel %vm826, %v2397, %v2399
        %v2416 = vsel %vm826, %v2395, %v2397
        %v2417 = vsel %vm826, %v2409, %v2395
        %v2418 = vmul.f32 %v2417, %v836
        %v2419 = vmul.f32 %v2416, %v837
        %v2420 = vmul.f32 %v2415, %v838
        %v2421 = vmul.f32 %v2414, %v839
        %v2422 = vmul.f32 %v2413, %v840
        %v2423 = vmul.f32 %v2412, %v841
        %v2424 = vmul.f32 %v2411, %v842
        %v2425 = vmul.f32 %v2410, %v843
        %2426 = vrot.lane.b32.xlu0 %v2354, 15
        %v2427 = vpop.permute.xlu0 %2426
        %2428 = vrot.lane.b32.xlu0 %v2355, 15
        %v2429 = vpop.permute.xlu0 %2428
        %2430 = vrot.lane.b32.xlu0 %v2356, 15
        %v2431 = vpop.permute.xlu0 %2430
        %2432 = vrot.lane.b32.xlu0 %v2357, 15
        %v2433 = vpop.permute.xlu0 %2432
        %2434 = vrot.lane.b32.xlu0 %v2358, 15
        %v2435 = vpop.permute.xlu0 %2434
        %2436 = vrot.lane.b32.xlu0 %v2359, 15
        %v2437 = vpop.permute.xlu0 %2436
        %2438 = vrot.lane.b32.xlu0 %v2360, 15
        %v2439 = vpop.permute.xlu0 %2438
        %2440 = vrot.lane.b32.xlu0 %v2361, 15
        %v2441 = vpop.permute.xlu0 %2440
        %v2442 = vsel %vm868, %v2439, %v2441
        %v2443 = vsel %vm868, %v2437, %v2439
        %v2444 = vsel %vm868, %v2435, %v2437
        %v2445 = vsel %vm868, %v2433, %v2435
        %v2446 = vsel %vm868, %v2431, %v2433
        %v2447 = vsel %vm868, %v2429, %v2431
        %v2448 = vsel %vm868, %v2427, %v2429
        %v2449 = vsel %vm868, %v2441, %v2427
        %v2450 = vmul.f32 %v2449, %v878
        %v2451 = vmul.f32 %v2448, %v879
        %v2452 = vmul.f32 %v2447, %v880
        %v2453 = vmul.f32 %v2446, %v881
        %v2454 = vmul.f32 %v2445, %v882
        %v2455 = vmul.f32 %v2444, %v883
        %v2456 = vmul.f32 %v2443, %v884
        %v2457 = vmul.f32 %v2442, %v885
        %2458 = vrot.lane.b32.xlu0 %v2354, 1
        %v2459 = vpop.permute.xlu0 %2458
        %2460 = vrot.lane.b32.xlu0 %v2355, 1
        %v2461 = vpop.permute.xlu0 %2460
        %2462 = vrot.lane.b32.xlu0 %v2356, 1
        %v2463 = vpop.permute.xlu0 %2462
        %2464 = vrot.lane.b32.xlu0 %v2357, 1
        %v2465 = vpop.permute.xlu0 %2464
        %2466 = vrot.lane.b32.xlu0 %v2358, 1
        %v2467 = vpop.permute.xlu0 %2466
        %2468 = vrot.lane.b32.xlu0 %v2359, 1
        %v2469 = vpop.permute.xlu0 %2468
        %2470 = vrot.lane.b32.xlu0 %v2360, 1
        %v2471 = vpop.permute.xlu0 %2470
        %2472 = vrot.lane.b32.xlu0 %v2361, 1
        %v2473 = vpop.permute.xlu0 %2472
        %v2474 = vsel %vm910, %v2471, %v2473
        %v2475 = vsel %vm910, %v2469, %v2471
        %v2476 = vsel %vm910, %v2467, %v2469
        %v2477 = vsel %vm910, %v2465, %v2467
        %v2478 = vsel %vm910, %v2463, %v2465
        %v2479 = vsel %vm910, %v2461, %v2463
        %v2480 = vsel %vm910, %v2459, %v2461
        %v2481 = vsel %vm910, %v2473, %v2459
        %v2482 = vmul.f32 %v2481, %v920
        %v2483 = vmul.f32 %v2480, %v921
        %v2484 = vmul.f32 %v2479, %v922
        %v2485 = vmul.f32 %v2478, %v923
        %v2486 = vmul.f32 %v2477, %v924
        %v2487 = vmul.f32 %v2476, %v925
        %v2488 = vmul.f32 %v2475, %v926
        %v2489 = vmul.f32 %v2474, %v927
        %2490 = vrot.lane.b32.xlu0 %v2354, 127
        %v2491 = vpop.permute.xlu0 %2490
        %2492 = vrot.lane.b32.xlu0 %v2355, 127
        %v2493 = vpop.permute.xlu0 %2492
        %2494 = vrot.lane.b32.xlu0 %v2356, 127
        %v2495 = vpop.permute.xlu0 %2494
        %2496 = vrot.lane.b32.xlu0 %v2357, 127
        %v2497 = vpop.permute.xlu0 %2496
        %2498 = vrot.lane.b32.xlu0 %v2358, 127
        %v2499 = vpop.permute.xlu0 %2498
        %2500 = vrot.lane.b32.xlu0 %v2359, 127
        %v2501 = vpop.permute.xlu0 %2500
        %2502 = vrot.lane.b32.xlu0 %v2360, 127
        %v2503 = vpop.permute.xlu0 %2502
        %2504 = vrot.lane.b32.xlu0 %v2361, 127
        %v2505 = vpop.permute.xlu0 %2504
        %v2506 = vsel %vm952, %v2503, %v2505
        %v2507 = vsel %vm952, %v2501, %v2503
        %v2508 = vsel %vm952, %v2499, %v2501
        %v2509 = vsel %vm952, %v2497, %v2499
        %v2510 = vsel %vm952, %v2495, %v2497
        %v2511 = vsel %vm952, %v2493, %v2495
        %v2512 = vsel %vm952, %v2491, %v2493
        %v2513 = vsel %vm952, %v2505, %v2491
        %v2514 = vmul.f32 %v2512, %v962
        %v2515 = vmul.f32 %v2511, %v963
        %v2516 = vmul.f32 %v2510, %v964
        %v2517 = vmul.f32 %v2509, %v965
        %v2518 = vmul.f32 %v2508, %v966
        %v2519 = vmul.f32 %v2507, %v967
        %v2520 = vmul.f32 %v2506, %v968
        %v2521 = vmul.f32 %v2513, %v969
        %2522 = vrot.lane.b32.xlu0 %v2354, 113
        %v2523 = vpop.permute.xlu0 %2522
        %2524 = vrot.lane.b32.xlu0 %v2355, 113
        %v2525 = vpop.permute.xlu0 %2524
        %2526 = vrot.lane.b32.xlu0 %v2356, 113
        %v2527 = vpop.permute.xlu0 %2526
        %2528 = vrot.lane.b32.xlu0 %v2357, 113
        %v2529 = vpop.permute.xlu0 %2528
        %2530 = vrot.lane.b32.xlu0 %v2358, 113
        %v2531 = vpop.permute.xlu0 %2530
        %2532 = vrot.lane.b32.xlu0 %v2359, 113
        %v2533 = vpop.permute.xlu0 %2532
        %2534 = vrot.lane.b32.xlu0 %v2360, 113
        %v2535 = vpop.permute.xlu0 %2534
        %2536 = vrot.lane.b32.xlu0 %v2361, 113
        %v2537 = vpop.permute.xlu0 %2536
        %v2538 = vsel %vm994, %v2535, %v2537
        %v2539 = vsel %vm994, %v2533, %v2535
        %v2540 = vsel %vm994, %v2531, %v2533
        %v2541 = vsel %vm994, %v2529, %v2531
        %v2542 = vsel %vm994, %v2527, %v2529
        %v2543 = vsel %vm994, %v2525, %v2527
        %v2544 = vsel %vm994, %v2523, %v2525
        %v2545 = vsel %vm994, %v2537, %v2523
        %v2546 = vmul.f32 %v2544, %v1004
        %v2547 = vmul.f32 %v2543, %v1005
        %v2548 = vmul.f32 %v2542, %v1006
        %v2549 = vmul.f32 %v2541, %v1007
        %v2550 = vmul.f32 %v2540, %v1008
        %v2551 = vmul.f32 %v2539, %v1009
        %v2552 = vmul.f32 %v2538, %v1010
        %v2553 = vmul.f32 %v2545, %v1011
        %2554 = vrot.lane.b32.xlu0 %v2354, 112
        %v2555 = vpop.permute.xlu0 %2554
        %2556 = vrot.lane.b32.xlu0 %v2355, 112
        %v2557 = vpop.permute.xlu0 %2556
        %2558 = vrot.lane.b32.xlu0 %v2356, 112
        %v2559 = vpop.permute.xlu0 %2558
        %2560 = vrot.lane.b32.xlu0 %v2357, 112
        %v2561 = vpop.permute.xlu0 %2560
        %2562 = vrot.lane.b32.xlu0 %v2358, 112
        %v2563 = vpop.permute.xlu0 %2562
        %2564 = vrot.lane.b32.xlu0 %v2359, 112
        %v2565 = vpop.permute.xlu0 %2564
        %2566 = vrot.lane.b32.xlu0 %v2360, 112
        %v2567 = vpop.permute.xlu0 %2566
        %2568 = vrot.lane.b32.xlu0 %v2361, 112
        %v2569 = vpop.permute.xlu0 %2568
        %v2570 = vsel %vm1036, %v2567, %v2569
        %v2571 = vsel %vm1036, %v2565, %v2567
        %v2572 = vsel %vm1036, %v2563, %v2565
        %v2573 = vsel %vm1036, %v2561, %v2563
        %v2574 = vsel %vm1036, %v2559, %v2561
        %v2575 = vsel %vm1036, %v2557, %v2559
        %v2576 = vsel %vm1036, %v2555, %v2557
        %v2577 = vsel %vm1036, %v2569, %v2555
        %v2578 = vmul.f32 %v2576, %v1046
        %v2579 = vmul.f32 %v2575, %v1047
        %v2580 = vmul.f32 %v2574, %v1048
        %v2581 = vmul.f32 %v2573, %v1049
        %v2582 = vmul.f32 %v2572, %v1050
        %v2583 = vmul.f32 %v2571, %v1051
        %v2584 = vmul.f32 %v2570, %v1052
        %v2585 = vmul.f32 %v2577, %v1053
        %2586 = vrot.lane.b32.xlu0 %v2354, 111
        %v2587 = vpop.permute.xlu0 %2586
        %2588 = vrot.lane.b32.xlu0 %v2355, 111
        %v2589 = vpop.permute.xlu0 %2588
        %2590 = vrot.lane.b32.xlu0 %v2356, 111
        %v2591 = vpop.permute.xlu0 %2590
        %2592 = vrot.lane.b32.xlu0 %v2357, 111
        %v2593 = vpop.permute.xlu0 %2592
        %2594 = vrot.lane.b32.xlu0 %v2358, 111
        %v2595 = vpop.permute.xlu0 %2594
        %2596 = vrot.lane.b32.xlu0 %v2359, 111
        %v2597 = vpop.permute.xlu0 %2596
        %2598 = vrot.lane.b32.xlu0 %v2360, 111
        %v2599 = vpop.permute.xlu0 %2598
        %2600 = vrot.lane.b32.xlu0 %v2361, 111
        %v2601 = vpop.permute.xlu0 %2600
        %v2602 = vsel %vm1078, %v2599, %v2601
        %v2603 = vsel %vm1078, %v2597, %v2599
        %v2604 = vsel %vm1078, %v2595, %v2597
        %v2605 = vsel %vm1078, %v2593, %v2595
        %v2606 = vsel %vm1078, %v2591, %v2593
        %v2607 = vsel %vm1078, %v2589, %v2591
        %v2608 = vsel %vm1078, %v2587, %v2589
        %v2609 = vsel %vm1078, %v2601, %v2587
        %v2610 = vmul.f32 %v2608, %v1088
        %v2611 = vmul.f32 %v2607, %v1089
        %v2612 = vmul.f32 %v2606, %v1090
        %v2613 = vmul.f32 %v2605, %v1091
        %v2614 = vmul.f32 %v2604, %v1092
        %v2615 = vmul.f32 %v2603, %v1093
        %v2616 = vmul.f32 %v2602, %v1094
        %v2617 = vmul.f32 %v2609, %v1095
        %v2618 = vpack.c.bf16 %v2418, %v2386
        %v2619 = vpack.c.bf16 %v2419, %v2387
        %v2620 = vpack.c.bf16 %v2420, %v2388
        %v2621 = vpack.c.bf16 %v2421, %v2389
        %v2622 = vpack.c.bf16 %v2422, %v2390
        %v2623 = vpack.c.bf16 %v2423, %v2391
        %v2624 = vpack.c.bf16 %v2424, %v2392
        %v2625 = vpack.c.bf16 %v2425, %v2393
        %v2626 = vpack.c.bf16 %v2482, %v2450
        %v2627 = vpack.c.bf16 %v2483, %v2451
        %v2628 = vpack.c.bf16 %v2484, %v2452
        %v2629 = vpack.c.bf16 %v2485, %v2453
        %v2630 = vpack.c.bf16 %v2486, %v2454
        %v2631 = vpack.c.bf16 %v2487, %v2455
        %v2632 = vpack.c.bf16 %v2488, %v2456
        %v2633 = vpack.c.bf16 %v2489, %v2457
        %v2634 = vpack.c.bf16 %v2514, %v2354
        %v2635 = vpack.c.bf16 %v2515, %v2355
        %v2636 = vpack.c.bf16 %v2516, %v2356
        %v2637 = vpack.c.bf16 %v2517, %v2357
        %v2638 = vpack.c.bf16 %v2518, %v2358
        %v2639 = vpack.c.bf16 %v2519, %v2359
        %v2640 = vpack.c.bf16 %v2520, %v2360
        %v2641 = vpack.c.bf16 %v2521, %v2361
        %v2642 = vpack.c.bf16 %v2578, %v2546
        %v2643 = vpack.c.bf16 %v2579, %v2547
        %v2644 = vpack.c.bf16 %v2580, %v2548
        %v2645 = vpack.c.bf16 %v2581, %v2549
        %v2646 = vpack.c.bf16 %v2582, %v2550
        %v2647 = vpack.c.bf16 %v2583, %v2551
        %v2648 = vpack.c.bf16 %v2584, %v2552
        %v2649 = vpack.c.bf16 %v2585, %v2553
        %v2650 = vpack.c.bf16 %v2610, %v2610
        %v2651 = vpack.c.bf16 %v2611, %v2611
        %v2652 = vpack.c.bf16 %v2612, %v2612
        %v2653 = vpack.c.bf16 %v2613, %v2613
        %v2654 = vpack.c.bf16 %v2614, %v2614
        %v2655 = vpack.c.bf16 %v2615, %v2615
        %v2656 = vpack.c.bf16 %v2616, %v2616
        %v2657 = vpack.c.bf16 %v2617, %v2617
        %s2658 = scalar_lea.vmem %s4, 8
        %v2659 = vld [vmem:[%s2658] sm:$0xf]
        %s2660 = scalar_lea.vmem %s5, 16
        %v2661 = vld [vmem:[%s2660] sm:$0xff]
        %2663 = vset.pattern.permute.xlu0 0
        %2664 = vperm.xlu0 %2663, %v2661
        %v2665 = vpop.permute.xlu0 %2664
        %v2668 = vsel %vm1151, %v2659, 0
        %v2671 = vsel %vm1155, %v2650, 0
        %v2674 = vsel %vm1155, %v2651, 0
        %v2677 = vsel %vm1155, %v2652, 0
        %v2680 = vsel %vm1155, %v2653, 0
        %v2683 = vsel %vm1155, %v2654, 0
        %v2686 = vsel %vm1155, %v2655, 0
        %v2689 = vsel %vm1155, %v2656, 0
        %v2692 = vsel %vm1155, %v2657, 0
        %2694 = vmatpush.bf16.msra.mxu0 0
        %2695 = vmatpush.bf16.msra.mxu0 0
        %2696 = vmatpush.bf16.msra.mxu0 0
        %2697 = vmatpush.bf16.msra.mxu0 %v2671
        %2698 = vmatpush.bf16.msra.mxu0 %v2642
        %2699 = vmatpush.bf16.msra.mxu0 %v2634
        %2700 = vmatpush.bf16.msra.mxu0 %v2626
        %2701 = vmatpush.bf16.msra.mxu0 %v2618
        %2702 = vmatmul.bf16.gmra.mxu0 %v2668
        %v2703 = vpop.f32.mrf.mxu0
        %v2704 = vadd.f32 %v2665, %v2703
        %v2705 = vpop.f32.mrf.mxu0
        %2706 = vdwg.mxu0
        %2707 = vmatpush.bf16.msra.mxu0 0
        %2708 = vmatpush.bf16.msra.mxu0 0
        %2709 = vmatpush.bf16.msra.mxu0 0
        %2710 = vmatpush.bf16.msra.mxu0 %v2674
        %2711 = vmatpush.bf16.msra.mxu0 %v2643
        %2712 = vmatpush.bf16.msra.mxu0 %v2635
        %2713 = vmatpush.bf16.msra.mxu0 %v2627
        %2714 = vmatpush.bf16.msra.mxu0 %v2619
        %2715 = vmatmul.bf16.gmra.mxu0 %v2668
        %v2716 = vpop.f32.mrf.mxu0
        %v2717 = vadd.f32 %v2665, %v2716
        %v2718 = vpop.f32.mrf.mxu0
        %2719 = vdwg.mxu0
        %2720 = vmatpush.bf16.msra.mxu0 0
        %2721 = vmatpush.bf16.msra.mxu0 0
        %2722 = vmatpush.bf16.msra.mxu0 0
        %2723 = vmatpush.bf16.msra.mxu0 %v2677
        %2724 = vmatpush.bf16.msra.mxu0 %v2644
        %2725 = vmatpush.bf16.msra.mxu0 %v2636
        %2726 = vmatpush.bf16.msra.mxu0 %v2628
        %2727 = vmatpush.bf16.msra.mxu0 %v2620
        %2728 = vmatmul.bf16.gmra.mxu0 %v2668
        %v2729 = vpop.f32.mrf.mxu0
        %v2730 = vadd.f32 %v2665, %v2729
        %v2731 = vpop.f32.mrf.mxu0
        %2732 = vdwg.mxu0
        %2733 = vmatpush.bf16.msra.mxu0 0
        %2734 = vmatpush.bf16.msra.mxu0 0
        %2735 = vmatpush.bf16.msra.mxu0 0
        %2736 = vmatpush.bf16.msra.mxu0 %v2680
        %2737 = vmatpush.bf16.msra.mxu0 %v2645
        %2738 = vmatpush.bf16.msra.mxu0 %v2637
        %2739 = vmatpush.bf16.msra.mxu0 %v2629
        %2740 = vmatpush.bf16.msra.mxu0 %v2621
        %2741 = vmatmul.bf16.gmra.mxu0 %v2668
        %v2742 = vpop.f32.mrf.mxu0
        %v2743 = vadd.f32 %v2665, %v2742
        %v2744 = vpop.f32.mrf.mxu0
        %2745 = vdwg.mxu0
        %2746 = vmatpush.bf16.msra.mxu0 0
        %2747 = vmatpush.bf16.msra.mxu0 0
        %2748 = vmatpush.bf16.msra.mxu0 0
        %2749 = vmatpush.bf16.msra.mxu0 %v2683
        %2750 = vmatpush.bf16.msra.mxu0 %v2646
        %2751 = vmatpush.bf16.msra.mxu0 %v2638
        %2752 = vmatpush.bf16.msra.mxu0 %v2630
        %2753 = vmatpush.bf16.msra.mxu0 %v2622
        %2754 = vmatmul.bf16.gmra.mxu0 %v2668
        %v2755 = vpop.f32.mrf.mxu0
        %v2756 = vadd.f32 %v2665, %v2755
        %v2757 = vpop.f32.mrf.mxu0
        %2758 = vdwg.mxu0
        %2759 = vmatpush.bf16.msra.mxu0 0
        %2760 = vmatpush.bf16.msra.mxu0 0
        %2761 = vmatpush.bf16.msra.mxu0 0
        %2762 = vmatpush.bf16.msra.mxu0 %v2686
        %2763 = vmatpush.bf16.msra.mxu0 %v2647
        %2764 = vmatpush.bf16.msra.mxu0 %v2639
        %2765 = vmatpush.bf16.msra.mxu0 %v2631
        %2766 = vmatpush.bf16.msra.mxu0 %v2623
        %2767 = vmatmul.bf16.gmra.mxu0 %v2668
        %v2768 = vpop.f32.mrf.mxu0
        %v2769 = vadd.f32 %v2665, %v2768
        %v2770 = vpop.f32.mrf.mxu0
        %2771 = vdwg.mxu0
        %2772 = vmatpush.bf16.msra.mxu0 0
        %2773 = vmatpush.bf16.msra.mxu0 0
        %2774 = vmatpush.bf16.msra.mxu0 0
        %2775 = vmatpush.bf16.msra.mxu0 %v2689
        %2776 = vmatpush.bf16.msra.mxu0 %v2648
        %2777 = vmatpush.bf16.msra.mxu0 %v2640
        %2778 = vmatpush.bf16.msra.mxu0 %v2632
        %2779 = vmatpush.bf16.msra.mxu0 %v2624
        %2780 = vmatmul.bf16.gmra.mxu0 %v2668
        %v2781 = vpop.f32.mrf.mxu0
        %v2782 = vadd.f32 %v2665, %v2781
        %v2783 = vpop.f32.mrf.mxu0
        %2784 = vdwg.mxu0
        %2785 = vmatpush.bf16.msra.mxu0 0
        %2786 = vmatpush.bf16.msra.mxu0 0
        %2787 = vmatpush.bf16.msra.mxu0 0
        %2788 = vmatpush.bf16.msra.mxu0 %v2692
        %2789 = vmatpush.bf16.msra.mxu0 %v2649
        %2790 = vmatpush.bf16.msra.mxu0 %v2641
        %2791 = vmatpush.bf16.msra.mxu0 %v2633
        %2792 = vmatpush.bf16.msra.mxu0 %v2625
        %2793 = vmatmul.bf16.gmra.mxu0 %v2668
        %v2794 = vpop.f32.mrf.mxu0
        %v2795 = vadd.f32 %v2665, %v2794
        %v2796 = vpop.f32.mrf.mxu0
        %2797 = vdwg.mxu0
        %v2798 = vmax.f32 %v2704, 0.0
        %v2799 = vmax.f32 %v2717, 0.0
        %v2800 = vmax.f32 %v2730, 0.0
        %v2801 = vmax.f32 %v2743, 0.0
        %v2802 = vmax.f32 %v2756, 0.0
        %v2803 = vmax.f32 %v2769, 0.0
        %v2804 = vmax.f32 %v2782, 0.0
        %v2805 = vmax.f32 %v2795, 0.0
        %s2806 = scalar_lea.vmem %s6, 64
        %v2807 = vld [vmem:[%s2806] sm:$0xf]
        %v2808 = vld [vmem:[%s2806 + $0x4] sm:$0xf]
        %v2809 = vld [vmem:[%s2806 + $0x8] sm:$0xf]
        %v2810 = vld [vmem:[%s2806 + $0xc] sm:$0xf]
        %v2811 = vld [vmem:[%s2806 + $0x10] sm:$0xf]
        %v2812 = vld [vmem:[%s2806 + $0x14] sm:$0xf]
        %v2813 = vld [vmem:[%s2806 + $0x18] sm:$0xf]
        %v2814 = vld [vmem:[%s2806 + $0x1c] sm:$0xf]
        %v2815 = vpack.c.bf16 %v2798, %v2798
        %v2816 = vpack.c.bf16 %v2799, %v2799
        %v2817 = vpack.c.bf16 %v2800, %v2800
        %v2818 = vpack.c.bf16 %v2801, %v2801
        %v2819 = vpack.c.bf16 %v2802, %v2802
        %v2820 = vpack.c.bf16 %v2803, %v2803
        %v2821 = vpack.c.bf16 %v2804, %v2804
        %v2822 = vpack.c.bf16 %v2805, %v2805
        %v2831 = vunpack.c.l.b16 %v2807
        %v2832 = vunpack.c.l.b16 %v2808
        %v2833 = vunpack.c.l.b16 %v2809
        %v2834 = vunpack.c.l.b16 %v2810
        %v2835 = vunpack.c.l.b16 %v2811
        %v2836 = vunpack.c.l.b16 %v2812
        %v2837 = vunpack.c.l.b16 %v2813
        %v2838 = vunpack.c.l.b16 %v2814
        %v2839 = vpack.c.b16 %v2832, %v2831
        %v2840 = vpack.c.b16 %v2834, %v2833
        %v2841 = vpack.c.b16 %v2836, %v2835
        %v2842 = vpack.c.b16 %v2838, %v2837
        %v2844 = vsel %vm1797, %v2839, 0
        %v2847 = vsel %vm1797, %v2840, 0
        %v2850 = vsel %vm1797, %v2841, 0
        %v2853 = vsel %vm1797, %v2842, 0
        %v2856 = vsel %vm1155, %v2815, 0
        %v2859 = vsel %vm1155, %v2816, 0
        %v2862 = vsel %vm1155, %v2817, 0
        %v2865 = vsel %vm1155, %v2818, 0
        %v2868 = vsel %vm1155, %v2819, 0
        %v2871 = vsel %vm1155, %v2820, 0
        %v2874 = vsel %vm1155, %v2821, 0
        %v2877 = vsel %vm1155, %v2822, 0
        %2879 = vmatpush.bf16.msra.mxu0 0
        %2880 = vmatpush.bf16.msra.mxu0 0
        %2881 = vmatpush.bf16.msra.mxu0 0
        %2882 = vmatpush.bf16.msra.mxu0 0
        %2883 = vmatpush.bf16.msra.mxu0 0
        %2884 = vmatpush.bf16.msra.mxu0 0
        %2885 = vmatpush.bf16.msra.mxu0 0
        %2886 = vmatpush.bf16.msra.mxu0 %v2856
        %2887 = vmatmul.bf16.gmra.mxu0 %v2844
        %v2888 = vpop.f32.mrf.mxu0
        %v2889 = vadd.f32 0.0, %v2888
        %v2890 = vpop.f32.mrf.mxu0
        %v2891 = vadd.f32 0.0, %v2890
        %2892 = vmatmul.bf16.gmra.mxu0 %v2847
        %v2893 = vpop.f32.mrf.mxu0
        %v2894 = vadd.f32 0.0, %v2893
        %v2895 = vpop.f32.mrf.mxu0
        %v2896 = vadd.f32 0.0, %v2895
        %2897 = vmatmul.bf16.gmra.mxu0 %v2850
        %v2898 = vpop.f32.mrf.mxu0
        %v2899 = vadd.f32 0.0, %v2898
        %v2900 = vpop.f32.mrf.mxu0
        %v2901 = vadd.f32 0.0, %v2900
        %2902 = vmatmul.bf16.gmra.mxu0 %v2853
        %v2903 = vpop.f32.mrf.mxu0
        %v2904 = vadd.f32 0.0, %v2903
        %v2905 = vpop.f32.mrf.mxu0
        %v2906 = vadd.f32 0.0, %v2905
        %2907 = vdwg.mxu0
        %2908 = vmatpush.bf16.msra.mxu0 0
        %2909 = vmatpush.bf16.msra.mxu0 0
        %2910 = vmatpush.bf16.msra.mxu0 0
        %2911 = vmatpush.bf16.msra.mxu0 0
        %2912 = vmatpush.bf16.msra.mxu0 0
        %2913 = vmatpush.bf16.msra.mxu0 0
        %2914 = vmatpush.bf16.msra.mxu0 0
        %2915 = vmatpush.bf16.msra.mxu0 %v2859
        %2916 = vmatmul.bf16.gmra.mxu0 %v2844
        %v2917 = vpop.f32.mrf.mxu0
        %v2918 = vadd.f32 0.0, %v2917
        %v2919 = vpop.f32.mrf.mxu0
        %v2920 = vadd.f32 0.0, %v2919
        %2921 = vmatmul.bf16.gmra.mxu0 %v2847
        %v2922 = vpop.f32.mrf.mxu0
        %v2923 = vadd.f32 0.0, %v2922
        %v2924 = vpop.f32.mrf.mxu0
        %v2925 = vadd.f32 0.0, %v2924
        %2926 = vmatmul.bf16.gmra.mxu0 %v2850
        %v2927 = vpop.f32.mrf.mxu0
        %v2928 = vadd.f32 0.0, %v2927
        %v2929 = vpop.f32.mrf.mxu0
        %v2930 = vadd.f32 0.0, %v2929
        %2931 = vmatmul.bf16.gmra.mxu0 %v2853
        %v2932 = vpop.f32.mrf.mxu0
        %v2933 = vadd.f32 0.0, %v2932
        %v2934 = vpop.f32.mrf.mxu0
        %v2935 = vadd.f32 0.0, %v2934
        %2936 = vdwg.mxu0
        %2937 = vmatpush.bf16.msra.mxu0 0
        %2938 = vmatpush.bf16.msra.mxu0 0
        %2939 = vmatpush.bf16.msra.mxu0 0
        %2940 = vmatpush.bf16.msra.mxu0 0
        %2941 = vmatpush.bf16.msra.mxu0 0
        %2942 = vmatpush.bf16.msra.mxu0 0
        %2943 = vmatpush.bf16.msra.mxu0 0
        %2944 = vmatpush.bf16.msra.mxu0 %v2862
        %2945 = vmatmul.bf16.gmra.mxu0 %v2844
        %v2946 = vpop.f32.mrf.mxu0
        %v2947 = vadd.f32 0.0, %v2946
        %v2948 = vpop.f32.mrf.mxu0
        %v2949 = vadd.f32 0.0, %v2948
        %2950 = vmatmul.bf16.gmra.mxu0 %v2847
        %v2951 = vpop.f32.mrf.mxu0
        %v2952 = vadd.f32 0.0, %v2951
        %v2953 = vpop.f32.mrf.mxu0
        %v2954 = vadd.f32 0.0, %v2953
        %2955 = vmatmul.bf16.gmra.mxu0 %v2850
        %v2956 = vpop.f32.mrf.mxu0
        %v2957 = vadd.f32 0.0, %v2956
        %v2958 = vpop.f32.mrf.mxu0
        %v2959 = vadd.f32 0.0, %v2958
        %2960 = vmatmul.bf16.gmra.mxu0 %v2853
        %v2961 = vpop.f32.mrf.mxu0
        %v2962 = vadd.f32 0.0, %v2961
        %v2963 = vpop.f32.mrf.mxu0
        %v2964 = vadd.f32 0.0, %v2963
        %2965 = vdwg.mxu0
        %2966 = vmatpush.bf16.msra.mxu0 0
        %2967 = vmatpush.bf16.msra.mxu0 0
        %2968 = vmatpush.bf16.msra.mxu0 0
        %2969 = vmatpush.bf16.msra.mxu0 0
        %2970 = vmatpush.bf16.msra.mxu0 0
        %2971 = vmatpush.bf16.msra.mxu0 0
        %2972 = vmatpush.bf16.msra.mxu0 0
        %2973 = vmatpush.bf16.msra.mxu0 %v2865
        %2974 = vmatmul.bf16.gmra.mxu0 %v2844
        %v2975 = vpop.f32.mrf.mxu0
        %v2976 = vadd.f32 0.0, %v2975
        %v2977 = vpop.f32.mrf.mxu0
        %v2978 = vadd.f32 0.0, %v2977
        %2979 = vmatmul.bf16.gmra.mxu0 %v2847
        %v2980 = vpop.f32.mrf.mxu0
        %v2981 = vadd.f32 0.0, %v2980
        %v2982 = vpop.f32.mrf.mxu0
        %v2983 = vadd.f32 0.0, %v2982
        %2984 = vmatmul.bf16.gmra.mxu0 %v2850
        %v2985 = vpop.f32.mrf.mxu0
        %v2986 = vadd.f32 0.0, %v2985
        %v2987 = vpop.f32.mrf.mxu0
        %v2988 = vadd.f32 0.0, %v2987
        %2989 = vmatmul.bf16.gmra.mxu0 %v2853
        %v2990 = vpop.f32.mrf.mxu0
        %v2991 = vadd.f32 0.0, %v2990
        %v2992 = vpop.f32.mrf.mxu0
        %v2993 = vadd.f32 0.0, %v2992
        %2994 = vdwg.mxu0
        %2995 = vmatpush.bf16.msra.mxu0 0
        %2996 = vmatpush.bf16.msra.mxu0 0
        %2997 = vmatpush.bf16.msra.mxu0 0
        %2998 = vmatpush.bf16.msra.mxu0 0
        %2999 = vmatpush.bf16.msra.mxu0 0
        %3000 = vmatpush.bf16.msra.mxu0 0
        %3001 = vmatpush.bf16.msra.mxu0 0
        %3002 = vmatpush.bf16.msra.mxu0 %v2868
        %3003 = vmatmul.bf16.gmra.mxu0 %v2844
        %v3004 = vpop.f32.mrf.mxu0
        %v3005 = vadd.f32 0.0, %v3004
        %v3006 = vpop.f32.mrf.mxu0
        %v3007 = vadd.f32 0.0, %v3006
        %3008 = vmatmul.bf16.gmra.mxu0 %v2847
        %v3009 = vpop.f32.mrf.mxu0
        %v3010 = vadd.f32 0.0, %v3009
        %v3011 = vpop.f32.mrf.mxu0
        %v3012 = vadd.f32 0.0, %v3011
        %3013 = vmatmul.bf16.gmra.mxu0 %v2850
        %v3014 = vpop.f32.mrf.mxu0
        %v3015 = vadd.f32 0.0, %v3014
        %v3016 = vpop.f32.mrf.mxu0
        %v3017 = vadd.f32 0.0, %v3016
        %3018 = vmatmul.bf16.gmra.mxu0 %v2853
        %v3019 = vpop.f32.mrf.mxu0
        %v3020 = vadd.f32 0.0, %v3019
        %v3021 = vpop.f32.mrf.mxu0
        %v3022 = vadd.f32 0.0, %v3021
        %3023 = vdwg.mxu0
        %3024 = vmatpush.bf16.msra.mxu0 0
        %3025 = vmatpush.bf16.msra.mxu0 0
        %3026 = vmatpush.bf16.msra.mxu0 0
        %3027 = vmatpush.bf16.msra.mxu0 0
        %3028 = vmatpush.bf16.msra.mxu0 0
        %3029 = vmatpush.bf16.msra.mxu0 0
        %3030 = vmatpush.bf16.msra.mxu0 0
        %3031 = vmatpush.bf16.msra.mxu0 %v2871
        %3032 = vmatmul.bf16.gmra.mxu0 %v2844
        %v3033 = vpop.f32.mrf.mxu0
        %v3034 = vadd.f32 0.0, %v3033
        %v3035 = vpop.f32.mrf.mxu0
        %v3036 = vadd.f32 0.0, %v3035
        %3037 = vmatmul.bf16.gmra.mxu0 %v2847
        %v3038 = vpop.f32.mrf.mxu0
        %v3039 = vadd.f32 0.0, %v3038
        %v3040 = vpop.f32.mrf.mxu0
        %v3041 = vadd.f32 0.0, %v3040
        %3042 = vmatmul.bf16.gmra.mxu0 %v2850
        %v3043 = vpop.f32.mrf.mxu0
        %v3044 = vadd.f32 0.0, %v3043
        %v3045 = vpop.f32.mrf.mxu0
        %v3046 = vadd.f32 0.0, %v3045
        %3047 = vmatmul.bf16.gmra.mxu0 %v2853
        %v3048 = vpop.f32.mrf.mxu0
        %v3049 = vadd.f32 0.0, %v3048
        %v3050 = vpop.f32.mrf.mxu0
        %v3051 = vadd.f32 0.0, %v3050
        %3052 = vdwg.mxu0
        %3053 = vmatpush.bf16.msra.mxu0 0
        %3054 = vmatpush.bf16.msra.mxu0 0
        %3055 = vmatpush.bf16.msra.mxu0 0
        %3056 = vmatpush.bf16.msra.mxu0 0
        %3057 = vmatpush.bf16.msra.mxu0 0
        %3058 = vmatpush.bf16.msra.mxu0 0
        %3059 = vmatpush.bf16.msra.mxu0 0
        %3060 = vmatpush.bf16.msra.mxu0 %v2874
        %3061 = vmatmul.bf16.gmra.mxu0 %v2844
        %v3062 = vpop.f32.mrf.mxu0
        %v3063 = vadd.f32 0.0, %v3062
        %v3064 = vpop.f32.mrf.mxu0
        %v3065 = vadd.f32 0.0, %v3064
        %3066 = vmatmul.bf16.gmra.mxu0 %v2847
        %v3067 = vpop.f32.mrf.mxu0
        %v3068 = vadd.f32 0.0, %v3067
        %v3069 = vpop.f32.mrf.mxu0
        %v3070 = vadd.f32 0.0, %v3069
        %3071 = vmatmul.bf16.gmra.mxu0 %v2850
        %v3072 = vpop.f32.mrf.mxu0
        %v3073 = vadd.f32 0.0, %v3072
        %v3074 = vpop.f32.mrf.mxu0
        %v3075 = vadd.f32 0.0, %v3074
        %3076 = vmatmul.bf16.gmra.mxu0 %v2853
        %v3077 = vpop.f32.mrf.mxu0
        %v3078 = vadd.f32 0.0, %v3077
        %v3079 = vpop.f32.mrf.mxu0
        %v3080 = vadd.f32 0.0, %v3079
        %3081 = vdwg.mxu0
        %3082 = vmatpush.bf16.msra.mxu0 0
        %3083 = vmatpush.bf16.msra.mxu0 0
        %3084 = vmatpush.bf16.msra.mxu0 0
        %3085 = vmatpush.bf16.msra.mxu0 0
        %3086 = vmatpush.bf16.msra.mxu0 0
        %3087 = vmatpush.bf16.msra.mxu0 0
        %3088 = vmatpush.bf16.msra.mxu0 0
        %3089 = vmatpush.bf16.msra.mxu0 %v2877
        %3090 = vmatmul.bf16.gmra.mxu0 %v2844
        %v3091 = vpop.f32.mrf.mxu0
        %v3092 = vadd.f32 0.0, %v3091
        %v3093 = vpop.f32.mrf.mxu0
        %v3094 = vadd.f32 0.0, %v3093
        %3095 = vmatmul.bf16.gmra.mxu0 %v2847
        %v3096 = vpop.f32.mrf.mxu0
        %v3097 = vadd.f32 0.0, %v3096
        %v3098 = vpop.f32.mrf.mxu0
        %v3099 = vadd.f32 0.0, %v3098
        %3100 = vmatmul.bf16.gmra.mxu0 %v2850
        %v3101 = vpop.f32.mrf.mxu0
        %v3102 = vadd.f32 0.0, %v3101
        %v3103 = vpop.f32.mrf.mxu0
        %v3104 = vadd.f32 0.0, %v3103
        %3105 = vmatmul.bf16.gmra.mxu0 %v2853
        %v3106 = vpop.f32.mrf.mxu0
        %v3107 = vadd.f32 0.0, %v3106
        %v3108 = vpop.f32.mrf.mxu0
        %v3109 = vadd.f32 0.0, %v3108
        %3110 = vdwg.mxu0
        %v3111 = vadd.f32 %v2132, %v2889
        %v3112 = vadd.f32 %v2161, %v2918
        %v3113 = vadd.f32 %v2190, %v2947
        %v3114 = vadd.f32 %v2219, %v2976
        %v3115 = vadd.f32 %v2248, %v3005
        %v3116 = vadd.f32 %v2277, %v3034
        %v3117 = vadd.f32 %v2306, %v3063
        %v3118 = vadd.f32 %v2335, %v3092
        %v3119 = vadd.f32 %v2134, %v2891
        %v3120 = vadd.f32 %v2163, %v2920
        %v3121 = vadd.f32 %v2192, %v2949
        %v3122 = vadd.f32 %v2221, %v2978
        %v3123 = vadd.f32 %v2250, %v3007
        %v3124 = vadd.f32 %v2279, %v3036
        %v3125 = vadd.f32 %v2308, %v3065
        %v3126 = vadd.f32 %v2337, %v3094
        %v3127 = vadd.f32 %v2137, %v2894
        %v3128 = vadd.f32 %v2166, %v2923
        %v3129 = vadd.f32 %v2195, %v2952
        %v3130 = vadd.f32 %v2224, %v2981
        %v3131 = vadd.f32 %v2253, %v3010
        %v3132 = vadd.f32 %v2282, %v3039
        %v3133 = vadd.f32 %v2311, %v3068
        %v3134 = vadd.f32 %v2340, %v3097
        %v3135 = vadd.f32 %v2139, %v2896
        %v3136 = vadd.f32 %v2168, %v2925
        %v3137 = vadd.f32 %v2197, %v2954
        %v3138 = vadd.f32 %v2226, %v2983
        %v3139 = vadd.f32 %v2255, %v3012
        %v3140 = vadd.f32 %v2284, %v3041
        %v3141 = vadd.f32 %v2313, %v3070
        %v3142 = vadd.f32 %v2342, %v3099
        %v3143 = vadd.f32 %v2142, %v2899
        %v3144 = vadd.f32 %v2171, %v2928
        %v3145 = vadd.f32 %v2200, %v2957
        %v3146 = vadd.f32 %v2229, %v2986
        %v3147 = vadd.f32 %v2258, %v3015
        %v3148 = vadd.f32 %v2287, %v3044
        %v3149 = vadd.f32 %v2316, %v3073
        %v3150 = vadd.f32 %v2345, %v3102
        %v3151 = vadd.f32 %v2144, %v2901
        %v3152 = vadd.f32 %v2173, %v2930
        %v3153 = vadd.f32 %v2202, %v2959
        %v3154 = vadd.f32 %v2231, %v2988
        %v3155 = vadd.f32 %v2260, %v3017
        %v3156 = vadd.f32 %v2289, %v3046
        %v3157 = vadd.f32 %v2318, %v3075
        %v3158 = vadd.f32 %v2347, %v3104
        %v3159 = vadd.f32 %v2147, %v2904
        %v3160 = vadd.f32 %v2176, %v2933
        %v3161 = vadd.f32 %v2205, %v2962
        %v3162 = vadd.f32 %v2234, %v2991
        %v3163 = vadd.f32 %v2263, %v3020
        %v3164 = vadd.f32 %v2292, %v3049
        %v3165 = vadd.f32 %v2321, %v3078
        %v3166 = vadd.f32 %v2350, %v3107
        %v3167 = vadd.f32 %v2149, %v2906
        %v3168 = vadd.f32 %v2178, %v2935
        %v3169 = vadd.f32 %v2207, %v2964
        %v3170 = vadd.f32 %v2236, %v2993
        %v3171 = vadd.f32 %v2265, %v3022
        %v3172 = vadd.f32 %v2294, %v3051
        %v3173 = vadd.f32 %v2323, %v3080
        %v3174 = vadd.f32 %v2352, %v3109
        %v3175 = vpack.c.bf16 %v759, %v759
        %v3176 = vpack.c.bf16 %v760, %v760
        %v3177 = vpack.c.bf16 %v761, %v761
        %v3178 = vpack.c.bf16 %v762, %v762
        %v3179 = vpack.c.bf16 %v763, %v763
        %v3180 = vpack.c.bf16 %v764, %v764
        %v3181 = vpack.c.bf16 %v765, %v765
        %v3182 = vpack.c.bf16 %v766, %v766
        %s3183 = scalar_lea.vmem %s6, 96
        %v3184 = vld [vmem:[%s3183] sm:$0xf]
        %v3185 = vld [vmem:[%s3183 + $0x4] sm:$0xf]
        %v3186 = vld [vmem:[%s3183 + $0x8] sm:$0xf]
        %v3187 = vld [vmem:[%s3183 + $0xc] sm:$0xf]
        %v3188 = vld [vmem:[%s3183 + $0x10] sm:$0xf]
        %v3189 = vld [vmem:[%s3183 + $0x14] sm:$0xf]
        %v3190 = vld [vmem:[%s3183 + $0x18] sm:$0xf]
        %v3191 = vld [vmem:[%s3183 + $0x1c] sm:$0xf]
        %v3200 = vunpack.c.l.b16 %v3184
        %v3201 = vunpack.c.l.b16 %v3185
        %v3202 = vunpack.c.l.b16 %v3186
        %v3203 = vunpack.c.l.b16 %v3187
        %v3204 = vunpack.c.l.b16 %v3188
        %v3205 = vunpack.c.l.b16 %v3189
        %v3206 = vunpack.c.l.b16 %v3190
        %v3207 = vunpack.c.l.b16 %v3191
        %v3208 = vpack.c.b16 %v3201, %v3200
        %v3209 = vpack.c.b16 %v3203, %v3202
        %v3210 = vpack.c.b16 %v3205, %v3204
        %v3211 = vpack.c.b16 %v3207, %v3206
        %v3213 = vsel %vm1797, %v3208, 0
        %v3216 = vsel %vm1797, %v3209, 0
        %v3219 = vsel %vm1797, %v3210, 0
        %v3222 = vsel %vm1797, %v3211, 0
        %v3225 = vsel %vm1155, %v3175, 0
        %v3228 = vsel %vm1155, %v3176, 0
        %v3231 = vsel %vm1155, %v3177, 0
        %v3234 = vsel %vm1155, %v3178, 0
        %v3237 = vsel %vm1155, %v3179, 0
        %v3240 = vsel %vm1155, %v3180, 0
        %v3243 = vsel %vm1155, %v3181, 0
        %v3246 = vsel %vm1155, %v3182, 0
        %3248 = vmatpush.bf16.msra.mxu0 0
        %3249 = vmatpush.bf16.msra.mxu0 0
        %3250 = vmatpush.bf16.msra.mxu0 0
        %3251 = vmatpush.bf16.msra.mxu0 0
        %3252 = vmatpush.bf16.msra.mxu0 0
        %3253 = vmatpush.bf16.msra.mxu0 0
        %3254 = vmatpush.bf16.msra.mxu0 0
        %3255 = vmatpush.bf16.msra.mxu0 %v3225
        %3256 = vmatmul.bf16.gmra.mxu0 %v3213
        %v3257 = vpop.f32.mrf.mxu0
        %v3258 = vadd.f32 0.0, %v3257
        %v3259 = vpop.f32.mrf.mxu0
        %v3260 = vadd.f32 0.0, %v3259
        %3261 = vmatmul.bf16.gmra.mxu0 %v3216
        %v3262 = vpop.f32.mrf.mxu0
        %v3263 = vadd.f32 0.0, %v3262
        %v3264 = vpop.f32.mrf.mxu0
        %v3265 = vadd.f32 0.0, %v3264
        %3266 = vmatmul.bf16.gmra.mxu0 %v3219
        %v3267 = vpop.f32.mrf.mxu0
        %v3268 = vadd.f32 0.0, %v3267
        %v3269 = vpop.f32.mrf.mxu0
        %v3270 = vadd.f32 0.0, %v3269
        %3271 = vmatmul.bf16.gmra.mxu0 %v3222
        %v3272 = vpop.f32.mrf.mxu0
        %v3273 = vadd.f32 0.0, %v3272
        %v3274 = vpop.f32.mrf.mxu0
        %v3275 = vadd.f32 0.0, %v3274
        %3276 = vdwg.mxu0
        %3277 = vmatpush.bf16.msra.mxu0 0
        %3278 = vmatpush.bf16.msra.mxu0 0
        %3279 = vmatpush.bf16.msra.mxu0 0
        %3280 = vmatpush.bf16.msra.mxu0 0
        %3281 = vmatpush.bf16.msra.mxu0 0
        %3282 = vmatpush.bf16.msra.mxu0 0
        %3283 = vmatpush.bf16.msra.mxu0 0
        %3284 = vmatpush.bf16.msra.mxu0 %v3228
        %3285 = vmatmul.bf16.gmra.mxu0 %v3213
        %v3286 = vpop.f32.mrf.mxu0
        %v3287 = vadd.f32 0.0, %v3286
        %v3288 = vpop.f32.mrf.mxu0
        %v3289 = vadd.f32 0.0, %v3288
        %3290 = vmatmul.bf16.gmra.mxu0 %v3216
        %v3291 = vpop.f32.mrf.mxu0
        %v3292 = vadd.f32 0.0, %v3291
        %v3293 = vpop.f32.mrf.mxu0
        %v3294 = vadd.f32 0.0, %v3293
        %3295 = vmatmul.bf16.gmra.mxu0 %v3219
        %v3296 = vpop.f32.mrf.mxu0
        %v3297 = vadd.f32 0.0, %v3296
        %v3298 = vpop.f32.mrf.mxu0
        %v3299 = vadd.f32 0.0, %v3298
        %3300 = vmatmul.bf16.gmra.mxu0 %v3222
        %v3301 = vpop.f32.mrf.mxu0
        %v3302 = vadd.f32 0.0, %v3301
        %v3303 = vpop.f32.mrf.mxu0
        %v3304 = vadd.f32 0.0, %v3303
        %3305 = vdwg.mxu0
        %3306 = vmatpush.bf16.msra.mxu0 0
        %3307 = vmatpush.bf16.msra.mxu0 0
        %3308 = vmatpush.bf16.msra.mxu0 0
        %3309 = vmatpush.bf16.msra.mxu0 0
        %3310 = vmatpush.bf16.msra.mxu0 0
        %3311 = vmatpush.bf16.msra.mxu0 0
        %3312 = vmatpush.bf16.msra.mxu0 0
        %3313 = vmatpush.bf16.msra.mxu0 %v3231
        %3314 = vmatmul.bf16.gmra.mxu0 %v3213
        %v3315 = vpop.f32.mrf.mxu0
        %v3316 = vadd.f32 0.0, %v3315
        %v3317 = vpop.f32.mrf.mxu0
        %v3318 = vadd.f32 0.0, %v3317
        %3319 = vmatmul.bf16.gmra.mxu0 %v3216
        %v3320 = vpop.f32.mrf.mxu0
        %v3321 = vadd.f32 0.0, %v3320
        %v3322 = vpop.f32.mrf.mxu0
        %v3323 = vadd.f32 0.0, %v3322
        %3324 = vmatmul.bf16.gmra.mxu0 %v3219
        %v3325 = vpop.f32.mrf.mxu0
        %v3326 = vadd.f32 0.0, %v3325
        %v3327 = vpop.f32.mrf.mxu0
        %v3328 = vadd.f32 0.0, %v3327
        %3329 = vmatmul.bf16.gmra.mxu0 %v3222
        %v3330 = vpop.f32.mrf.mxu0
        %v3331 = vadd.f32 0.0, %v3330
        %v3332 = vpop.f32.mrf.mxu0
        %v3333 = vadd.f32 0.0, %v3332
        %3334 = vdwg.mxu0
        %3335 = vmatpush.bf16.msra.mxu0 0
        %3336 = vmatpush.bf16.msra.mxu0 0
        %3337 = vmatpush.bf16.msra.mxu0 0
        %3338 = vmatpush.bf16.msra.mxu0 0
        %3339 = vmatpush.bf16.msra.mxu0 0
        %3340 = vmatpush.bf16.msra.mxu0 0
        %3341 = vmatpush.bf16.msra.mxu0 0
        %3342 = vmatpush.bf16.msra.mxu0 %v3234
        %3343 = vmatmul.bf16.gmra.mxu0 %v3213
        %v3344 = vpop.f32.mrf.mxu0
        %v3345 = vadd.f32 0.0, %v3344
        %v3346 = vpop.f32.mrf.mxu0
        %v3347 = vadd.f32 0.0, %v3346
        %3348 = vmatmul.bf16.gmra.mxu0 %v3216
        %v3349 = vpop.f32.mrf.mxu0
        %v3350 = vadd.f32 0.0, %v3349
        %v3351 = vpop.f32.mrf.mxu0
        %v3352 = vadd.f32 0.0, %v3351
        %3353 = vmatmul.bf16.gmra.mxu0 %v3219
        %v3354 = vpop.f32.mrf.mxu0
        %v3355 = vadd.f32 0.0, %v3354
        %v3356 = vpop.f32.mrf.mxu0
        %v3357 = vadd.f32 0.0, %v3356
        %3358 = vmatmul.bf16.gmra.mxu0 %v3222
        %v3359 = vpop.f32.mrf.mxu0
        %v3360 = vadd.f32 0.0, %v3359
        %v3361 = vpop.f32.mrf.mxu0
        %v3362 = vadd.f32 0.0, %v3361
        %3363 = vdwg.mxu0
        %3364 = vmatpush.bf16.msra.mxu0 0
        %3365 = vmatpush.bf16.msra.mxu0 0
        %3366 = vmatpush.bf16.msra.mxu0 0
        %3367 = vmatpush.bf16.msra.mxu0 0
        %3368 = vmatpush.bf16.msra.mxu0 0
        %3369 = vmatpush.bf16.msra.mxu0 0
        %3370 = vmatpush.bf16.msra.mxu0 0
        %3371 = vmatpush.bf16.msra.mxu0 %v3237
        %3372 = vmatmul.bf16.gmra.mxu0 %v3213
        %v3373 = vpop.f32.mrf.mxu0
        %v3374 = vadd.f32 0.0, %v3373
        %v3375 = vpop.f32.mrf.mxu0
        %v3376 = vadd.f32 0.0, %v3375
        %3377 = vmatmul.bf16.gmra.mxu0 %v3216
        %v3378 = vpop.f32.mrf.mxu0
        %v3379 = vadd.f32 0.0, %v3378
        %v3380 = vpop.f32.mrf.mxu0
        %v3381 = vadd.f32 0.0, %v3380
        %3382 = vmatmul.bf16.gmra.mxu0 %v3219
        %v3383 = vpop.f32.mrf.mxu0
        %v3384 = vadd.f32 0.0, %v3383
        %v3385 = vpop.f32.mrf.mxu0
        %v3386 = vadd.f32 0.0, %v3385
        %3387 = vmatmul.bf16.gmra.mxu0 %v3222
        %v3388 = vpop.f32.mrf.mxu0
        %v3389 = vadd.f32 0.0, %v3388
        %v3390 = vpop.f32.mrf.mxu0
        %v3391 = vadd.f32 0.0, %v3390
        %3392 = vdwg.mxu0
        %3393 = vmatpush.bf16.msra.mxu0 0
        %3394 = vmatpush.bf16.msra.mxu0 0
        %3395 = vmatpush.bf16.msra.mxu0 0
        %3396 = vmatpush.bf16.msra.mxu0 0
        %3397 = vmatpush.bf16.msra.mxu0 0
        %3398 = vmatpush.bf16.msra.mxu0 0
        %3399 = vmatpush.bf16.msra.mxu0 0
        %3400 = vmatpush.bf16.msra.mxu0 %v3240
        %3401 = vmatmul.bf16.gmra.mxu0 %v3213
        %v3402 = vpop.f32.mrf.mxu0
        %v3403 = vadd.f32 0.0, %v3402
        %v3404 = vpop.f32.mrf.mxu0
        %v3405 = vadd.f32 0.0, %v3404
        %3406 = vmatmul.bf16.gmra.mxu0 %v3216
        %v3407 = vpop.f32.mrf.mxu0
        %v3408 = vadd.f32 0.0, %v3407
        %v3409 = vpop.f32.mrf.mxu0
        %v3410 = vadd.f32 0.0, %v3409
        %3411 = vmatmul.bf16.gmra.mxu0 %v3219
        %v3412 = vpop.f32.mrf.mxu0
        %v3413 = vadd.f32 0.0, %v3412
        %v3414 = vpop.f32.mrf.mxu0
        %v3415 = vadd.f32 0.0, %v3414
        %3416 = vmatmul.bf16.gmra.mxu0 %v3222
        %v3417 = vpop.f32.mrf.mxu0
        %v3418 = vadd.f32 0.0, %v3417
        %v3419 = vpop.f32.mrf.mxu0
        %v3420 = vadd.f32 0.0, %v3419
        %3421 = vdwg.mxu0
        %3422 = vmatpush.bf16.msra.mxu0 0
        %3423 = vmatpush.bf16.msra.mxu0 0
        %3424 = vmatpush.bf16.msra.mxu0 0
        %3425 = vmatpush.bf16.msra.mxu0 0
        %3426 = vmatpush.bf16.msra.mxu0 0
        %3427 = vmatpush.bf16.msra.mxu0 0
        %3428 = vmatpush.bf16.msra.mxu0 0
        %3429 = vmatpush.bf16.msra.mxu0 %v3243
        %3430 = vmatmul.bf16.gmra.mxu0 %v3213
        %v3431 = vpop.f32.mrf.mxu0
        %v3432 = vadd.f32 0.0, %v3431
        %v3433 = vpop.f32.mrf.mxu0
        %v3434 = vadd.f32 0.0, %v3433
        %3435 = vmatmul.bf16.gmra.mxu0 %v3216
        %v3436 = vpop.f32.mrf.mxu0
        %v3437 = vadd.f32 0.0, %v3436
        %v3438 = vpop.f32.mrf.mxu0
        %v3439 = vadd.f32 0.0, %v3438
        %3440 = vmatmul.bf16.gmra.mxu0 %v3219
        %v3441 = vpop.f32.mrf.mxu0
        %v3442 = vadd.f32 0.0, %v3441
        %v3443 = vpop.f32.mrf.mxu0
        %v3444 = vadd.f32 0.0, %v3443
        %3445 = vmatmul.bf16.gmra.mxu0 %v3222
        %v3446 = vpop.f32.mrf.mxu0
        %v3447 = vadd.f32 0.0, %v3446
        %v3448 = vpop.f32.mrf.mxu0
        %v3449 = vadd.f32 0.0, %v3448
        %3450 = vdwg.mxu0
        %3451 = vmatpush.bf16.msra.mxu0 0
        %3452 = vmatpush.bf16.msra.mxu0 0
        %3453 = vmatpush.bf16.msra.mxu0 0
        %3454 = vmatpush.bf16.msra.mxu0 0
        %3455 = vmatpush.bf16.msra.mxu0 0
        %3456 = vmatpush.bf16.msra.mxu0 0
        %3457 = vmatpush.bf16.msra.mxu0 0
        %3458 = vmatpush.bf16.msra.mxu0 %v3246
        %3459 = vmatmul.bf16.gmra.mxu0 %v3213
        %v3460 = vpop.f32.mrf.mxu0
        %v3461 = vadd.f32 0.0, %v3460
        %v3462 = vpop.f32.mrf.mxu0
        %v3463 = vadd.f32 0.0, %v3462
        %3464 = vmatmul.bf16.gmra.mxu0 %v3216
        %v3465 = vpop.f32.mrf.mxu0
        %v3466 = vadd.f32 0.0, %v3465
        %v3467 = vpop.f32.mrf.mxu0
        %v3468 = vadd.f32 0.0, %v3467
        %3469 = vmatmul.bf16.gmra.mxu0 %v3219
        %v3470 = vpop.f32.mrf.mxu0
        %v3471 = vadd.f32 0.0, %v3470
        %v3472 = vpop.f32.mrf.mxu0
        %v3473 = vadd.f32 0.0, %v3472
        %3474 = vmatmul.bf16.gmra.mxu0 %v3222
        %v3475 = vpop.f32.mrf.mxu0
        %v3476 = vadd.f32 0.0, %v3475
        %v3477 = vpop.f32.mrf.mxu0
        %v3478 = vadd.f32 0.0, %v3477
        %3479 = vdwg.mxu0
        %v3480 = vadd.f32 %v3111, %v3258
        %v3481 = vadd.f32 %v3112, %v3287
        %v3482 = vadd.f32 %v3113, %v3316
        %v3483 = vadd.f32 %v3114, %v3345
        %v3484 = vadd.f32 %v3115, %v3374
        %v3485 = vadd.f32 %v3116, %v3403
        %v3486 = vadd.f32 %v3117, %v3432
        %v3487 = vadd.f32 %v3118, %v3461
        %v3488 = vadd.f32 %v3119, %v3260
        %v3489 = vadd.f32 %v3120, %v3289
        %v3490 = vadd.f32 %v3121, %v3318
        %v3491 = vadd.f32 %v3122, %v3347
        %v3492 = vadd.f32 %v3123, %v3376
        %v3493 = vadd.f32 %v3124, %v3405
        %v3494 = vadd.f32 %v3125, %v3434
        %v3495 = vadd.f32 %v3126, %v3463
        %v3496 = vadd.f32 %v3127, %v3263
        %v3497 = vadd.f32 %v3128, %v3292
        %v3498 = vadd.f32 %v3129, %v3321
        %v3499 = vadd.f32 %v3130, %v3350
        %v3500 = vadd.f32 %v3131, %v3379
        %v3501 = vadd.f32 %v3132, %v3408
        %v3502 = vadd.f32 %v3133, %v3437
        %v3503 = vadd.f32 %v3134, %v3466
        %v3504 = vadd.f32 %v3135, %v3265
        %v3505 = vadd.f32 %v3136, %v3294
        %v3506 = vadd.f32 %v3137, %v3323
        %v3507 = vadd.f32 %v3138, %v3352
        %v3508 = vadd.f32 %v3139, %v3381
        %v3509 = vadd.f32 %v3140, %v3410
        %v3510 = vadd.f32 %v3141, %v3439
        %v3511 = vadd.f32 %v3142, %v3468
        %v3512 = vadd.f32 %v3143, %v3268
        %v3513 = vadd.f32 %v3144, %v3297
        %v3514 = vadd.f32 %v3145, %v3326
        %v3515 = vadd.f32 %v3146, %v3355
        %v3516 = vadd.f32 %v3147, %v3384
        %v3517 = vadd.f32 %v3148, %v3413
        %v3518 = vadd.f32 %v3149, %v3442
        %v3519 = vadd.f32 %v3150, %v3471
        %v3520 = vadd.f32 %v3151, %v3270
        %v3521 = vadd.f32 %v3152, %v3299
        %v3522 = vadd.f32 %v3153, %v3328
        %v3523 = vadd.f32 %v3154, %v3357
        %v3524 = vadd.f32 %v3155, %v3386
        %v3525 = vadd.f32 %v3156, %v3415
        %v3526 = vadd.f32 %v3157, %v3444
        %v3527 = vadd.f32 %v3158, %v3473
        %v3528 = vadd.f32 %v3159, %v3273
        %v3529 = vadd.f32 %v3160, %v3302
        %v3530 = vadd.f32 %v3161, %v3331
        %v3531 = vadd.f32 %v3162, %v3360
        %v3532 = vadd.f32 %v3163, %v3389
        %v3533 = vadd.f32 %v3164, %v3418
        %v3534 = vadd.f32 %v3165, %v3447
        %v3535 = vadd.f32 %v3166, %v3476
        %v3536 = vadd.f32 %v3167, %v3275
        %v3537 = vadd.f32 %v3168, %v3304
        %v3538 = vadd.f32 %v3169, %v3333
        %v3539 = vadd.f32 %v3170, %v3362
        %v3540 = vadd.f32 %v3171, %v3391
        %v3541 = vadd.f32 %v3172, %v3420
        %v3542 = vadd.f32 %v3173, %v3449
        %v3543 = vadd.f32 %v3174, %v3478
        %v3544 = vld [vmem:[%s7] sm:$0xff]
        %v3545 = vld [vmem:[%s7 + $0x8] sm:$0xff]
        %v3546 = vld [vmem:[%s7 + $0x10] sm:$0xff]
        %v3547 = vld [vmem:[%s7 + $0x18] sm:$0xff]
        %v3548 = vld [vmem:[%s7 + $0x20] sm:$0xff]
        %v3549 = vld [vmem:[%s7 + $0x28] sm:$0xff]
        %v3550 = vld [vmem:[%s7 + $0x30] sm:$0xff]
        %v3551 = vld [vmem:[%s7 + $0x38] sm:$0xff]
        %3553 = vset.pattern.permute.xlu0 0
        %3554 = vperm.xlu0 %3553, %v3544
        %v3555 = vpop.permute.xlu0 %3554
        %3558 = vset.pattern.permute.xlu0 0
        %3559 = vperm.xlu0 %3558, %v3545
        %v3560 = vpop.permute.xlu0 %3559
        %3563 = vset.pattern.permute.xlu0 0
        %3564 = vperm.xlu0 %3563, %v3546
        %v3565 = vpop.permute.xlu0 %3564
        %3568 = vset.pattern.permute.xlu0 0
        %3569 = vperm.xlu0 %3568, %v3547
        %v3570 = vpop.permute.xlu0 %3569
        %3573 = vset.pattern.permute.xlu0 0
        %3574 = vperm.xlu0 %3573, %v3548
        %v3575 = vpop.permute.xlu0 %3574
        %3578 = vset.pattern.permute.xlu0 0
        %3579 = vperm.xlu0 %3578, %v3549
        %v3580 = vpop.permute.xlu0 %3579
        %3583 = vset.pattern.permute.xlu0 0
        %3584 = vperm.xlu0 %3583, %v3550
        %v3585 = vpop.permute.xlu0 %3584
        %3588 = vset.pattern.permute.xlu0 0
        %3589 = vperm.xlu0 %3588, %v3551
        %v3590 = vpop.permute.xlu0 %3589
        %v3592 = vadd.f32 %v3480, %v3555
        %v3593 = vadd.f32 %v3481, %v3555
        %v3594 = vadd.f32 %v3482, %v3555
        %v3595 = vadd.f32 %v3483, %v3555
        %v3596 = vadd.f32 %v3484, %v3555
        %v3597 = vadd.f32 %v3485, %v3555
        %v3598 = vadd.f32 %v3486, %v3555
        %v3599 = vadd.f32 %v3487, %v3555
        %v3600 = vadd.f32 %v3488, %v3560
        %v3601 = vadd.f32 %v3489, %v3560
        %v3602 = vadd.f32 %v3490, %v3560
        %v3603 = vadd.f32 %v3491, %v3560
        %v3604 = vadd.f32 %v3492, %v3560
        %v3605 = vadd.f32 %v3493, %v3560
        %v3606 = vadd.f32 %v3494, %v3560
        %v3607 = vadd.f32 %v3495, %v3560
        %v3608 = vadd.f32 %v3496, %v3565
        %v3609 = vadd.f32 %v3497, %v3565
        %v3610 = vadd.f32 %v3498, %v3565
        %v3611 = vadd.f32 %v3499, %v3565
        %v3612 = vadd.f32 %v3500, %v3565
        %v3613 = vadd.f32 %v3501, %v3565
        %v3614 = vadd.f32 %v3502, %v3565
        %v3615 = vadd.f32 %v3503, %v3565
        %v3616 = vadd.f32 %v3504, %v3570
        %v3617 = vadd.f32 %v3505, %v3570
        %v3618 = vadd.f32 %v3506, %v3570
        %v3619 = vadd.f32 %v3507, %v3570
        %v3620 = vadd.f32 %v3508, %v3570
        %v3621 = vadd.f32 %v3509, %v3570
        %v3622 = vadd.f32 %v3510, %v3570
        %v3623 = vadd.f32 %v3511, %v3570
        %v3624 = vadd.f32 %v3512, %v3575
        %v3625 = vadd.f32 %v3513, %v3575
        %v3626 = vadd.f32 %v3514, %v3575
        %v3627 = vadd.f32 %v3515, %v3575
        %v3628 = vadd.f32 %v3516, %v3575
        %v3629 = vadd.f32 %v3517, %v3575
        %v3630 = vadd.f32 %v3518, %v3575
        %v3631 = vadd.f32 %v3519, %v3575
        %v3632 = vadd.f32 %v3520, %v3580
        %v3633 = vadd.f32 %v3521, %v3580
        %v3634 = vadd.f32 %v3522, %v3580
        %v3635 = vadd.f32 %v3523, %v3580
        %v3636 = vadd.f32 %v3524, %v3580
        %v3637 = vadd.f32 %v3525, %v3580
        %v3638 = vadd.f32 %v3526, %v3580
        %v3639 = vadd.f32 %v3527, %v3580
        %v3640 = vadd.f32 %v3528, %v3585
        %v3641 = vadd.f32 %v3529, %v3585
        %v3642 = vadd.f32 %v3530, %v3585
        %v3643 = vadd.f32 %v3531, %v3585
        %v3644 = vadd.f32 %v3532, %v3585
        %v3645 = vadd.f32 %v3533, %v3585
        %v3646 = vadd.f32 %v3534, %v3585
        %v3647 = vadd.f32 %v3535, %v3585
        %v3648 = vadd.f32 %v3536, %v3590
        %v3649 = vadd.f32 %v3537, %v3590
        %v3650 = vadd.f32 %v3538, %v3590
        %v3651 = vadd.f32 %v3539, %v3590
        %v3652 = vadd.f32 %v3540, %v3590
        %v3653 = vadd.f32 %v3541, %v3590
        %v3654 = vadd.f32 %v3542, %v3590
        %v3655 = vadd.f32 %v3543, %v3590
        %v3656 = vunpack.c.l.bf16 %v346
        %v3657 = vunpack.c.h.bf16 %v346
        %v3658 = vunpack.c.l.bf16 %v347
        %v3659 = vunpack.c.h.bf16 %v347
        %v3660 = vunpack.c.l.bf16 %v348
        %v3661 = vunpack.c.h.bf16 %v348
        %v3662 = vunpack.c.l.bf16 %v349
        %v3663 = vunpack.c.h.bf16 %v349
        %v3664 = vunpack.c.l.bf16 %v350
        %v3665 = vunpack.c.h.bf16 %v350
        %v3666 = vunpack.c.l.bf16 %v351
        %v3667 = vunpack.c.h.bf16 %v351
        %v3668 = vunpack.c.l.bf16 %v352
        %v3669 = vunpack.c.h.bf16 %v352
        %v3670 = vunpack.c.l.bf16 %v353
        %v3671 = vunpack.c.h.bf16 %v353
        %v3672 = vunpack.c.l.bf16 %v354
        %v3673 = vunpack.c.h.bf16 %v354
        %v3674 = vunpack.c.l.bf16 %v355
        %v3675 = vunpack.c.h.bf16 %v355
        %v3676 = vunpack.c.l.bf16 %v356
        %v3677 = vunpack.c.h.bf16 %v356
        %v3678 = vunpack.c.l.bf16 %v357
        %v3679 = vunpack.c.h.bf16 %v357
        %v3680 = vunpack.c.l.bf16 %v358
        %v3681 = vunpack.c.h.bf16 %v358
        %v3682 = vunpack.c.l.bf16 %v359
        %v3683 = vunpack.c.h.bf16 %v359
        %v3684 = vunpack.c.l.bf16 %v360
        %v3685 = vunpack.c.h.bf16 %v360
        %v3686 = vunpack.c.l.bf16 %v361
        %v3687 = vunpack.c.h.bf16 %v361
        %v3688 = vunpack.c.l.bf16 %v362
        %v3689 = vunpack.c.h.bf16 %v362
        %v3690 = vunpack.c.l.bf16 %v363
        %v3691 = vunpack.c.h.bf16 %v363
        %v3692 = vunpack.c.l.bf16 %v364
        %v3693 = vunpack.c.h.bf16 %v364
        %v3694 = vunpack.c.l.bf16 %v365
        %v3695 = vunpack.c.h.bf16 %v365
        %v3696 = vunpack.c.l.bf16 %v366
        %v3697 = vunpack.c.h.bf16 %v366
        %v3698 = vunpack.c.l.bf16 %v367
        %v3699 = vunpack.c.h.bf16 %v367
        %v3700 = vunpack.c.l.bf16 %v368
        %v3701 = vunpack.c.h.bf16 %v368
        %v3702 = vunpack.c.l.bf16 %v369
        %v3703 = vunpack.c.h.bf16 %v369
        %v3704 = vunpack.c.l.bf16 %v370
        %v3705 = vunpack.c.h.bf16 %v370
        %v3706 = vunpack.c.l.bf16 %v371
        %v3707 = vunpack.c.h.bf16 %v371
        %v3708 = vunpack.c.l.bf16 %v372
        %v3709 = vunpack.c.h.bf16 %v372
        %v3710 = vunpack.c.l.bf16 %v373
        %v3711 = vunpack.c.h.bf16 %v373
        %v3712 = vunpack.c.l.bf16 %v374
        %v3713 = vunpack.c.h.bf16 %v374
        %v3714 = vunpack.c.l.bf16 %v375
        %v3715 = vunpack.c.h.bf16 %v375
        %v3716 = vunpack.c.l.bf16 %v376
        %v3717 = vunpack.c.h.bf16 %v376
        %v3718 = vunpack.c.l.bf16 %v377
        %v3719 = vunpack.c.h.bf16 %v377
        %v3720 = vadd.f32 %v3592, %v3656
        %v3721 = vadd.f32 %v3593, %v3657
        %v3722 = vadd.f32 %v3594, %v3658
        %v3723 = vadd.f32 %v3595, %v3659
        %v3724 = vadd.f32 %v3596, %v3660
        %v3725 = vadd.f32 %v3597, %v3661
        %v3726 = vadd.f32 %v3598, %v3662
        %v3727 = vadd.f32 %v3599, %v3663
        %v3728 = vadd.f32 %v3600, %v3664
        %v3729 = vadd.f32 %v3601, %v3665
        %v3730 = vadd.f32 %v3602, %v3666
        %v3731 = vadd.f32 %v3603, %v3667
        %v3732 = vadd.f32 %v3604, %v3668
        %v3733 = vadd.f32 %v3605, %v3669
        %v3734 = vadd.f32 %v3606, %v3670
        %v3735 = vadd.f32 %v3607, %v3671
        %v3736 = vadd.f32 %v3608, %v3672
        %v3737 = vadd.f32 %v3609, %v3673
        %v3738 = vadd.f32 %v3610, %v3674
        %v3739 = vadd.f32 %v3611, %v3675
        %v3740 = vadd.f32 %v3612, %v3676
        %v3741 = vadd.f32 %v3613, %v3677
        %v3742 = vadd.f32 %v3614, %v3678
        %v3743 = vadd.f32 %v3615, %v3679
        %v3744 = vadd.f32 %v3616, %v3680
        %v3745 = vadd.f32 %v3617, %v3681
        %v3746 = vadd.f32 %v3618, %v3682
        %v3747 = vadd.f32 %v3619, %v3683
        %v3748 = vadd.f32 %v3620, %v3684
        %v3749 = vadd.f32 %v3621, %v3685
        %v3750 = vadd.f32 %v3622, %v3686
        %v3751 = vadd.f32 %v3623, %v3687
        %v3752 = vadd.f32 %v3624, %v3688
        %v3753 = vadd.f32 %v3625, %v3689
        %v3754 = vadd.f32 %v3626, %v3690
        %v3755 = vadd.f32 %v3627, %v3691
        %v3756 = vadd.f32 %v3628, %v3692
        %v3757 = vadd.f32 %v3629, %v3693
        %v3758 = vadd.f32 %v3630, %v3694
        %v3759 = vadd.f32 %v3631, %v3695
        %v3760 = vadd.f32 %v3632, %v3696
        %v3761 = vadd.f32 %v3633, %v3697
        %v3762 = vadd.f32 %v3634, %v3698
        %v3763 = vadd.f32 %v3635, %v3699
        %v3764 = vadd.f32 %v3636, %v3700
        %v3765 = vadd.f32 %v3637, %v3701
        %v3766 = vadd.f32 %v3638, %v3702
        %v3767 = vadd.f32 %v3639, %v3703
        %v3768 = vadd.f32 %v3640, %v3704
        %v3769 = vadd.f32 %v3641, %v3705
        %v3770 = vadd.f32 %v3642, %v3706
        %v3771 = vadd.f32 %v3643, %v3707
        %v3772 = vadd.f32 %v3644, %v3708
        %v3773 = vadd.f32 %v3645, %v3709
        %v3774 = vadd.f32 %v3646, %v3710
        %v3775 = vadd.f32 %v3647, %v3711
        %v3776 = vadd.f32 %v3648, %v3712
        %v3777 = vadd.f32 %v3649, %v3713
        %v3778 = vadd.f32 %v3650, %v3714
        %v3779 = vadd.f32 %v3651, %v3715
        %v3780 = vadd.f32 %v3652, %v3716
        %v3781 = vadd.f32 %v3653, %v3717
        %v3782 = vadd.f32 %v3654, %v3718
        %v3783 = vadd.f32 %v3655, %v3719
        %v3784 = vmax.f32 %v3720, 0.0
        %v3785 = vmax.f32 %v3721, 0.0
        %v3786 = vmax.f32 %v3722, 0.0
        %v3787 = vmax.f32 %v3723, 0.0
        %v3788 = vmax.f32 %v3724, 0.0
        %v3789 = vmax.f32 %v3725, 0.0
        %v3790 = vmax.f32 %v3726, 0.0
        %v3791 = vmax.f32 %v3727, 0.0
        %v3792 = vmax.f32 %v3728, 0.0
        %v3793 = vmax.f32 %v3729, 0.0
        %v3794 = vmax.f32 %v3730, 0.0
        %v3795 = vmax.f32 %v3731, 0.0
        %v3796 = vmax.f32 %v3732, 0.0
        %v3797 = vmax.f32 %v3733, 0.0
        %v3798 = vmax.f32 %v3734, 0.0
        %v3799 = vmax.f32 %v3735, 0.0
        %v3800 = vmax.f32 %v3736, 0.0
        %v3801 = vmax.f32 %v3737, 0.0
        %v3802 = vmax.f32 %v3738, 0.0
        %v3803 = vmax.f32 %v3739, 0.0
        %v3804 = vmax.f32 %v3740, 0.0
        %v3805 = vmax.f32 %v3741, 0.0
        %v3806 = vmax.f32 %v3742, 0.0
        %v3807 = vmax.f32 %v3743, 0.0
        %v3808 = vmax.f32 %v3744, 0.0
        %v3809 = vmax.f32 %v3745, 0.0
        %v3810 = vmax.f32 %v3746, 0.0
        %v3811 = vmax.f32 %v3747, 0.0
        %v3812 = vmax.f32 %v3748, 0.0
        %v3813 = vmax.f32 %v3749, 0.0
        %v3814 = vmax.f32 %v3750, 0.0
        %v3815 = vmax.f32 %v3751, 0.0
        %v3816 = vmax.f32 %v3752, 0.0
        %v3817 = vmax.f32 %v3753, 0.0
        %v3818 = vmax.f32 %v3754, 0.0
        %v3819 = vmax.f32 %v3755, 0.0
        %v3820 = vmax.f32 %v3756, 0.0
        %v3821 = vmax.f32 %v3757, 0.0
        %v3822 = vmax.f32 %v3758, 0.0
        %v3823 = vmax.f32 %v3759, 0.0
        %v3824 = vmax.f32 %v3760, 0.0
        %v3825 = vmax.f32 %v3761, 0.0
        %v3826 = vmax.f32 %v3762, 0.0
        %v3827 = vmax.f32 %v3763, 0.0
        %v3828 = vmax.f32 %v3764, 0.0
        %v3829 = vmax.f32 %v3765, 0.0
        %v3830 = vmax.f32 %v3766, 0.0
        %v3831 = vmax.f32 %v3767, 0.0
        %v3832 = vmax.f32 %v3768, 0.0
        %v3833 = vmax.f32 %v3769, 0.0
        %v3834 = vmax.f32 %v3770, 0.0
        %v3835 = vmax.f32 %v3771, 0.0
        %v3836 = vmax.f32 %v3772, 0.0
        %v3837 = vmax.f32 %v3773, 0.0
        %v3838 = vmax.f32 %v3774, 0.0
        %v3839 = vmax.f32 %v3775, 0.0
        %v3840 = vmax.f32 %v3776, 0.0
        %v3841 = vmax.f32 %v3777, 0.0
        %v3842 = vmax.f32 %v3778, 0.0
        %v3843 = vmax.f32 %v3779, 0.0
        %v3844 = vmax.f32 %v3780, 0.0
        %v3845 = vmax.f32 %v3781, 0.0
        %v3846 = vmax.f32 %v3782, 0.0
        %v3847 = vmax.f32 %v3783, 0.0
        %v3848 = vpack.c.bf16 %v3785, %v3784
        %v3849 = vpack.c.bf16 %v3787, %v3786
        %v3850 = vpack.c.bf16 %v3789, %v3788
        %v3851 = vpack.c.bf16 %v3791, %v3790
        %v3852 = vpack.c.bf16 %v3793, %v3792
        %v3853 = vpack.c.bf16 %v3795, %v3794
        %v3854 = vpack.c.bf16 %v3797, %v3796
        %v3855 = vpack.c.bf16 %v3799, %v3798
        %v3856 = vpack.c.bf16 %v3801, %v3800
        %v3857 = vpack.c.bf16 %v3803, %v3802
        %v3858 = vpack.c.bf16 %v3805, %v3804
        %v3859 = vpack.c.bf16 %v3807, %v3806
        %v3860 = vpack.c.bf16 %v3809, %v3808
        %v3861 = vpack.c.bf16 %v3811, %v3810
        %v3862 = vpack.c.bf16 %v3813, %v3812
        %v3863 = vpack.c.bf16 %v3815, %v3814
        %v3864 = vpack.c.bf16 %v3817, %v3816
        %v3865 = vpack.c.bf16 %v3819, %v3818
        %v3866 = vpack.c.bf16 %v3821, %v3820
        %v3867 = vpack.c.bf16 %v3823, %v3822
        %v3868 = vpack.c.bf16 %v3825, %v3824
        %v3869 = vpack.c.bf16 %v3827, %v3826
        %v3870 = vpack.c.bf16 %v3829, %v3828
        %v3871 = vpack.c.bf16 %v3831, %v3830
        %v3872 = vpack.c.bf16 %v3833, %v3832
        %v3873 = vpack.c.bf16 %v3835, %v3834
        %v3874 = vpack.c.bf16 %v3837, %v3836
        %v3875 = vpack.c.bf16 %v3839, %v3838
        %v3876 = vpack.c.bf16 %v3841, %v3840
        %v3877 = vpack.c.bf16 %v3843, %v3842
        %v3878 = vpack.c.bf16 %v3845, %v3844
        %v3879 = vpack.c.bf16 %v3847, %v3846
        %3880 = vst [vmem:[%s342] sm:$0xff] %v3848
        %3881 = vst [vmem:[%s342 + $0x8] sm:$0xff] %v3849
        %3882 = vst [vmem:[%s342 + $0x10] sm:$0xff] %v3850
        %3883 = vst [vmem:[%s342 + $0x18] sm:$0xff] %v3851
        %3884 = vst [vmem:[%s342 + $0x20] sm:$0xff] %v3852
        %3885 = vst [vmem:[%s342 + $0x28] sm:$0xff] %v3853
        %3886 = vst [vmem:[%s342 + $0x30] sm:$0xff] %v3854
        %3887 = vst [vmem:[%s342 + $0x38] sm:$0xff] %v3855
        %3888 = vst [vmem:[%s342 + $0x40] sm:$0xff] %v3856
        %3889 = vst [vmem:[%s342 + $0x48] sm:$0xff] %v3857
        %3890 = vst [vmem:[%s342 + $0x50] sm:$0xff] %v3858
        %3891 = vst [vmem:[%s342 + $0x58] sm:$0xff] %v3859
        %3892 = vst [vmem:[%s342 + $0x60] sm:$0xff] %v3860
        %3893 = vst [vmem:[%s342 + $0x68] sm:$0xff] %v3861
        %3894 = vst [vmem:[%s342 + $0x70] sm:$0xff] %v3862
        %3895 = vst [vmem:[%s342 + $0x78] sm:$0xff] %v3863
        %3896 = vst [vmem:[%s342 + $0x80] sm:$0xff] %v3864
        %3897 = vst [vmem:[%s342 + $0x88] sm:$0xff] %v3865
        %3898 = vst [vmem:[%s342 + $0x90] sm:$0xff] %v3866
        %3899 = vst [vmem:[%s342 + $0x98] sm:$0xff] %v3867
        %3900 = vst [vmem:[%s342 + $0xa0] sm:$0xff] %v3868
        %3901 = vst [vmem:[%s342 + $0xa8] sm:$0xff] %v3869
        %3902 = vst [vmem:[%s342 + $0xb0] sm:$0xff] %v3870
        %3903 = vst [vmem:[%s342 + $0xb8] sm:$0xff] %v3871
        %3904 = vst [vmem:[%s342 + $0xc0] sm:$0xff] %v3872
        %3905 = vst [vmem:[%s342 + $0xc8] sm:$0xff] %v3873
        %3906 = vst [vmem:[%s342 + $0xd0] sm:$0xff] %v3874
        %3907 = vst [vmem:[%s342 + $0xd8] sm:$0xff] %v3875
        %3908 = vst [vmem:[%s342 + $0xe0] sm:$0xff] %v3876
        %3909 = vst [vmem:[%s342 + $0xe8] sm:$0xff] %v3877
        %3910 = vst [vmem:[%s342 + $0xf0] sm:$0xff] %v3878
        %3911 = vst [vmem:[%s342 + $0xf8] sm:$0xff] %v3879
        %s3912 = sand.u32 %s207, 1
        %s3913 = scalar_lea.sflag [#allocation4], %s3912
        %s3914 = sand.u32 %s207, 1
        %s3915 = smul.addr %s3914, 256
        %s3916 = scalar_lea.vmem [#allocation7], %s3915
        // Predicated region
        $region61: #{tpu_custom_call.1} parent=51 // pred_check
          %p3917 = pneg %p217
        $region62: #{tpu_custom_call.1} parent=51 // pred_check_branch
          %3919 = sbr.rel (%p3917) target = $region64
        $region63: #{tpu_custom_call.1} parent=51 // pred_region
          %s3920 = smul.u32 8, %s26
          %3922 = vsyncadd %s3913, 0
          %s3923 = smul.addr %s3920, 4
          %s3924 = scalar_lea.hbm %s8, %s3923
          %s3925 = sshll.u32 %s3916, 4
          %s3926 = int_to_ptr.vmem [resolvable:$true] %s3925
          %s3927 = sshll.u32 %s3924, 4
          %s3928 = int_to_ptr.hbm [resolvable:$true] %s3927
          %3933 = dma.vmem_to_hbm [thread:$0]  %s3926, 4096, %s3928, %s3913, 512, 1024, 32
        $region64: #{tpu_custom_call.1} parent=51 // pred_fallthru
          _
      $region52: #{tpu_custom_call.1} parent=5 // pred_fallthru
        _
      %p3934 = scmp.le.s32.totalorder 2, %s21
      // Predicated region
      $region65: #{tpu_custom_call.1} parent=5 // pred_check
        %p3935 = pneg %p3934
      $region66: #{tpu_custom_call.1} parent=5 // pred_check_branch
        %3937 = sbr.rel (%p3935) target = $region68
      $region67: #{tpu_custom_call.1} parent=5 // pred_region
        %s3938 = ssub.s32 %s21, 2
        // Predicated region
        $region69: #{tpu_custom_call.1} parent=67 // pred_check
          %p3939 = pneg %p223
        $region70: #{tpu_custom_call.1} parent=67 // pred_check_branch
          %3941 = sbr.rel (%p3939) target = $region72
        $region71: #{tpu_custom_call.1} parent=67 // pred_region
          %s3942 = sand.u32 %s208, 1
          %s3943 = scalar_lea.sflag [#allocation4], %s3942
          %s3944 = sand.u32 %s208, 1
          %s3945 = smul.addr %s3944, 256
          %s3946 = scalar_lea.vmem [#allocation7], %s3945
          %3948 = dma.done %s3943, 4096
        $region72: #{tpu_custom_call.1} parent=67 // pred_fallthru
          _
      $region68: #{tpu_custom_call.1} parent=5 // pred_fallthru
        _
    $region6: #{tpu_custom_call.1} parent=1 // loop_footer
      %s25 = sadd.s32 1, %s21
    $region7: #{tpu_custom_call.1} parent=1 // loop_footer_branch
      %20 = sbr.rel target = $region3
    $region8: #{tpu_custom_call.1} parent=1 // loop_exit
      _
    %3949 = vsyncpa [#allocation3], 1
    %s3950 = scalar_lea.sflag [#allocation3], 1
    %3951 = vsyncpa %s3950, 1
    %3952 = vsyncpa [#allocation6], 1
    %3953 = vsyncpa [#allocation4], 1
    %s3954 = scalar_lea.sflag [#allocation4], 1
    %3955 = vsyncpa %s3954, 1

</llo_original>
